<compile_context>
chip_gen: v6e
topology: v6e:2x2x1
jax: 0.10.0
libtpu: 0.0.40
codegen_flags: <defaults>
</compile_context>

<pallas_src>
import numpy as np
import jax
import jax.numpy as jnp
from jax.experimental import pallas as pl
from jax.experimental.pallas import tpu as pltpu


def _make_kernel(S, L, E, Eo, H):
    hd = E // H
    scale = float(hd) ** -0.5

    def kernel(x_ref, wqkv_ref, posqkv_ref, w1_ref, w2_ref, b_ref, out_ref):
        xn = x_ref[0]                                                  # (E, S) channel-major

        # ---- token construction folded into the MXU ----
        # agg: row 0 = spatial mean, rows 1..S = identity (built once, loop-free).
        row = jax.lax.broadcasted_iota(jnp.int32, (L, S), 0)
        col = jax.lax.broadcasted_iota(jnp.int32, (L, S), 1)
        agg = (jnp.where(row == col + 1, 1.0, 0.0)
               + jnp.where(row == 0, 1.0 / S, 0.0)).astype(jnp.float32)
        # tokens = agg @ x^T : the (C,S)->(S,C) permute is a transposed contraction.
        tokens = jax.lax.dot_general(agg, xn, (((1,), (1,)), ((), ())),
                                     preferred_element_type=jnp.float32)   # (L, E)

        # ---- fused q/k/v in-projection (pos-embedding + biases folded into posqkv) ----
        qkv_raw = jnp.dot(tokens, wqkv_ref[...],
                          preferred_element_type=jnp.float32) + posqkv_ref[...]   # (L, 3E)
        q_raw = qkv_raw[:, :E]
        k_raw = qkv_raw[:, E:2 * E]
        v_raw = qkv_raw[:, 2 * E:]

        # ---- head lane masks, built once (hoisted; no per-head/batch rebuild) ----
        lane = jax.lax.broadcasted_iota(jnp.int32, (H, 1, E), 2)
        head = jax.lax.broadcasted_iota(jnp.int32, (H, 1, E), 0)
        hmask = ((lane >= head * hd) & (lane < (head + 1) * hd)).astype(jnp.float32)

        # ---- head-batched attention ----
        # All heads' scores in a single MXU push: rows index (head, query) pairs.
        qm = ((q_raw * scale)[None, :, :] * hmask).reshape(H * L, E)       # (H*L, E)
        s = jax.lax.dot_general(qm, k_raw, (((1,), (1,)), ((), ())),
                                preferred_element_type=jnp.float32)        # (H*L, L)
        s = s - jnp.max(s, axis=-1, keepdims=True)
        p = jnp.exp(s)
        p = p * pl.reciprocal(jnp.sum(p, axis=-1, keepdims=True), approx=True)

        # P @ V batched over heads; masked V keeps each head on disjoint lanes,
        # so summing over heads is exactly the per-head concatenation.
        vm = v_raw[None, :, :] * hmask                                     # (H, L, E)
        p3 = p.reshape(H, L, L)
        ctx3 = jnp.einsum("hlm,hme->hle", p3, vm,
                          preferred_element_type=jnp.float32)              # (H, L, E)
        ctx = jnp.sum(ctx3, axis=0)                                        # (L, E)

        # ---- fused output projections ----
        # combined lanes = [ c_proj(q_raw) | c_proj(k_raw) | c_proj(v_raw)+x/2 | x ]
        # realized as two matmuls against padded block-diagonal weights + one bias add.
        combined = (jnp.dot(qkv_raw, w1_ref[...], preferred_element_type=jnp.float32)
                    + jnp.dot(ctx, w2_ref[...], preferred_element_type=jnp.float32)
                    + b_ref[...])                                          # (L, 4*Eo)
        out_ref[...] = combined                                            # lane-dense store

    return kernel


def attention_pool_2d(x, params, num_heads):
    """x: (N, C, H, W) float32. Returns (x_out, q, k, v), each (L, N, Eo) with L = H*W + 1."""
    N, C, Hh, Ww = x.shape
    S = Hh * Ww
    L = S + 1
    E = C
    Eo = params["c_proj_weight"].shape[0]
    H = num_heads
    assert E % H == 0

    # ---- parameter prep (parameter-only work; done outside the kernel) ----
    w_qkv = jnp.concatenate([params["q_proj_weight"].T,
                             params["k_proj_weight"].T,
                             params["v_proj_weight"].T], axis=1)            # (E, 3E)
    b_qkv = jnp.concatenate([params["q_proj_bias"],
                             params["k_proj_bias"],
                             params["v_proj_bias"]]).reshape(1, 3 * E)
    pos_qkv = params["positional_embedding"] @ w_qkv + b_qkv                # (L, 3E)

    w_c = params["c_proj_weight"].T                                         # (E, Eo)
    b_c = params["c_proj_bias"].reshape(1, Eo)
    zE = jnp.zeros((E, Eo), jnp.float32)
    # W1: [q|k|v] -> [q_out | k_out | v_out | 0]
    w1 = jnp.concatenate([
        jnp.concatenate([w_c, zE, zE, zE], axis=1),
        jnp.concatenate([zE, w_c, zE, zE], axis=1),
        jnp.concatenate([zE, zE, w_c, zE], axis=1),
    ], axis=0)                                                              # (3E, 4Eo)
    # W2: ctx -> [0 | 0 | 0.5*x_out | x_out]
    w2 = jnp.concatenate([jnp.zeros((E, 2 * Eo), jnp.float32), 0.5 * w_c, w_c],
                         axis=1)                                            # (E, 4Eo)
    # biases: v lanes get b_c + 0.5*b_c (from v_out + x_out/2)
    bias = jnp.concatenate([b_c, b_c, 1.5 * b_c, b_c], axis=1)              # (1, 4Eo)

    x_ncs = x.reshape(N, C, S)      # contiguous reshape only; no HBM transpose

    kernel = _make_kernel(S, L, E, Eo, H)
    out = pl.pallas_call(
        kernel,
        out_shape=jax.ShapeDtypeStruct((L, N * 4 * Eo), jnp.float32),
        grid=(N,),
        in_specs=[
            pl.BlockSpec((1, C, S), lambda n: (n, 0, 0)),
            pl.BlockSpec((E, 3 * E), lambda n: (0, 0)),
            pl.BlockSpec((L, 3 * E), lambda n: (0, 0)),
            pl.BlockSpec((3 * E, 4 * Eo), lambda n: (0, 0)),
            pl.BlockSpec((E, 4 * Eo), lambda n: (0, 0)),
            pl.BlockSpec((1, 4 * Eo), lambda n: (0, 0)),
        ],
        out_specs=pl.BlockSpec((L, 4 * Eo), lambda n: (0, n)),
        compiler_params=pltpu.CompilerParams(
            dimension_semantics=("parallel",)),
    )(x_ncs, w_qkv, pos_qkv, w1, w2, bias)

    out = out.reshape(L, N, 4 * Eo)          # free reshape; already seq-first, no transpose
    q = out[..., :Eo]
    k = out[..., Eo:2 * Eo]
    v = out[..., 2 * Eo:3 * Eo]
    x_o = out[..., 3 * Eo:]
    return x_o, q, k, v


# ---------------- pure-JAX reference (mirrors the PyTorch forward) ----------------
def reference(x, params, num_heads):
    N, C, Hh, Ww = x.shape
    S = Hh * Ww
    E = C
    Eo = params["c_proj_weight"].shape[0]
    H = num_heads
    hd = E // H
    L = S + 1

    xf = x.reshape(N, C, S).transpose(2, 0, 1)                               # (S, N, E)
    xt = jnp.concatenate([xf.mean(axis=0, keepdims=True), xf], axis=0)       # (L, N, E)
    xt = xt + params["positional_embedding"][:, None, :]

    lin = lambda z, w, b: z @ w.T + b
    q_raw = lin(xt, params["q_proj_weight"], params["q_proj_bias"])
    k_raw = lin(xt, params["k_proj_weight"], params["k_proj_bias"])
    v_raw = lin(xt, params["v_proj_weight"], params["v_proj_bias"])
    Wc, bc = params["c_proj_weight"], params["c_proj_bias"]
    q = lin(q_raw, Wc, bc)
    k = lin(k_raw, Wc, bc)
    v = lin(v_raw, Wc, bc)

    to_heads = lambda t: t.reshape(L, N, H, hd).transpose(1, 2, 0, 3)        # (N,H,L,hd)
    qh = to_heads(q_raw) * (float(hd) ** -0.5)
    kh = to_heads(k_raw)
    vh = to_heads(v_raw)
    s = jnp.einsum("nhld,nhmd->nhlm", qh, kh)
    p = jax.nn.softmax(s, axis=-1)
    ctx = jnp.einsum("nhlm,nhmd->nhld", p, vh).transpose(2, 0, 1, 3).reshape(L, N, E)
    x_out = lin(ctx, Wc, bc)
    v = v + x_out / 2
    return x_out, q, k, v


if __name__ == "__main__":
    SPACIAL_DIM = 7
    EMBED_DIM = 32
    NUM_HEADS = 4
    OUT_DIM = EMBED_DIM          # output_dim=None -> embed_dim
    BATCH = 2
    L = SPACIAL_DIM ** 2 + 1

    key = jax.random.PRNGKey(0)
    ks = jax.random.split(key, 10)
    E = EMBED_DIM
    params = {
        "positional_embedding":
            jax.random.normal(ks[0], (L, E), jnp.float32) / (E ** 0.5),
        "q_proj_weight": 0.08 * jax.random.normal(ks[1], (E, E), jnp.float32),
        "q_proj_bias": 0.02 * jax.random.normal(ks[2], (E,), jnp.float32),
        "k_proj_weight": 0.08 * jax.random.normal(ks[3], (E, E), jnp.float32),
        "k_proj_bias": 0.02 * jax.random.normal(ks[4], (E,), jnp.float32),
        "v_proj_weight": 0.08 * jax.random.normal(ks[5], (E, E), jnp.float32),
        "v_proj_bias": 0.02 * jax.random.normal(ks[6], (E,), jnp.float32),
        "c_proj_weight": 0.08 * jax.random.normal(ks[7], (OUT_DIM, E), jnp.float32),
        "c_proj_bias": 0.02 * jax.random.normal(ks[8], (OUT_DIM,), jnp.float32),
    }
    x = jax.random.normal(ks[9], (BATCH, E, SPACIAL_DIM, SPACIAL_DIM), jnp.float32)

    outs = attention_pool_2d(x, params, NUM_HEADS)
    outs = jax.block_until_ready(outs)

    refs = reference(x, params, NUM_HEADS)
    for name, o, r in zip(("x", "q", "k", "v"), outs, refs):
        np.testing.assert_allclose(np.asarray(o), np.asarray(r),
                                   rtol=1e-2, atol=1e-2,
                                   err_msg=f"mismatch in output '{name}'")

    print("KERNEL_OK")
</pallas_src>

<mosaic_0001>
module attributes {stable_mosaic.version = 11 : i64} {
  func.func @kernel(%arg0: i32, %arg1: memref<1x32x49xf32, #tpu.memory_space<vmem>>, %arg2: memref<32x96xf32, #tpu.memory_space<vmem>>, %arg3: memref<50x96xf32, #tpu.memory_space<vmem>>, %arg4: memref<96x128xf32, #tpu.memory_space<vmem>>, %arg5: memref<32x128xf32, #tpu.memory_space<vmem>>, %arg6: memref<1x128xf32, #tpu.memory_space<vmem>>, %arg7: memref<50x128xf32, #tpu.memory_space<vmem>>) attributes {dimension_semantics = [#tpu.dimension_semantics<parallel>], iteration_bounds = array<i64: 2>, scalar_prefetch = 0 : i64, scratch_operands = 0 : i64, tpu.core_type = #tpu.core_type<tc>, window_params = [{transform_indices = @transform_0, window_bounds = array<i64: 1, 32, 49>}, {pipeline_mode = #tpu.pipeline_mode<synchronous>, transform_indices = @transform_1, window_bounds = array<i64: 32, 96>}, {pipeline_mode = #tpu.pipeline_mode<synchronous>, transform_indices = @transform_2, window_bounds = array<i64: 50, 96>}, {pipeline_mode = #tpu.pipeline_mode<synchronous>, transform_indices = @transform_3, window_bounds = array<i64: 96, 128>}, {pipeline_mode = #tpu.pipeline_mode<synchronous>, transform_indices = @transform_4, window_bounds = array<i64: 32, 128>}, {pipeline_mode = #tpu.pipeline_mode<synchronous>, transform_indices = @transform_5, window_bounds = array<i64: 1, 128>}, {transform_indices = @transform_6, window_bounds = array<i64: 50, 128>}]} {
    %c0 = arith.constant 0 : index
    %c0_0 = arith.constant 0 : index
    %c0_1 = arith.constant 0 : index
    %0 = vector.load %arg1[%c0, %c0_0, %c0_1] : memref<1x32x49xf32, #tpu.memory_space<vmem>>, vector<1x32x49xf32>
    %1 = vector.shape_cast %0 : vector<1x32x49xf32> to vector<32x49xf32>
    %2 = tpu.iota {dimensions = array<i32: 0>} : vector<50x49xi32>
    %3 = tpu.iota {dimensions = array<i32: 1>} : vector<50x49xi32>
    %c1_i32 = arith.constant 1 : i32
    %4 = vector.broadcast %c1_i32 : i32 to vector<50x49xi32>
    %5 = arith.addi %3, %4 : vector<50x49xi32>
    %6 = arith.cmpi eq, %2, %5 : vector<50x49xi32>
    %cst = arith.constant 1.000000e+00 : f32
    %cst_2 = arith.constant 0.000000e+00 : f32
    %7 = vector.broadcast %cst : f32 to vector<50x49xf32>
    %8 = vector.broadcast %cst_2 : f32 to vector<50x49xf32>
    %9 = arith.select %6, %7, %8 : vector<50x49xi1>, vector<50x49xf32>
    %c0_i32 = arith.constant 0 : i32
    %10 = vector.broadcast %c0_i32 : i32 to vector<50x49xi32>
    %11 = arith.cmpi eq, %2, %10 : vector<50x49xi32>
    %cst_3 = arith.constant 0.0204081628 : f32
    %cst_4 = arith.constant 0.000000e+00 : f32
    %12 = vector.broadcast %cst_3 : f32 to vector<50x49xf32>
    %13 = vector.broadcast %cst_4 : f32 to vector<50x49xf32>
    %14 = arith.select %11, %12, %13 : vector<50x49xi1>, vector<50x49xf32>
    %15 = arith.addf %9, %14 : vector<50x49xf32>
    %cst_5 = arith.constant dense<0.000000e+00> : vector<50x32xf32>
    %16 = tpu.matmul %15, %1, %cst_5 {dimension_numbers = #tpu.dot_dimension_numbers<[1], [1], [0], [0], [0, 0, 1, 0], [], []>} : vector<50x49xf32>, vector<32x49xf32>, vector<50x32xf32> -> vector<50x32xf32>
    %c0_6 = arith.constant 0 : index
    %c0_7 = arith.constant 0 : index
    %17 = vector.load %arg2[%c0_6, %c0_7] : memref<32x96xf32, #tpu.memory_space<vmem>>, vector<32x96xf32>
    %cst_8 = arith.constant dense<0.000000e+00> : vector<50x96xf32>
    %18 = tpu.matmul %16, %17, %cst_8 {dimension_numbers = #tpu.dot_dimension_numbers<[1], [0], [0], [1], [0, 0, 1, 1], [], []>} : vector<50x32xf32>, vector<32x96xf32>, vector<50x96xf32> -> vector<50x96xf32>
    %c0_9 = arith.constant 0 : index
    %c0_10 = arith.constant 0 : index
    %19 = vector.load %arg3[%c0_9, %c0_10] : memref<50x96xf32, #tpu.memory_space<vmem>>, vector<50x96xf32>
    %20 = arith.addf %18, %19 : vector<50x96xf32>
    %21 = vector.extract_strided_slice %20 {offsets = [0, 0], sizes = [50, 32], strides = [1, 1]} : vector<50x96xf32> to vector<50x32xf32>
    %22 = vector.extract_strided_slice %20 {offsets = [0, 32], sizes = [50, 32], strides = [1, 1]} : vector<50x96xf32> to vector<50x32xf32>
    %23 = vector.extract_strided_slice %20 {offsets = [0, 64], sizes = [50, 32], strides = [1, 1]} : vector<50x96xf32> to vector<50x32xf32>
    %24 = tpu.iota {dimensions = array<i32: 2>} : vector<4x1x32xi32>
    %25 = tpu.iota {dimensions = array<i32: 0>} : vector<4x1x32xi32>
    %c8_i32 = arith.constant 8 : i32
    %26 = vector.broadcast %c8_i32 : i32 to vector<4x1x32xi32>
    %27 = arith.muli %25, %26 : vector<4x1x32xi32>
    %28 = arith.cmpi sge, %24, %27 : vector<4x1x32xi32>
    %c1_i32_11 = arith.constant 1 : i32
    %29 = vector.broadcast %c1_i32_11 : i32 to vector<4x1x32xi32>
    %30 = arith.addi %25, %29 : vector<4x1x32xi32>
    %c8_i32_12 = arith.constant 8 : i32
    %31 = vector.broadcast %c8_i32_12 : i32 to vector<4x1x32xi32>
    %32 = arith.muli %30, %31 : vector<4x1x32xi32>
    %33 = arith.cmpi slt, %24, %32 : vector<4x1x32xi32>
    %34 = arith.andi %28, %33 : vector<4x1x32xi1>
    %35 = arith.extui %34 : vector<4x1x32xi1> to vector<4x1x32xi32>
    %36 = arith.sitofp %35 : vector<4x1x32xi32> to vector<4x1x32xf32>
    %cst_13 = arith.constant 0.353553385 : f32
    %37 = vector.broadcast %cst_13 : f32 to vector<50x32xf32>
    %38 = arith.mulf %21, %37 : vector<50x32xf32>
    %39 = vector.shape_cast %38 : vector<50x32xf32> to vector<1x50x32xf32>
    %40 = vector.broadcast %39 : vector<1x50x32xf32> to vector<4x50x32xf32>
    %41 = vector.broadcast %36 : vector<4x1x32xf32> to vector<4x50x32xf32>
    %42 = arith.mulf %40, %41 : vector<4x50x32xf32>
    %43 = vector.shape_cast %42 : vector<4x50x32xf32> to vector<200x32xf32>
    %cst_14 = arith.constant dense<0.000000e+00> : vector<200x50xf32>
    %44 = tpu.matmul %43, %22, %cst_14 {dimension_numbers = #tpu.dot_dimension_numbers<[1], [1], [0], [0], [0, 0, 1, 0], [], []>} : vector<200x32xf32>, vector<50x32xf32>, vector<200x50xf32> -> vector<200x50xf32>
    %cst_15 = arith.constant dense<0xFF800000> : vector<200xf32>
    %45 = vector.multi_reduction <maximumf>, %44, %cst_15 [1] : vector<200x50xf32> to vector<200xf32>
    %46 = vector.shape_cast %45 : vector<200xf32> to vector<200x1xf32>
    %47 = vector.broadcast %46 : vector<200x1xf32> to vector<200x50xf32>
    %48 = arith.subf %44, %47 : vector<200x50xf32>
    %49 = math.exp %48 : vector<200x50xf32>
    %cst_16 = arith.constant dense<0.000000e+00> : vector<200xf32>
    %50 = vector.multi_reduction <add>, %49, %cst_16 [1] : vector<200x50xf32> to vector<200xf32>
    %51 = vector.shape_cast %50 : vector<200xf32> to vector<200x1xf32>
    %52 = tpu.reciprocal %51 {approx = true} : vector<200x1xf32> -> vector<200x1xf32>
    %53 = vector.broadcast %52 : vector<200x1xf32> to vector<200x50xf32>
    %54 = arith.mulf %49, %53 : vector<200x50xf32>
    %55 = vector.shape_cast %23 : vector<50x32xf32> to vector<1x50x32xf32>
    %56 = vector.broadcast %55 : vector<1x50x32xf32> to vector<4x50x32xf32>
    %57 = vector.broadcast %36 : vector<4x1x32xf32> to vector<4x50x32xf32>
    %58 = arith.mulf %56, %57 : vector<4x50x32xf32>
    %59 = vector.shape_cast %54 : vector<200x50xf32> to vector<4x50x50xf32>
    "tpu.trace_start"() <{level = 10 : i32, message = "hlm,hme->hle"}> : () -> ()
    %cst_17 = arith.constant dense<0.000000e+00> : vector<4x50x32xf32>
    %60 = tpu.matmul %59, %58, %cst_17 {dimension_numbers = #tpu.dot_dimension_numbers<[2], [1], [1], [2], [0, 0, 0, 1, 1, 2], [0], [0]>} : vector<4x50x50xf32>, vector<4x50x32xf32>, vector<4x50x32xf32> -> vector<4x50x32xf32>
    "tpu.trace_stop"() : () -> ()
    %cst_18 = arith.constant dense<0.000000e+00> : vector<50x32xf32>
    %61 = vector.multi_reduction <add>, %60, %cst_18 [0] : vector<4x50x32xf32> to vector<50x32xf32>
    %c0_19 = arith.constant 0 : index
    %c0_20 = arith.constant 0 : index
    %62 = vector.load %arg4[%c0_19, %c0_20] : memref<96x128xf32, #tpu.memory_space<vmem>>, vector<96x128xf32>
    %cst_21 = arith.constant dense<0.000000e+00> : vector<50x128xf32>
    %63 = tpu.matmul %20, %62, %cst_21 {dimension_numbers = #tpu.dot_dimension_numbers<[1], [0], [0], [1], [0, 0, 1, 1], [], []>} : vector<50x96xf32>, vector<96x128xf32>, vector<50x128xf32> -> vector<50x128xf32>
    %c0_22 = arith.constant 0 : index
    %c0_23 = arith.constant 0 : index
    %64 = vector.load %arg5[%c0_22, %c0_23] : memref<32x128xf32, #tpu.memory_space<vmem>>, vector<32x128xf32>
    %cst_24 = arith.constant dense<0.000000e+00> : vector<50x128xf32>
    %65 = tpu.matmul %61, %64, %cst_24 {dimension_numbers = #tpu.dot_dimension_numbers<[1], [0], [0], [1], [0, 0, 1, 1], [], []>} : vector<50x32xf32>, vector<32x128xf32>, vector<50x128xf32> -> vector<50x128xf32>
    %66 = arith.addf %63, %65 : vector<50x128xf32>
    %c0_25 = arith.constant 0 : index
    %c0_26 = arith.constant 0 : index
    %67 = vector.load %arg6[%c0_25, %c0_26] : memref<1x128xf32, #tpu.memory_space<vmem>>, vector<1x128xf32>
    %68 = vector.broadcast %67 : vector<1x128xf32> to vector<50x128xf32>
    %69 = arith.addf %66, %68 : vector<50x128xf32>
    %c0_27 = arith.constant 0 : index
    %c0_28 = arith.constant 0 : index
    %70 = vector.load %arg7[%c0_27, %c0_28] : memref<50x128xf32, #tpu.memory_space<vmem>>, vector<50x128xf32>
    tpu.vector_store %arg7[%c0_27, %c0_28], %69 {strides = array<i32>} : memref<50x128xf32, #tpu.memory_space<vmem>>, vector<50x128xf32>,
    return
  }
  func.func @transform_0(%arg0: i32) -> (i32, i32, i32) {
    %c0_i32 = arith.constant 0 : i32
    %c0_i32_0 = arith.constant 0 : i32
    %c0_i32_1 = arith.constant 0 : i32
    return %arg0, %c0_i32, %c0_i32_0 : i32, i32, i32
  }
  func.func @transform_1(%arg0: i32) -> (i32, i32) {
    %c0_i32 = arith.constant 0 : i32
    %c0_i32_0 = arith.constant 0 : i32
    %c0_i32_1 = arith.constant 0 : i32
    return %c0_i32, %c0_i32_0 : i32, i32
  }
  func.func @transform_2(%arg0: i32) -> (i32, i32) {
    %c0_i32 = arith.constant 0 : i32
    %c0_i32_0 = arith.constant 0 : i32
    %c0_i32_1 = arith.constant 0 : i32
    return %c0_i32, %c0_i32_0 : i32, i32
  }
  func.func @transform_3(%arg0: i32) -> (i32, i32) {
    %c0_i32 = arith.constant 0 : i32
    %c0_i32_0 = arith.constant 0 : i32
    %c0_i32_1 = arith.constant 0 : i32
    return %c0_i32, %c0_i32_0 : i32, i32
  }
  func.func @transform_4(%arg0: i32) -> (i32, i32) {
    %c0_i32 = arith.constant 0 : i32
    %c0_i32_0 = arith.constant 0 : i32
    %c0_i32_1 = arith.constant 0 : i32
    return %c0_i32, %c0_i32_0 : i32, i32
  }
  func.func @transform_5(%arg0: i32) -> (i32, i32) {
    %c0_i32 = arith.constant 0 : i32
    %c0_i32_0 = arith.constant 0 : i32
    %c0_i32_1 = arith.constant 0 : i32
    return %c0_i32, %c0_i32_0 : i32, i32
  }
  func.func @transform_6(%arg0: i32) -> (i32, i32) {
    %c0_i32 = arith.constant 0 : i32
    %c0_i32_0 = arith.constant 0 : i32
    return %c0_i32, %arg0 : i32, i32
  }
}

</mosaic_0001>

<llo_original>
// kernel: tpu_custom_call.1
$region0: #{tpu_custom_call.1}
  #allocation0 [shape = 'u32[]', space=smem, size = 0x4, offset = 0x4, fixed_abs, tag = 'smem constant byte address 0x4 - core index']
  #allocation1 [shape = 'u32[144,128]{1,0:T(1,128)}', space=vmem, size = 0x12000, scoped, tag = 'internal scratch']
  %s0 = inlined_call_operand.hbm [shape: f32[2,32,49], index: 0, kind: input, shape index: {}]
  %s1 = inlined_call_operand.hbm [shape: f32[32,96], index: 1, kind: input, shape index: {}]
  %s2 = inlined_call_operand.hbm [shape: f32[50,96], index: 2, kind: input, shape index: {}]
  %s3 = inlined_call_operand.hbm [shape: f32[96,128], index: 3, kind: input, shape index: {}]
  %s4 = inlined_call_operand.hbm [shape: f32[32,128], index: 4, kind: input, shape index: {}]
  %s5 = inlined_call_operand.vmem [shape: f32[1,128], index: 5, kind: input, shape index: {}]
  %s6 = inlined_call_operand.hbm [shape: f32[50,256], index: 6, kind: output, shape index: {}]
  %s7 = sld [smem:[#allocation0]]
  $region77: #{tpu_custom_call.1} parent=0
    _
  %s9 = ssub.s32 1, %s7
  %s10 = scalar_select 0, %s9, %s7
  $region1: #{tpu_custom_call.1} parent=0
    #allocation2 [shape = 'u8[32768]{0}', space=vmem, size = 0x8000, scoped, tag = 'input window, operand 0']
    #allocation3 [shape = 's32[2]{0}', space=sflag, size = 0x8, scoped, tag = 'scoped memory for tpu_custom_call.1']
    #allocation4 [shape = 's32[2]{0}', space=sflag, size = 0x8, scoped, tag = 'scoped memory for tpu_custom_call.1']
    #allocation5 [shape = 'u8[16384]{0}', space=vmem, size = 0x4000, scoped, tag = 'input window, operand 1, single buffered']
    #allocation6 [shape = 's32[1]{0}', space=sflag, size = 0x4, scoped, tag = 'scoped memory for tpu_custom_call.1']
    #allocation7 [shape = 'u8[28672]{0}', space=vmem, size = 0x7000, scoped, tag = 'input window, operand 2, single buffered']
    #allocation8 [shape = 'u8[49152]{0}', space=vmem, size = 0xc000, scoped, tag = 'input window, operand 3, single buffered']
    #allocation9 [shape = 's32[1]{0}', space=sflag, size = 0x4, scoped, tag = 'scoped memory for tpu_custom_call.1']
    #allocation10 [shape = 'u8[16384]{0}', space=vmem, size = 0x4000, scoped, tag = 'input window, operand 4, single buffered']
    #allocation11 [shape = 'u8[57344]{0}', space=vmem, size = 0xe000, scoped, tag = 'output window, operand 0']
    %11 = vsyncpa [#allocation3], 0
    %s12 = scalar_lea.sflag [#allocation3], 1
    %13 = vsyncpa %s12, 0
    %14 = vsyncpa [#allocation6], 0
    %15 = vsyncpa [#allocation9], 0
    %16 = vsyncpa [#allocation4], 0
    %s17 = scalar_lea.sflag [#allocation4], 1
    %18 = vsyncpa %s17, 0
    loop: start=0, step=1, limit=4
    $region2: #{tpu_custom_call.1} parent=1 // loop_pre_header
      _
    $region3: #{tpu_custom_call.1} parent=1 // loop_header
      %s20 = sphi 0, %s24
      %p21 = scmp.ge.s32.totalorder %s20, 4
      %s30 = sphi 0, %s32
      %s33 = sphi 0, %s30
      %s34 = sphi 0, %s33
      %s50 = sphi 0, %s34
      %s54 = sphi 0, %s54
      %s56 = sphi 0, %s54
      %s57 = sphi 0, %s56
      %s71 = sphi 0, %s57
      %s75 = sphi 0, %s75
      %s77 = sphi 0, %s75
      %s78 = sphi 0, %s77
      %s92 = sphi 0, %s78
      %s96 = sphi 0, %s96
      %s98 = sphi 0, %s96
      %s99 = sphi 0, %s98
      %s113 = sphi 0, %s99
      %s117 = sphi 0, %s117
      %s119 = sphi 0, %s117
      %s120 = sphi 0, %s119
      %s134 = sphi 0, %s120
      %s138 = sphi 0, %s138
      %s140 = sphi 0, %s138
      %s141 = sphi 0, %s140
      %s155 = sphi 0, %s141
      %s161 = sphi 0, %s163
      %s164 = sphi 0, %s161
      %s165 = sphi 0, %s164
      %s181 = sphi 0, %s165
    $region4: #{tpu_custom_call.1} parent=1 // loop_header_branch
      %23 = sbr.rel (%p21) target = $region8
    $region5: #{tpu_custom_call.1} parent=1 // loop_body
      %s25 = ssub.s32 %s20, 1
      %s26 = ssub.s32 %s20, 2
      %s27 = sadd.s32 %s20, 1
      %s28 = ssub.s32 %s20, %s27
      %p29 = scmp.eq.s32.totalorder %s28, 0
      %s31 = sadd.s32 %s30, 1
      %s32 = scalar_select %p29, %s30, %s31
      %p35 = pneg %p29
      %p36 = scmp.eq.s32.totalorder %s20, 1
      %p37 = por %p35, %p36
      %p38 = scmp.ne.s32.totalorder %s30, %s33
      %p39 = scmp.eq.s32.totalorder %s20, 0
      %p40 = por %p38, %p39
      %p41 = scmp.ne.s32.totalorder %s30, %s33
      %p42 = scmp.eq.s32.totalorder %s25, 1
      %p43 = por %p41, %p42
      %p44 = scmp.ne.s32.totalorder %s33, %s34
      %p45 = scmp.eq.s32.totalorder %s25, 0
      %p46 = por %p44, %p45
      %p47 = scmp.ne.s32.totalorder %s33, %s34
      %p48 = scmp.eq.s32.totalorder %s26, 1
      %p49 = por %p47, %p48
      %p51 = scmp.ne.s32.totalorder %s34, %s50
      %p52 = scmp.eq.s32.totalorder %s26, 0
      %p53 = por %p51, %p52
      %s55 = sadd.s32 %s54, 1
      %p58 = scmp.eq.s32.totalorder %s20, 1
      %p59 = scmp.ne.s32.totalorder %s54, %s56
      %p60 = scmp.eq.s32.totalorder %s20, 0
      %p61 = por %p59, %p60
      %p62 = scmp.ne.s32.totalorder %s54, %s56
      %p63 = scmp.eq.s32.totalorder %s25, 1
      %p64 = por %p62, %p63
      %p65 = scmp.ne.s32.totalorder %s56, %s57
      %p66 = scmp.eq.s32.totalorder %s25, 0
      %p67 = por %p65, %p66
      %p68 = scmp.ne.s32.totalorder %s56, %s57
      %p69 = scmp.eq.s32.totalorder %s26, 1
      %p70 = por %p68, %p69
      %p72 = scmp.ne.s32.totalorder %s57, %s71
      %p73 = scmp.eq.s32.totalorder %s26, 0
      %p74 = por %p72, %p73
      %s76 = sadd.s32 %s75, 1
      %p79 = scmp.eq.s32.totalorder %s20, 1
      %p80 = scmp.ne.s32.totalorder %s75, %s77
      %p81 = scmp.eq.s32.totalorder %s20, 0
      %p82 = por %p80, %p81
      %p83 = scmp.ne.s32.totalorder %s75, %s77
      %p84 = scmp.eq.s32.totalorder %s25, 1
      %p85 = por %p83, %p84
      %p86 = scmp.ne.s32.totalorder %s77, %s78
      %p87 = scmp.eq.s32.totalorder %s25, 0
      %p88 = por %p86, %p87
      %p89 = scmp.ne.s32.totalorder %s77, %s78
      %p90 = scmp.eq.s32.totalorder %s26, 1
      %p91 = por %p89, %p90
      %p93 = scmp.ne.s32.totalorder %s78, %s92
      %p94 = scmp.eq.s32.totalorder %s26, 0
      %p95 = por %p93, %p94
      %s97 = sadd.s32 %s96, 1
      %p100 = scmp.eq.s32.totalorder %s20, 1
      %p101 = scmp.ne.s32.totalorder %s96, %s98
      %p102 = scmp.eq.s32.totalorder %s20, 0
      %p103 = por %p101, %p102
      %p104 = scmp.ne.s32.totalorder %s96, %s98
      %p105 = scmp.eq.s32.totalorder %s25, 1
      %p106 = por %p104, %p105
      %p107 = scmp.ne.s32.totalorder %s98, %s99
      %p108 = scmp.eq.s32.totalorder %s25, 0
      %p109 = por %p107, %p108
      %p110 = scmp.ne.s32.totalorder %s98, %s99
      %p111 = scmp.eq.s32.totalorder %s26, 1
      %p112 = por %p110, %p111
      %p114 = scmp.ne.s32.totalorder %s99, %s113
      %p115 = scmp.eq.s32.totalorder %s26, 0
      %p116 = por %p114, %p115
      %s118 = sadd.s32 %s117, 1
      %p121 = scmp.eq.s32.totalorder %s20, 1
      %p122 = scmp.ne.s32.totalorder %s117, %s119
      %p123 = scmp.eq.s32.totalorder %s20, 0
      %p124 = por %p122, %p123
      %p125 = scmp.ne.s32.totalorder %s117, %s119
      %p126 = scmp.eq.s32.totalorder %s25, 1
      %p127 = por %p125, %p126
      %p128 = scmp.ne.s32.totalorder %s119, %s120
      %p129 = scmp.eq.s32.totalorder %s25, 0
      %p130 = por %p128, %p129
      %p131 = scmp.ne.s32.totalorder %s119, %s120
      %p132 = scmp.eq.s32.totalorder %s26, 1
      %p133 = por %p131, %p132
      %p135 = scmp.ne.s32.totalorder %s120, %s134
      %p136 = scmp.eq.s32.totalorder %s26, 0
      %p137 = por %p135, %p136
      %s139 = sadd.s32 %s138, 1
      %p142 = scmp.eq.s32.totalorder %s20, 1
      %p143 = scmp.ne.s32.totalorder %s138, %s140
      %p144 = scmp.eq.s32.totalorder %s20, 0
      %p145 = por %p143, %p144
      %p146 = scmp.ne.s32.totalorder %s138, %s140
      %p147 = scmp.eq.s32.totalorder %s25, 1
      %p148 = por %p146, %p147
      %p149 = scmp.ne.s32.totalorder %s140, %s141
      %p150 = scmp.eq.s32.totalorder %s25, 0
      %p151 = por %p149, %p150
      %p152 = scmp.ne.s32.totalorder %s140, %s141
      %p153 = scmp.eq.s32.totalorder %s26, 1
      %p154 = por %p152, %p153
      %p156 = scmp.ne.s32.totalorder %s141, %s155
      %p157 = scmp.eq.s32.totalorder %s26, 0
      %p158 = por %p156, %p157
      %s159 = ssub.s32 %s20, %s27
      %p160 = scmp.eq.s32.totalorder %s159, 0
      %s162 = sadd.s32 %s161, 1
      %s163 = scalar_select %p160, %s161, %s162
      %p166 = pneg %p160
      %p167 = scmp.eq.s32.totalorder %s20, 1
      %p168 = por %p166, %p167
      %p169 = scmp.ne.s32.totalorder %s161, %s164
      %p170 = scmp.eq.s32.totalorder %s20, 0
      %p171 = por %p169, %p170
      %p172 = scmp.ne.s32.totalorder %s161, %s164
      %p173 = scmp.eq.s32.totalorder %s25, 1
      %p174 = por %p172, %p173
      %p175 = scmp.ne.s32.totalorder %s164, %s165
      %p176 = scmp.eq.s32.totalorder %s25, 0
      %p177 = por %p175, %p176
      %p178 = scmp.ne.s32.totalorder %s164, %s165
      %p179 = scmp.eq.s32.totalorder %s26, 1
      %p180 = por %p178, %p179
      %p182 = scmp.ne.s32.totalorder %s165, %s181
      %p183 = scmp.eq.s32.totalorder %s26, 0
      %p184 = por %p182, %p183
      %p185 = scmp.le.s32.totalorder 1, %s20
      %p186 = scmp.lt.s32.totalorder %s20, 3
      %p187 = pnand %p185, %p186
      %p188 = pneg %p187
      // Predicated region
      $region9: #{tpu_custom_call.1} parent=5 // pred_check
        _
      $region10: #{tpu_custom_call.1} parent=5 // pred_check_branch
        %190 = sbr.rel (%p187) target = $region12
      $region11: #{tpu_custom_call.1} parent=5 // pred_region
        %s191 = ssub.s32 %s20, 1
        // Predicated region
        $region13: #{tpu_custom_call.1} parent=11 // pred_check
          %p192 = pneg %p67
        $region14: #{tpu_custom_call.1} parent=11 // pred_check_branch
          %194 = sbr.rel (%p192) target = $region16
        $region15: #{tpu_custom_call.1} parent=11 // pred_region
          %s196 = ssub.s32 512, 512
          %197 = vsyncadd [#allocation6], %s196
          %s198 = sshll.u32 [#allocation5], 4
          %s199 = int_to_ptr.vmem [resolvable:$true] %s198
          %204 = dma.hbm_to_vmem [thread:$0]  %s1, 512, %s199, [#allocation6], 128, 128, 8
        $region16: #{tpu_custom_call.1} parent=11 // pred_fallthru
          _
        // Predicated region
        $region17: #{tpu_custom_call.1} parent=11 // pred_check
          %p205 = pneg %p88
        $region18: #{tpu_custom_call.1} parent=11 // pred_check_branch
          %207 = sbr.rel (%p205) target = $region20
        $region19: #{tpu_custom_call.1} parent=11 // pred_region
          %s209 = ssub.s32 896, 896
          %210 = vsyncadd [#allocation6], %s209
          %s211 = sshll.u32 [#allocation7], 4
          %s212 = int_to_ptr.vmem [resolvable:$true] %s211
          %217 = dma.hbm_to_vmem [thread:$0]  %s2, 896, %s212, [#allocation6], 128, 128, 8
        $region20: #{tpu_custom_call.1} parent=11 // pred_fallthru
          _
        // Predicated region
        $region21: #{tpu_custom_call.1} parent=11 // pred_check
          %p218 = pneg %p109
        $region22: #{tpu_custom_call.1} parent=11 // pred_check_branch
          %220 = sbr.rel (%p218) target = $region24
        $region23: #{tpu_custom_call.1} parent=11 // pred_region
          %s222 = ssub.s32 1536, 1536
          %223 = vsyncadd [#allocation9], %s222
          %s224 = sshll.u32 [#allocation8], 4
          %s225 = int_to_ptr.vmem [resolvable:$true] %s224
          %230 = dma.hbm_to_vmem [thread:$0]  %s3, 1536, %s225, [#allocation9], 128, 128, 8
        $region24: #{tpu_custom_call.1} parent=11 // pred_fallthru
          _
        // Predicated region
        $region25: #{tpu_custom_call.1} parent=11 // pred_check
          %p231 = pneg %p130
        $region26: #{tpu_custom_call.1} parent=11 // pred_check_branch
          %233 = sbr.rel (%p231) target = $region28
        $region27: #{tpu_custom_call.1} parent=11 // pred_region
          %s235 = ssub.s32 512, 512
          %236 = vsyncadd [#allocation9], %s235
          %s237 = sshll.u32 [#allocation10], 4
          %s238 = int_to_ptr.vmem [resolvable:$true] %s237
          %243 = dma.hbm_to_vmem [thread:$0]  %s4, 512, %s238, [#allocation9], 128, 128, 8
        $region28: #{tpu_custom_call.1} parent=11 // pred_fallthru
          _
        // Predicated region
        $region29: #{tpu_custom_call.1} parent=11 // pred_check
          %p244 = pneg %p151
        $region30: #{tpu_custom_call.1} parent=11 // pred_check_branch
          %246 = sbr.rel (%p244) target = $region32
        $region31: #{tpu_custom_call.1} parent=11 // pred_region
          _
        $region32: #{tpu_custom_call.1} parent=11 // pred_fallthru
          _
      $region12: #{tpu_custom_call.1} parent=5 // pred_fallthru
        _
      %p247 = scmp.lt.s32.totalorder %s20, 2
      // Predicated region
      $region33: #{tpu_custom_call.1} parent=5 // pred_check
        %p248 = pneg %p247
      $region34: #{tpu_custom_call.1} parent=5 // pred_check_branch
        %250 = sbr.rel (%p248) target = $region36
      $region35: #{tpu_custom_call.1} parent=5 // pred_region
        // Predicated region
        $region37: #{tpu_custom_call.1} parent=35 // pred_check
          %p251 = pneg %p40
        $region38: #{tpu_custom_call.1} parent=35 // pred_check_branch
          %253 = sbr.rel (%p251) target = $region40
        $region39: #{tpu_custom_call.1} parent=35 // pred_region
          %s254 = sand.u32 %s30, 1
          %s255 = scalar_lea.sflag [#allocation3], %s254
          %s256 = sand.u32 %s30, 1
          %s257 = smul.addr %s256, 32
          %s258 = scalar_lea.vmem [#allocation2], %s257
          %s260 = ssub.s32 512, 512
          %261 = vsyncadd %s255, %s260
          %s262 = smul.addr %s20, 4
          %s263 = smul.addr %s262, 128
          %s264 = scalar_lea.hbm %s0, %s263
          %s265 = sshll.u32 %s258, 4
          %s266 = int_to_ptr.vmem [resolvable:$true] %s265
          %271 = dma.hbm_to_vmem [thread:$0]  %s264, 512, %s266, %s255, 128, 128, 8
        $region40: #{tpu_custom_call.1} parent=35 // pred_fallthru
          _
      $region36: #{tpu_custom_call.1} parent=5 // pred_fallthru
        _
      %p272 = scmp.le.s32.totalorder 1, %s20
      %p273 = scmp.lt.s32.totalorder %s20, 3
      %p274 = pnand %p272, %p273
      %p275 = pneg %p274
      // Predicated region
      $region41: #{tpu_custom_call.1} parent=5 // pred_check
        _
      $region42: #{tpu_custom_call.1} parent=5 // pred_check_branch
        %277 = sbr.rel (%p274) target = $region44
      $region43: #{tpu_custom_call.1} parent=5 // pred_region
        %s278 = ssub.s32 %s20, 1
        %s279 = sand.u32 %s33, 1
        %s280 = scalar_lea.sflag [#allocation3], %s279
        %s281 = sand.u32 %s33, 1
        %s282 = smul.addr %s281, 32
        %s283 = scalar_lea.vmem [#allocation2], %s282
        // Predicated region
        $region45: #{tpu_custom_call.1} parent=43 // pred_check
          %p284 = pneg %p46
        $region46: #{tpu_custom_call.1} parent=43 // pred_check_branch
          %286 = sbr.rel (%p284) target = $region48
        $region47: #{tpu_custom_call.1} parent=43 // pred_region
          %287 = dma.done %s280, 512
        $region48: #{tpu_custom_call.1} parent=43 // pred_fallthru
          _
        // Predicated region
        $region49: #{tpu_custom_call.1} parent=43 // pred_check
          %p288 = pneg %p67
        $region50: #{tpu_custom_call.1} parent=43 // pred_check_branch
          %290 = sbr.rel (%p288) target = $region52
        $region51: #{tpu_custom_call.1} parent=43 // pred_region
          %291 = dma.done [#allocation6], 512
        $region52: #{tpu_custom_call.1} parent=43 // pred_fallthru
          _
        // Predicated region
        $region53: #{tpu_custom_call.1} parent=43 // pred_check
          %p292 = pneg %p88
        $region54: #{tpu_custom_call.1} parent=43 // pred_check_branch
          %294 = sbr.rel (%p292) target = $region56
        $region55: #{tpu_custom_call.1} parent=43 // pred_region
          %295 = dma.done [#allocation6], 896
        $region56: #{tpu_custom_call.1} parent=43 // pred_fallthru
          _
        // Predicated region
        $region57: #{tpu_custom_call.1} parent=43 // pred_check
          %p296 = pneg %p109
        $region58: #{tpu_custom_call.1} parent=43 // pred_check_branch
          %298 = sbr.rel (%p296) target = $region60
        $region59: #{tpu_custom_call.1} parent=43 // pred_region
          %299 = dma.done [#allocation9], 1536
        $region60: #{tpu_custom_call.1} parent=43 // pred_fallthru
          _
        // Predicated region
        $region61: #{tpu_custom_call.1} parent=43 // pred_check
          %p300 = pneg %p130
        $region62: #{tpu_custom_call.1} parent=43 // pred_check_branch
          %302 = sbr.rel (%p300) target = $region64
        $region63: #{tpu_custom_call.1} parent=43 // pred_region
          %303 = dma.done [#allocation9], 512
        $region64: #{tpu_custom_call.1} parent=43 // pred_fallthru
          _
        %s304 = sand.u32 %s33, 1
        %s305 = scalar_lea.sflag [#allocation3], %s304
        %s306 = sand.u32 %s33, 1
        %s307 = smul.addr %s306, 32
        %s308 = scalar_lea.vmem [#allocation2], %s307
        %p309 = pneg %p46
        %p310 = pneg %p43
        %p311 = pneg %p67
        %p312 = pneg %p64
        %p313 = pneg %p88
        %p314 = pneg %p85
        %p315 = pneg %p109
        %p316 = pneg %p106
        %p317 = pneg %p130
        %p318 = pneg %p127
        %p319 = pneg %p151
        %p320 = pneg %p148
        %p321 = pneg %p177
        %p322 = pneg %p174
        %s323 = sand.u32 %s164, 1
        %s324 = scalar_lea.sflag [#allocation4], %s323
        %s325 = sand.u32 %s164, 1
        %s326 = smul.addr %s325, 56
        %s327 = scalar_lea.vmem [#allocation11], %s326
        %v328 = vld [vmem:[%s283] sm:$0xff]
        %v329 = vld [vmem:[%s283 + $0x8] sm:$0xff]
        %v330 = vld [vmem:[%s283 + $0x10] sm:$0xff]
        %v331 = vld [vmem:[%s283 + $0x18] sm:$0xff]
        %v332 = vlaneseq
        %v333 = vshrl.u32 %v332, 7
        %v334 = vadd.s32 %v333, 8
        %v335 = vadd.s32 %v333, 16
        %v336 = vadd.s32 %v333, 24
        %v337 = vadd.s32 %v333, 32
        %v338 = vadd.s32 %v333, 40
        %v339 = vadd.s32 %v333, 48
        %v340 = vlaneseq
        %v341 = vand.u32 %v340, 127
        %v342 = vadd.s32 %v341, 1
        %vm343 = vcmp.eq.s32.totalorder %v333, %v342
        %vm344 = vcmp.eq.s32.totalorder %v334, %v342
        %vm345 = vcmp.eq.s32.totalorder %v335, %v342
        %vm346 = vcmp.eq.s32.totalorder %v336, %v342
        %vm347 = vcmp.eq.s32.totalorder %v337, %v342
        %vm348 = vcmp.eq.s32.totalorder %v338, %v342
        %vm349 = vcmp.eq.s32.totalorder %v339, %v342
        %v350 = vsel %vm343, 1.0, 0.0
        %v351 = vsel %vm344, 1.0, 0.0
        %v352 = vsel %vm345, 1.0, 0.0
        %v353 = vsel %vm346, 1.0, 0.0
        %v354 = vsel %vm347, 1.0, 0.0
        %v355 = vsel %vm348, 1.0, 0.0
        %v356 = vsel %vm349, 1.0, 0.0
        %vm357 = vcmp.eq.s32.totalorder %v333, 0
        %vm358 = vcmp.eq.s32.totalorder %v334, 0
        %vm359 = vcmp.eq.s32.totalorder %v335, 0
        %vm360 = vcmp.eq.s32.totalorder %v336, 0
        %vm361 = vcmp.eq.s32.totalorder %v337, 0
        %vm362 = vcmp.eq.s32.totalorder %v338, 0
        %vm363 = vcmp.eq.s32.totalorder %v339, 0
        %v364 = vsel %vm357, 0.020408163, 0.0
        %v365 = vsel %vm358, 0.020408163, 0.0
        %v366 = vsel %vm359, 0.020408163, 0.0
        %v367 = vsel %vm360, 0.020408163, 0.0
        %v368 = vsel %vm361, 0.020408163, 0.0
        %v369 = vsel %vm362, 0.020408163, 0.0
        %v370 = vsel %vm363, 0.020408163, 0.0
        %v371 = vadd.f32 %v350, %v364
        %v372 = vadd.f32 %v351, %v365
        %v373 = vadd.f32 %v352, %v366
        %v374 = vadd.f32 %v353, %v367
        %v375 = vadd.f32 %v354, %v368
        %v376 = vadd.f32 %v355, %v369
        %v377 = vadd.f32 %v356, %v370
        %vm378 = vcmask 400384
        %v380 = vsel %vm378, %v371, 0
        %v383 = vsel %vm378, %v372, 0
        %v386 = vsel %vm378, %v373, 0
        %v389 = vsel %vm378, %v374, 0
        %v392 = vsel %vm378, %v375, 0
        %v395 = vsel %vm378, %v376, 0
        %v398 = vsel %vm378, %v377, 0
        %v401 = vsel %vm378, %v328, 0
        %v404 = vsel %vm378, %v329, 0
        %v407 = vsel %vm378, %v330, 0
        %v410 = vsel %vm378, %v331, 0
        %412 = vmatprep.subr.mxu0 0.0
        %413 = vmatpush1.xpose.msra.mxu0 0.0
        %414 = vmatprep.subr.mxu0 0.0
        %415 = vmatpush1.xpose.msra.mxu0 0.0
        %416 = vmatprep.subr.mxu0 0.0
        %417 = vmatpush1.xpose.msra.mxu0 0.0
        %418 = vmatprep.subr.mxu0 0.0
        %419 = vmatpush1.xpose.msra.mxu0 0.0
        %420 = vmatprep.subr.mxu0 0.0
        %421 = vmatpush1.xpose.msra.mxu0 0.0
        %422 = vmatprep.subr.mxu0 0.0
        %423 = vmatpush1.xpose.msra.mxu0 0.0
        %424 = vmatprep.subr.mxu0 0.0
        %425 = vmatpush1.xpose.msra.mxu0 0.0
        %426 = vmatprep.subr.mxu0 0.0
        %427 = vmatpush1.xpose.msra.mxu0 0.0
        %428 = vmatprep.subr.mxu0 0.0
        %429 = vmatpush1.xpose.msra.mxu0 0.0
        %430 = vmatprep.subr.mxu0 0.0
        %431 = vmatpush1.xpose.msra.mxu0 0.0
        %432 = vmatprep.subr.mxu0 0.0
        %433 = vmatpush1.xpose.msra.mxu0 0.0
        %434 = vmatprep.subr.mxu0 0.0
        %435 = vmatpush1.xpose.msra.mxu0 0.0
        %436 = vmatprep.subr.mxu0 0.0
        %437 = vmatpush1.xpose.msra.mxu0 %v410
        %438 = vmatprep.subr.mxu0 0.0
        %439 = vmatpush1.xpose.msra.mxu0 %v407
        %440 = vmatprep.subr.mxu0 0.0
        %441 = vmatpush1.xpose.msra.mxu0 %v404
        %442 = vmatprep.subr.mxu0 0.0
        %443 = vmatpush1.xpose.msra.mxu0 %v401
        %444 = vmatprep.subr.mxu0 0.0
        %445 = vmatpush2.xpose.msra.mxu0 0.0
        %446 = vmatprep.subr.mxu0 0.0
        %447 = vmatpush2.xpose.msra.mxu0 0.0
        %448 = vmatprep.subr.mxu0 0.0
        %449 = vmatpush2.xpose.msra.mxu0 0.0
        %450 = vmatprep.subr.mxu0 0.0
        %451 = vmatpush2.xpose.msra.mxu0 0.0
        %452 = vmatprep.subr.mxu0 0.0
        %453 = vmatpush2.xpose.msra.mxu0 0.0
        %454 = vmatprep.subr.mxu0 0.0
        %455 = vmatpush2.xpose.msra.mxu0 0.0
        %456 = vmatprep.subr.mxu0 0.0
        %457 = vmatpush2.xpose.msra.mxu0 0.0
        %458 = vmatprep.subr.mxu0 0.0
        %459 = vmatpush2.xpose.msra.mxu0 0.0
        %460 = vmatprep.subr.mxu0 0.0
        %461 = vmatpush2.xpose.msra.mxu0 0.0
        %462 = vmatprep.subr.mxu0 0.0
        %463 = vmatpush2.xpose.msra.mxu0 0.0
        %464 = vmatprep.subr.mxu0 0.0
        %465 = vmatpush2.xpose.msra.mxu0 0.0
        %466 = vmatprep.subr.mxu0 0.0
        %467 = vmatpush2.xpose.msra.mxu0 0.0
        %468 = vmatprep.subr.mxu0 0.0
        %469 = vmatpush2.xpose.msra.mxu0 0.0
        %470 = vmatprep.subr.mxu0 0.0
        %471 = vmatpush2.xpose.msra.mxu0 0.0
        %472 = vmatprep.subr.mxu0 0.0
        %473 = vmatpush2.xpose.msra.mxu0 0.0
        %474 = vmatprep.subr.mxu0 0.0
        %475 = vmatpush2.xpose.msra.mxu0 0.0
        %476 = vmatprep.mubr.f32.mxu0 0.0
        %477 = vmatmul.mubr.f32.gmra.mxu0 %v380
        %v478 = vpop.f32.mrf.mxu0
        %v479 = vadd.f32 0.0, %v478
        %v480 = vpop.f32.mrf.mxu0
        %481 = vmatprep.mubr.f32.mxu0 0.0
        %482 = vmatmul.mubr.f32.gmra.mxu0 %v383
        %v483 = vpop.f32.mrf.mxu0
        %v484 = vadd.f32 0.0, %v483
        %v485 = vpop.f32.mrf.mxu0
        %486 = vmatprep.mubr.f32.mxu0 0.0
        %487 = vmatmul.mubr.f32.gmra.mxu0 %v386
        %v488 = vpop.f32.mrf.mxu0
        %v489 = vadd.f32 0.0, %v488
        %v490 = vpop.f32.mrf.mxu0
        %491 = vmatprep.mubr.f32.mxu0 0.0
        %492 = vmatmul.mubr.f32.gmra.mxu0 %v389
        %v493 = vpop.f32.mrf.mxu0
        %v494 = vadd.f32 0.0, %v493
        %v495 = vpop.f32.mrf.mxu0
        %496 = vmatprep.mubr.f32.mxu0 0.0
        %497 = vmatmul.mubr.f32.gmra.mxu0 %v392
        %v498 = vpop.f32.mrf.mxu0
        %v499 = vadd.f32 0.0, %v498
        %v500 = vpop.f32.mrf.mxu0
        %501 = vmatprep.mubr.f32.mxu0 0.0
        %502 = vmatmul.mubr.f32.gmra.mxu0 %v395
        %v503 = vpop.f32.mrf.mxu0
        %v504 = vadd.f32 0.0, %v503
        %v505 = vpop.f32.mrf.mxu0
        %506 = vmatprep.mubr.f32.mxu0 0.0
        %507 = vmatmul.mubr.f32.gmra.mxu0 %v398
        %v508 = vpop.f32.mrf.mxu0
        %v509 = vadd.f32 0.0, %v508
        %v510 = vpop.f32.mrf.mxu0
        %511 = vdwg.mxu0
        %v512 = vld [vmem:[#allocation5] sm:$0xff]
        %v513 = vld [vmem:[#allocation5 + $0x8] sm:$0xff]
        %v514 = vld [vmem:[#allocation5 + $0x10] sm:$0xff]
        %v515 = vld [vmem:[#allocation5 + $0x18] sm:$0xff]
        %v516 = vld [vmem:[#allocation7] sm:$0xff]
        %v517 = vld [vmem:[#allocation7 + $0x8] sm:$0xff]
        %v518 = vld [vmem:[#allocation7 + $0x10] sm:$0xff]
        %v519 = vld [vmem:[#allocation7 + $0x18] sm:$0xff]
        %v520 = vld [vmem:[#allocation7 + $0x20] sm:$0xff]
        %v521 = vld [vmem:[#allocation7 + $0x28] sm:$0xff]
        %v522 = vld [vmem:[#allocation7 + $0x30] sm:$0x3]
        %vm523 = vcmask 261120
        %v525 = vsel %vm523, %v479, 0
        %v528 = vsel %vm523, %v484, 0
        %v531 = vsel %vm523, %v489, 0
        %v534 = vsel %vm523, %v494, 0
        %v537 = vsel %vm523, %v499, 0
        %v540 = vsel %vm523, %v504, 0
        %v543 = vsel %vm523, %v509, 0
        %545 = vmatprep.subr.mxu0 0.0
        %546 = vmatpush1.msra.mxu0 0.0
        %547 = vmatprep.subr.mxu0 0.0
        %548 = vmatpush1.msra.mxu0 0.0
        %549 = vmatprep.subr.mxu0 0.0
        %550 = vmatpush1.msra.mxu0 0.0
        %551 = vmatprep.subr.mxu0 0.0
        %552 = vmatpush1.msra.mxu0 0.0
        %553 = vmatprep.subr.mxu0 0.0
        %554 = vmatpush1.msra.mxu0 0.0
        %555 = vmatprep.subr.mxu0 0.0
        %556 = vmatpush1.msra.mxu0 0.0
        %557 = vmatprep.subr.mxu0 0.0
        %558 = vmatpush1.msra.mxu0 0.0
        %559 = vmatprep.subr.mxu0 0.0
        %560 = vmatpush1.msra.mxu0 0.0
        %561 = vmatprep.subr.mxu0 0.0
        %562 = vmatpush1.msra.mxu0 0.0
        %563 = vmatprep.subr.mxu0 0.0
        %564 = vmatpush1.msra.mxu0 0.0
        %565 = vmatprep.subr.mxu0 0.0
        %566 = vmatpush1.msra.mxu0 0.0
        %567 = vmatprep.subr.mxu0 0.0
        %568 = vmatpush1.msra.mxu0 0.0
        %569 = vmatprep.subr.mxu0 0.0
        %570 = vmatpush1.msra.mxu0 %v515
        %571 = vmatprep.subr.mxu0 0.0
        %572 = vmatpush1.msra.mxu0 %v514
        %573 = vmatprep.subr.mxu0 0.0
        %574 = vmatpush1.msra.mxu0 %v513
        %575 = vmatprep.subr.mxu0 0.0
        %576 = vmatpush1.msra.mxu0 %v512
        %577 = vmatprep.subr.mxu0 0.0
        %578 = vmatpush2.msra.mxu0 0.0
        %579 = vmatprep.subr.mxu0 0.0
        %580 = vmatpush2.msra.mxu0 0.0
        %581 = vmatprep.subr.mxu0 0.0
        %582 = vmatpush2.msra.mxu0 0.0
        %583 = vmatprep.subr.mxu0 0.0
        %584 = vmatpush2.msra.mxu0 0.0
        %585 = vmatprep.subr.mxu0 0.0
        %586 = vmatpush2.msra.mxu0 0.0
        %587 = vmatprep.subr.mxu0 0.0
        %588 = vmatpush2.msra.mxu0 0.0
        %589 = vmatprep.subr.mxu0 0.0
        %590 = vmatpush2.msra.mxu0 0.0
        %591 = vmatprep.subr.mxu0 0.0
        %592 = vmatpush2.msra.mxu0 0.0
        %593 = vmatprep.subr.mxu0 0.0
        %594 = vmatpush2.msra.mxu0 0.0
        %595 = vmatprep.subr.mxu0 0.0
        %596 = vmatpush2.msra.mxu0 0.0
        %597 = vmatprep.subr.mxu0 0.0
        %598 = vmatpush2.msra.mxu0 0.0
        %599 = vmatprep.subr.mxu0 0.0
        %600 = vmatpush2.msra.mxu0 0.0
        %601 = vmatprep.subr.mxu0 0.0
        %602 = vmatpush2.msra.mxu0 0.0
        %603 = vmatprep.subr.mxu0 0.0
        %604 = vmatpush2.msra.mxu0 0.0
        %605 = vmatprep.subr.mxu0 0.0
        %606 = vmatpush2.msra.mxu0 0.0
        %607 = vmatprep.subr.mxu0 0.0
        %608 = vmatpush2.msra.mxu0 0.0
        %609 = vmatprep.mubr.f32.mxu0 0.0
        %610 = vmatmul.mubr.f32.gmra.mxu0 %v525
        %v611 = vpop.f32.mrf.mxu0
        %v612 = vadd.f32 %v516, %v611
        %v613 = vpop.f32.mrf.mxu0
        %614 = vmatprep.mubr.f32.mxu0 0.0
        %615 = vmatmul.mubr.f32.gmra.mxu0 %v528
        %v616 = vpop.f32.mrf.mxu0
        %v617 = vadd.f32 %v517, %v616
        %v618 = vpop.f32.mrf.mxu0
        %619 = vmatprep.mubr.f32.mxu0 0.0
        %620 = vmatmul.mubr.f32.gmra.mxu0 %v531
        %v621 = vpop.f32.mrf.mxu0
        %v622 = vadd.f32 %v518, %v621
        %v623 = vpop.f32.mrf.mxu0
        %624 = vmatprep.mubr.f32.mxu0 0.0
        %625 = vmatmul.mubr.f32.gmra.mxu0 %v534
        %v626 = vpop.f32.mrf.mxu0
        %v627 = vadd.f32 %v519, %v626
        %v628 = vpop.f32.mrf.mxu0
        %629 = vmatprep.mubr.f32.mxu0 0.0
        %630 = vmatmul.mubr.f32.gmra.mxu0 %v537
        %v631 = vpop.f32.mrf.mxu0
        %v632 = vadd.f32 %v520, %v631
        %v633 = vpop.f32.mrf.mxu0
        %634 = vmatprep.mubr.f32.mxu0 0.0
        %635 = vmatmul.mubr.f32.gmra.mxu0 %v540
        %v636 = vpop.f32.mrf.mxu0
        %v637 = vadd.f32 %v521, %v636
        %v638 = vpop.f32.mrf.mxu0
        %639 = vmatprep.mubr.f32.mxu0 0.0
        %640 = vmatmul.mubr.f32.gmra.mxu0 %v543
        %v641 = vpop.f32.mrf.mxu0
        %v642 = vadd.f32 %v522, %v641
        %v643 = vpop.f32.mrf.mxu0
        %644 = vdwg.mxu0
        %vm645 = vcmp.ge.s32.totalorder %v341, 0
        %vm646 = vcmp.ge.s32.totalorder %v341, 8
        %vm647 = vcmp.ge.s32.totalorder %v341, 16
        %vm648 = vcmp.ge.s32.totalorder %v341, 24
        %vm649 = vcmp.lt.s32.totalorder %v341, 8
        %vm650 = vcmp.lt.s32.totalorder %v341, 16
        %vm651 = vcmp.lt.s32.totalorder %v341, 24
        %vm652 = vcmp.lt.s32.totalorder %v341, 32
        %vm653 = vmand %vm645, %vm649
        %vm654 = vmand %vm646, %vm650
        %vm655 = vmand %vm647, %vm651
        %vm656 = vmand %vm648, %vm652
        %v657 = vsel %vm653, 1, 0
        %v658 = vsel %vm654, 1, 0
        %v659 = vsel %vm655, 1, 0
        %v660 = vsel %vm656, 1, 0
        %v661 = vcvt.s32.f32 %v657
        %v662 = vcvt.s32.f32 %v658
        %v663 = vcvt.s32.f32 %v659
        %v664 = vcvt.s32.f32 %v660
        %v665 = vmul.f32 %v612, 0.35355338
        %v666 = vmul.f32 %v617, 0.35355338
        %v667 = vmul.f32 %v622, 0.35355338
        %v668 = vmul.f32 %v627, 0.35355338
        %v669 = vmul.f32 %v632, 0.35355338
        %v670 = vmul.f32 %v637, 0.35355338
        %v671 = vmul.f32 %v642, 0.35355338
        %v672 = vmul.f32 %v665, %v661
        %v673 = vmul.f32 %v666, %v661
        %v674 = vmul.f32 %v667, %v661
        %v675 = vmul.f32 %v668, %v661
        %v676 = vmul.f32 %v669, %v661
        %v677 = vmul.f32 %v670, %v661
        %v678 = vmul.f32 %v671, %v661
        %v679 = vmul.f32 %v665, %v662
        %v680 = vmul.f32 %v666, %v662
        %v681 = vmul.f32 %v667, %v662
        %v682 = vmul.f32 %v668, %v662
        %v683 = vmul.f32 %v669, %v662
        %v684 = vmul.f32 %v670, %v662
        %v685 = vmul.f32 %v671, %v662
        %v686 = vmul.f32 %v665, %v663
        %v687 = vmul.f32 %v666, %v663
        %v688 = vmul.f32 %v667, %v663
        %v689 = vmul.f32 %v668, %v663
        %v690 = vmul.f32 %v669, %v663
        %v691 = vmul.f32 %v670, %v663
        %v692 = vmul.f32 %v671, %v663
        %v693 = vmul.f32 %v665, %v664
        %v694 = vmul.f32 %v666, %v664
        %v695 = vmul.f32 %v667, %v664
        %v696 = vmul.f32 %v668, %v664
        %v697 = vmul.f32 %v669, %v664
        %v698 = vmul.f32 %v670, %v664
        %v699 = vmul.f32 %v671, %v664
        %v728 = vcombine.high %v672, %v672
        %v730 = vunpack.c.l.s4 1983009808
        %v731 = vunpack.c.0.s8 %v730
        %v732 = vlaneseq
        %v733 = vshrl.u32 %v732, 7
        %v734 = vsub.s32 %v731, %v733
        %v735 = vrot.slane %v672, %v734
        %v737 = vunpack.c.l.s4 1983009808
        %v738 = vunpack.c.0.s8 %v737
        %v739 = vlaneseq
        %v740 = vshrl.u32 %v739, 7
        %v741 = vsub.s32 %v738, %v740
        %v742 = vrot.slane %v728, %v741
        %v743 = vcombine.high %v735, %v735
        %v744 = vcombine.high %v742, %v742
        %v745 = vcombine.high %v673, %v673
        %v747 = vunpack.c.l.s4 1983009808
        %v748 = vunpack.c.0.s8 %v747
        %v749 = vlaneseq
        %v750 = vshrl.u32 %v749, 7
        %v751 = vsub.s32 %v748, %v750
        %v752 = vrot.slane %v673, %v751
        %v754 = vunpack.c.l.s4 1983009808
        %v755 = vunpack.c.0.s8 %v754
        %v756 = vlaneseq
        %v757 = vshrl.u32 %v756, 7
        %v758 = vsub.s32 %v755, %v757
        %v759 = vrot.slane %v745, %v758
        %v760 = vcombine.high %v752, %v752
        %v761 = vcombine.high %v759, %v759
        %v762 = vcombine.high %v674, %v674
        %v764 = vunpack.c.l.s4 1983009808
        %v765 = vunpack.c.0.s8 %v764
        %v766 = vlaneseq
        %v767 = vshrl.u32 %v766, 7
        %v768 = vsub.s32 %v765, %v767
        %v769 = vrot.slane %v674, %v768
        %v771 = vunpack.c.l.s4 1983009808
        %v772 = vunpack.c.0.s8 %v771
        %v773 = vlaneseq
        %v774 = vshrl.u32 %v773, 7
        %v775 = vsub.s32 %v772, %v774
        %v776 = vrot.slane %v762, %v775
        %v777 = vcombine.high %v769, %v769
        %v778 = vcombine.high %v776, %v776
        %v779 = vcombine.high %v675, %v675
        %v781 = vunpack.c.l.s4 1983009808
        %v782 = vunpack.c.0.s8 %v781
        %v783 = vlaneseq
        %v784 = vshrl.u32 %v783, 7
        %v785 = vsub.s32 %v782, %v784
        %v786 = vrot.slane %v675, %v785
        %v788 = vunpack.c.l.s4 1983009808
        %v789 = vunpack.c.0.s8 %v788
        %v790 = vlaneseq
        %v791 = vshrl.u32 %v790, 7
        %v792 = vsub.s32 %v789, %v791
        %v793 = vrot.slane %v779, %v792
        %v794 = vcombine.high %v786, %v786
        %v795 = vcombine.high %v793, %v793
        %v796 = vcombine.high %v676, %v676
        %v798 = vunpack.c.l.s4 1983009808
        %v799 = vunpack.c.0.s8 %v798
        %v800 = vlaneseq
        %v801 = vshrl.u32 %v800, 7
        %v802 = vsub.s32 %v799, %v801
        %v803 = vrot.slane %v676, %v802
        %v805 = vunpack.c.l.s4 1983009808
        %v806 = vunpack.c.0.s8 %v805
        %v807 = vlaneseq
        %v808 = vshrl.u32 %v807, 7
        %v809 = vsub.s32 %v806, %v808
        %v810 = vrot.slane %v796, %v809
        %v811 = vcombine.high %v803, %v803
        %v812 = vcombine.high %v810, %v810
        %v813 = vcombine.high %v677, %v677
        %v815 = vunpack.c.l.s4 1983009808
        %v816 = vunpack.c.0.s8 %v815
        %v817 = vlaneseq
        %v818 = vshrl.u32 %v817, 7
        %v819 = vsub.s32 %v816, %v818
        %v820 = vrot.slane %v677, %v819
        %v822 = vunpack.c.l.s4 1983009808
        %v823 = vunpack.c.0.s8 %v822
        %v824 = vlaneseq
        %v825 = vshrl.u32 %v824, 7
        %v826 = vsub.s32 %v823, %v825
        %v827 = vrot.slane %v813, %v826
        %v828 = vcombine.high %v820, %v820
        %v829 = vcombine.high %v827, %v827
        %v831 = vunpack.c.l.s4 1983009808
        %v832 = vunpack.c.0.s8 %v831
        %v833 = vlaneseq
        %v834 = vshrl.u32 %v833, 7
        %v835 = vsub.s32 %v832, %v834
        %v836 = vrot.slane %v678, %v835
        %v837 = vcombine.high %v679, %v679
        %v839 = vunpack.c.l.s4 1983009808
        %v840 = vunpack.c.0.s8 %v839
        %v841 = vlaneseq
        %v842 = vshrl.u32 %v841, 7
        %v843 = vsub.s32 %v840, %v842
        %v844 = vrot.slane %v679, %v843
        %v846 = vunpack.c.l.s4 1983009808
        %v847 = vunpack.c.0.s8 %v846
        %v848 = vlaneseq
        %v849 = vshrl.u32 %v848, 7
        %v850 = vsub.s32 %v847, %v849
        %v851 = vrot.slane %v837, %v850
        %v852 = vcombine.high %v844, %v844
        %v853 = vcombine.high %v851, %v851
        %v854 = vcombine.high %v680, %v680
        %v856 = vunpack.c.l.s4 1983009808
        %v857 = vunpack.c.0.s8 %v856
        %v858 = vlaneseq
        %v859 = vshrl.u32 %v858, 7
        %v860 = vsub.s32 %v857, %v859
        %v861 = vrot.slane %v680, %v860
        %v863 = vunpack.c.l.s4 1983009808
        %v864 = vunpack.c.0.s8 %v863
        %v865 = vlaneseq
        %v866 = vshrl.u32 %v865, 7
        %v867 = vsub.s32 %v864, %v866
        %v868 = vrot.slane %v854, %v867
        %v869 = vcombine.high %v861, %v861
        %v870 = vcombine.high %v868, %v868
        %v871 = vcombine.high %v681, %v681
        %v873 = vunpack.c.l.s4 1983009808
        %v874 = vunpack.c.0.s8 %v873
        %v875 = vlaneseq
        %v876 = vshrl.u32 %v875, 7
        %v877 = vsub.s32 %v874, %v876
        %v878 = vrot.slane %v681, %v877
        %v880 = vunpack.c.l.s4 1983009808
        %v881 = vunpack.c.0.s8 %v880
        %v882 = vlaneseq
        %v883 = vshrl.u32 %v882, 7
        %v884 = vsub.s32 %v881, %v883
        %v885 = vrot.slane %v871, %v884
        %v886 = vcombine.high %v878, %v878
        %v887 = vcombine.high %v885, %v885
        %v888 = vcombine.high %v682, %v682
        %v890 = vunpack.c.l.s4 1983009808
        %v891 = vunpack.c.0.s8 %v890
        %v892 = vlaneseq
        %v893 = vshrl.u32 %v892, 7
        %v894 = vsub.s32 %v891, %v893
        %v895 = vrot.slane %v682, %v894
        %v897 = vunpack.c.l.s4 1983009808
        %v898 = vunpack.c.0.s8 %v897
        %v899 = vlaneseq
        %v900 = vshrl.u32 %v899, 7
        %v901 = vsub.s32 %v898, %v900
        %v902 = vrot.slane %v888, %v901
        %v903 = vcombine.high %v895, %v895
        %v904 = vcombine.high %v902, %v902
        %v905 = vcombine.high %v683, %v683
        %v907 = vunpack.c.l.s4 1983009808
        %v908 = vunpack.c.0.s8 %v907
        %v909 = vlaneseq
        %v910 = vshrl.u32 %v909, 7
        %v911 = vsub.s32 %v908, %v910
        %v912 = vrot.slane %v683, %v911
        %v914 = vunpack.c.l.s4 1983009808
        %v915 = vunpack.c.0.s8 %v914
        %v916 = vlaneseq
        %v917 = vshrl.u32 %v916, 7
        %v918 = vsub.s32 %v915, %v917
        %v919 = vrot.slane %v905, %v918
        %v920 = vcombine.high %v912, %v912
        %v921 = vcombine.high %v919, %v919
        %v922 = vcombine.high %v684, %v684
        %v924 = vunpack.c.l.s4 1983009808
        %v925 = vunpack.c.0.s8 %v924
        %v926 = vlaneseq
        %v927 = vshrl.u32 %v926, 7
        %v928 = vsub.s32 %v925, %v927
        %v929 = vrot.slane %v684, %v928
        %v931 = vunpack.c.l.s4 1983009808
        %v932 = vunpack.c.0.s8 %v931
        %v933 = vlaneseq
        %v934 = vshrl.u32 %v933, 7
        %v935 = vsub.s32 %v932, %v934
        %v936 = vrot.slane %v922, %v935
        %v937 = vcombine.high %v929, %v929
        %v938 = vcombine.high %v936, %v936
        %v940 = vunpack.c.l.s4 1983009808
        %v941 = vunpack.c.0.s8 %v940
        %v942 = vlaneseq
        %v943 = vshrl.u32 %v942, 7
        %v944 = vsub.s32 %v941, %v943
        %v945 = vrot.slane %v685, %v944
        %v946 = vcombine.high %v686, %v686
        %v948 = vunpack.c.l.s4 1983009808
        %v949 = vunpack.c.0.s8 %v948
        %v950 = vlaneseq
        %v951 = vshrl.u32 %v950, 7
        %v952 = vsub.s32 %v949, %v951
        %v953 = vrot.slane %v686, %v952
        %v955 = vunpack.c.l.s4 1983009808
        %v956 = vunpack.c.0.s8 %v955
        %v957 = vlaneseq
        %v958 = vshrl.u32 %v957, 7
        %v959 = vsub.s32 %v956, %v958
        %v960 = vrot.slane %v946, %v959
        %v961 = vcombine.high %v953, %v953
        %v962 = vcombine.high %v960, %v960
        %v963 = vcombine.high %v687, %v687
        %v965 = vunpack.c.l.s4 1983009808
        %v966 = vunpack.c.0.s8 %v965
        %v967 = vlaneseq
        %v968 = vshrl.u32 %v967, 7
        %v969 = vsub.s32 %v966, %v968
        %v970 = vrot.slane %v687, %v969
        %v972 = vunpack.c.l.s4 1983009808
        %v973 = vunpack.c.0.s8 %v972
        %v974 = vlaneseq
        %v975 = vshrl.u32 %v974, 7
        %v976 = vsub.s32 %v973, %v975
        %v977 = vrot.slane %v963, %v976
        %v978 = vcombine.high %v970, %v970
        %v979 = vcombine.high %v977, %v977
        %v980 = vcombine.high %v688, %v688
        %v982 = vunpack.c.l.s4 1983009808
        %v983 = vunpack.c.0.s8 %v982
        %v984 = vlaneseq
        %v985 = vshrl.u32 %v984, 7
        %v986 = vsub.s32 %v983, %v985
        %v987 = vrot.slane %v688, %v986
        %v989 = vunpack.c.l.s4 1983009808
        %v990 = vunpack.c.0.s8 %v989
        %v991 = vlaneseq
        %v992 = vshrl.u32 %v991, 7
        %v993 = vsub.s32 %v990, %v992
        %v994 = vrot.slane %v980, %v993
        %v995 = vcombine.high %v987, %v987
        %v996 = vcombine.high %v994, %v994
        %v997 = vcombine.high %v689, %v689
        %v999 = vunpack.c.l.s4 1983009808
        %v1000 = vunpack.c.0.s8 %v999
        %v1001 = vlaneseq
        %v1002 = vshrl.u32 %v1001, 7
        %v1003 = vsub.s32 %v1000, %v1002
        %v1004 = vrot.slane %v689, %v1003
        %v1006 = vunpack.c.l.s4 1983009808
        %v1007 = vunpack.c.0.s8 %v1006
        %v1008 = vlaneseq
        %v1009 = vshrl.u32 %v1008, 7
        %v1010 = vsub.s32 %v1007, %v1009
        %v1011 = vrot.slane %v997, %v1010
        %v1012 = vcombine.high %v1004, %v1004
        %v1013 = vcombine.high %v1011, %v1011
        %v1014 = vcombine.high %v690, %v690
        %v1016 = vunpack.c.l.s4 1983009808
        %v1017 = vunpack.c.0.s8 %v1016
        %v1018 = vlaneseq
        %v1019 = vshrl.u32 %v1018, 7
        %v1020 = vsub.s32 %v1017, %v1019
        %v1021 = vrot.slane %v690, %v1020
        %v1023 = vunpack.c.l.s4 1983009808
        %v1024 = vunpack.c.0.s8 %v1023
        %v1025 = vlaneseq
        %v1026 = vshrl.u32 %v1025, 7
        %v1027 = vsub.s32 %v1024, %v1026
        %v1028 = vrot.slane %v1014, %v1027
        %v1029 = vcombine.high %v1021, %v1021
        %v1030 = vcombine.high %v1028, %v1028
        %v1031 = vcombine.high %v691, %v691
        %v1033 = vunpack.c.l.s4 1983009808
        %v1034 = vunpack.c.0.s8 %v1033
        %v1035 = vlaneseq
        %v1036 = vshrl.u32 %v1035, 7
        %v1037 = vsub.s32 %v1034, %v1036
        %v1038 = vrot.slane %v691, %v1037
        %v1040 = vunpack.c.l.s4 1983009808
        %v1041 = vunpack.c.0.s8 %v1040
        %v1042 = vlaneseq
        %v1043 = vshrl.u32 %v1042, 7
        %v1044 = vsub.s32 %v1041, %v1043
        %v1045 = vrot.slane %v1031, %v1044
        %v1046 = vcombine.high %v1038, %v1038
        %v1047 = vcombine.high %v1045, %v1045
        %v1049 = vunpack.c.l.s4 1983009808
        %v1050 = vunpack.c.0.s8 %v1049
        %v1051 = vlaneseq
        %v1052 = vshrl.u32 %v1051, 7
        %v1053 = vsub.s32 %v1050, %v1052
        %v1054 = vrot.slane %v692, %v1053
        %v1055 = vcombine.high %v693, %v693
        %v1057 = vunpack.c.l.s4 1983009808
        %v1058 = vunpack.c.0.s8 %v1057
        %v1059 = vlaneseq
        %v1060 = vshrl.u32 %v1059, 7
        %v1061 = vsub.s32 %v1058, %v1060
        %v1062 = vrot.slane %v693, %v1061
        %v1064 = vunpack.c.l.s4 1983009808
        %v1065 = vunpack.c.0.s8 %v1064
        %v1066 = vlaneseq
        %v1067 = vshrl.u32 %v1066, 7
        %v1068 = vsub.s32 %v1065, %v1067
        %v1069 = vrot.slane %v1055, %v1068
        %v1070 = vcombine.high %v1062, %v1062
        %v1071 = vcombine.high %v1069, %v1069
        %v1072 = vcombine.high %v694, %v694
        %v1074 = vunpack.c.l.s4 1983009808
        %v1075 = vunpack.c.0.s8 %v1074
        %v1076 = vlaneseq
        %v1077 = vshrl.u32 %v1076, 7
        %v1078 = vsub.s32 %v1075, %v1077
        %v1079 = vrot.slane %v694, %v1078
        %v1081 = vunpack.c.l.s4 1983009808
        %v1082 = vunpack.c.0.s8 %v1081
        %v1083 = vlaneseq
        %v1084 = vshrl.u32 %v1083, 7
        %v1085 = vsub.s32 %v1082, %v1084
        %v1086 = vrot.slane %v1072, %v1085
        %v1087 = vcombine.high %v1079, %v1079
        %v1088 = vcombine.high %v1086, %v1086
        %v1089 = vcombine.high %v695, %v695
        %v1091 = vunpack.c.l.s4 1983009808
        %v1092 = vunpack.c.0.s8 %v1091
        %v1093 = vlaneseq
        %v1094 = vshrl.u32 %v1093, 7
        %v1095 = vsub.s32 %v1092, %v1094
        %v1096 = vrot.slane %v695, %v1095
        %v1098 = vunpack.c.l.s4 1983009808
        %v1099 = vunpack.c.0.s8 %v1098
        %v1100 = vlaneseq
        %v1101 = vshrl.u32 %v1100, 7
        %v1102 = vsub.s32 %v1099, %v1101
        %v1103 = vrot.slane %v1089, %v1102
        %v1104 = vcombine.high %v1096, %v1096
        %v1105 = vcombine.high %v1103, %v1103
        %v1106 = vcombine.high %v696, %v696
        %v1108 = vunpack.c.l.s4 1983009808
        %v1109 = vunpack.c.0.s8 %v1108
        %v1110 = vlaneseq
        %v1111 = vshrl.u32 %v1110, 7
        %v1112 = vsub.s32 %v1109, %v1111
        %v1113 = vrot.slane %v696, %v1112
        %v1115 = vunpack.c.l.s4 1983009808
        %v1116 = vunpack.c.0.s8 %v1115
        %v1117 = vlaneseq
        %v1118 = vshrl.u32 %v1117, 7
        %v1119 = vsub.s32 %v1116, %v1118
        %v1120 = vrot.slane %v1106, %v1119
        %v1121 = vcombine.high %v1113, %v1113
        %v1122 = vcombine.high %v1120, %v1120
        %v1123 = vcombine.high %v697, %v697
        %v1125 = vunpack.c.l.s4 1983009808
        %v1126 = vunpack.c.0.s8 %v1125
        %v1127 = vlaneseq
        %v1128 = vshrl.u32 %v1127, 7
        %v1129 = vsub.s32 %v1126, %v1128
        %v1130 = vrot.slane %v697, %v1129
        %v1132 = vunpack.c.l.s4 1983009808
        %v1133 = vunpack.c.0.s8 %v1132
        %v1134 = vlaneseq
        %v1135 = vshrl.u32 %v1134, 7
        %v1136 = vsub.s32 %v1133, %v1135
        %v1137 = vrot.slane %v1123, %v1136
        %v1138 = vcombine.high %v1130, %v1130
        %v1139 = vcombine.high %v1137, %v1137
        %v1140 = vcombine.high %v698, %v698
        %v1142 = vunpack.c.l.s4 1983009808
        %v1143 = vunpack.c.0.s8 %v1142
        %v1144 = vlaneseq
        %v1145 = vshrl.u32 %v1144, 7
        %v1146 = vsub.s32 %v1143, %v1145
        %v1147 = vrot.slane %v698, %v1146
        %v1149 = vunpack.c.l.s4 1983009808
        %v1150 = vunpack.c.0.s8 %v1149
        %v1151 = vlaneseq
        %v1152 = vshrl.u32 %v1151, 7
        %v1153 = vsub.s32 %v1150, %v1152
        %v1154 = vrot.slane %v1140, %v1153
        %v1155 = vcombine.high %v1147, %v1147
        %v1156 = vcombine.high %v1154, %v1154
        %v1158 = vunpack.c.l.s4 1983009808
        %v1159 = vunpack.c.0.s8 %v1158
        %v1160 = vlaneseq
        %v1161 = vshrl.u32 %v1160, 7
        %v1162 = vsub.s32 %v1159, %v1161
        %v1163 = vrot.slane %v699, %v1162
        %v1164 = vcombine.low %v735, %v743
        %v1165 = vcombine.low %v742, %v744
        %v1167 = vunpack.c.l.s4 1983009808
        %v1168 = vunpack.c.0.s8 %v1167
        %v1169 = vlaneseq
        %v1170 = vshrl.u32 %v1169, 7
        %v1171 = vsub.s32 %v1168, %v1170
        %v1172 = vrot.slane %v1164, %v1171
        %v1174 = vunpack.c.l.s4 1983009808
        %v1175 = vunpack.c.0.s8 %v1174
        %v1176 = vlaneseq
        %v1177 = vshrl.u32 %v1176, 7
        %v1178 = vsub.s32 %v1175, %v1177
        %v1179 = vrot.slane %v1165, %v1178
        %v1180 = vcombine.low %v1172, %v1179
        %v1181 = vcombine.low %v752, %v760
        %v1182 = vcombine.low %v759, %v761
        %v1184 = vunpack.c.l.s4 1983009808
        %v1185 = vunpack.c.0.s8 %v1184
        %v1186 = vlaneseq
        %v1187 = vshrl.u32 %v1186, 7
        %v1188 = vsub.s32 %v1185, %v1187
        %v1189 = vrot.slane %v1181, %v1188
        %v1191 = vunpack.c.l.s4 1983009808
        %v1192 = vunpack.c.0.s8 %v1191
        %v1193 = vlaneseq
        %v1194 = vshrl.u32 %v1193, 7
        %v1195 = vsub.s32 %v1192, %v1194
        %v1196 = vrot.slane %v1182, %v1195
        %v1197 = vcombine.low %v1189, %v1196
        %v1198 = vcombine.low %v769, %v777
        %v1199 = vcombine.low %v776, %v778
        %v1201 = vunpack.c.l.s4 1983009808
        %v1202 = vunpack.c.0.s8 %v1201
        %v1203 = vlaneseq
        %v1204 = vshrl.u32 %v1203, 7
        %v1205 = vsub.s32 %v1202, %v1204
        %v1206 = vrot.slane %v1198, %v1205
        %v1208 = vunpack.c.l.s4 1983009808
        %v1209 = vunpack.c.0.s8 %v1208
        %v1210 = vlaneseq
        %v1211 = vshrl.u32 %v1210, 7
        %v1212 = vsub.s32 %v1209, %v1211
        %v1213 = vrot.slane %v1199, %v1212
        %v1214 = vcombine.low %v1206, %v1213
        %v1215 = vcombine.low %v786, %v794
        %v1216 = vcombine.low %v793, %v795
        %v1218 = vunpack.c.l.s4 1983009808
        %v1219 = vunpack.c.0.s8 %v1218
        %v1220 = vlaneseq
        %v1221 = vshrl.u32 %v1220, 7
        %v1222 = vsub.s32 %v1219, %v1221
        %v1223 = vrot.slane %v1215, %v1222
        %v1225 = vunpack.c.l.s4 1983009808
        %v1226 = vunpack.c.0.s8 %v1225
        %v1227 = vlaneseq
        %v1228 = vshrl.u32 %v1227, 7
        %v1229 = vsub.s32 %v1226, %v1228
        %v1230 = vrot.slane %v1216, %v1229
        %v1231 = vcombine.low %v1223, %v1230
        %v1232 = vcombine.low %v803, %v811
        %v1233 = vcombine.low %v810, %v812
        %v1235 = vunpack.c.l.s4 1983009808
        %v1236 = vunpack.c.0.s8 %v1235
        %v1237 = vlaneseq
        %v1238 = vshrl.u32 %v1237, 7
        %v1239 = vsub.s32 %v1236, %v1238
        %v1240 = vrot.slane %v1232, %v1239
        %v1242 = vunpack.c.l.s4 1983009808
        %v1243 = vunpack.c.0.s8 %v1242
        %v1244 = vlaneseq
        %v1245 = vshrl.u32 %v1244, 7
        %v1246 = vsub.s32 %v1243, %v1245
        %v1247 = vrot.slane %v1233, %v1246
        %v1248 = vcombine.low %v1240, %v1247
        %v1249 = vcombine.low %v820, %v828
        %v1250 = vcombine.low %v827, %v829
        %v1252 = vunpack.c.l.s4 1983009808
        %v1253 = vunpack.c.0.s8 %v1252
        %v1254 = vlaneseq
        %v1255 = vshrl.u32 %v1254, 7
        %v1256 = vsub.s32 %v1253, %v1255
        %v1257 = vrot.slane %v1249, %v1256
        %v1259 = vunpack.c.l.s4 1983009808
        %v1260 = vunpack.c.0.s8 %v1259
        %v1261 = vlaneseq
        %v1262 = vshrl.u32 %v1261, 7
        %v1263 = vsub.s32 %v1260, %v1262
        %v1264 = vrot.slane %v1250, %v1263
        %v1265 = vcombine.low %v1257, %v1264
        %v1266 = vcombine.low %v836, %v844
        %v1267 = vcombine.low %v852, %v851
        %v1269 = vunpack.c.l.s4 1983009808
        %v1270 = vunpack.c.0.s8 %v1269
        %v1271 = vlaneseq
        %v1272 = vshrl.u32 %v1271, 7
        %v1273 = vsub.s32 %v1270, %v1272
        %v1274 = vrot.slane %v1266, %v1273
        %v1276 = vunpack.c.l.s4 1983009808
        %v1277 = vunpack.c.0.s8 %v1276
        %v1278 = vlaneseq
        %v1279 = vshrl.u32 %v1278, 7
        %v1280 = vsub.s32 %v1277, %v1279
        %v1281 = vrot.slane %v1267, %v1280
        %v1282 = vcombine.low %v1274, %v1281
        %v1283 = vcombine.low %v853, %v861
        %v1284 = vcombine.low %v869, %v868
        %v1286 = vunpack.c.l.s4 1983009808
        %v1287 = vunpack.c.0.s8 %v1286
        %v1288 = vlaneseq
        %v1289 = vshrl.u32 %v1288, 7
        %v1290 = vsub.s32 %v1287, %v1289
        %v1291 = vrot.slane %v1283, %v1290
        %v1293 = vunpack.c.l.s4 1983009808
        %v1294 = vunpack.c.0.s8 %v1293
        %v1295 = vlaneseq
        %v1296 = vshrl.u32 %v1295, 7
        %v1297 = vsub.s32 %v1294, %v1296
        %v1298 = vrot.slane %v1284, %v1297
        %v1299 = vcombine.low %v1291, %v1298
        %v1300 = vcombine.low %v870, %v878
        %v1301 = vcombine.low %v886, %v885
        %v1303 = vunpack.c.l.s4 1983009808
        %v1304 = vunpack.c.0.s8 %v1303
        %v1305 = vlaneseq
        %v1306 = vshrl.u32 %v1305, 7
        %v1307 = vsub.s32 %v1304, %v1306
        %v1308 = vrot.slane %v1300, %v1307
        %v1310 = vunpack.c.l.s4 1983009808
        %v1311 = vunpack.c.0.s8 %v1310
        %v1312 = vlaneseq
        %v1313 = vshrl.u32 %v1312, 7
        %v1314 = vsub.s32 %v1311, %v1313
        %v1315 = vrot.slane %v1301, %v1314
        %v1316 = vcombine.low %v1308, %v1315
        %v1317 = vcombine.low %v887, %v895
        %v1318 = vcombine.low %v903, %v902
        %v1320 = vunpack.c.l.s4 1983009808
        %v1321 = vunpack.c.0.s8 %v1320
        %v1322 = vlaneseq
        %v1323 = vshrl.u32 %v1322, 7
        %v1324 = vsub.s32 %v1321, %v1323
        %v1325 = vrot.slane %v1317, %v1324
        %v1327 = vunpack.c.l.s4 1983009808
        %v1328 = vunpack.c.0.s8 %v1327
        %v1329 = vlaneseq
        %v1330 = vshrl.u32 %v1329, 7
        %v1331 = vsub.s32 %v1328, %v1330
        %v1332 = vrot.slane %v1318, %v1331
        %v1333 = vcombine.low %v1325, %v1332
        %v1334 = vcombine.low %v904, %v912
        %v1335 = vcombine.low %v920, %v919
        %v1337 = vunpack.c.l.s4 1983009808
        %v1338 = vunpack.c.0.s8 %v1337
        %v1339 = vlaneseq
        %v1340 = vshrl.u32 %v1339, 7
        %v1341 = vsub.s32 %v1338, %v1340
        %v1342 = vrot.slane %v1334, %v1341
        %v1344 = vunpack.c.l.s4 1983009808
        %v1345 = vunpack.c.0.s8 %v1344
        %v1346 = vlaneseq
        %v1347 = vshrl.u32 %v1346, 7
        %v1348 = vsub.s32 %v1345, %v1347
        %v1349 = vrot.slane %v1335, %v1348
        %v1350 = vcombine.low %v1342, %v1349
        %v1351 = vcombine.low %v921, %v929
        %v1352 = vcombine.low %v937, %v936
        %v1354 = vunpack.c.l.s4 1983009808
        %v1355 = vunpack.c.0.s8 %v1354
        %v1356 = vlaneseq
        %v1357 = vshrl.u32 %v1356, 7
        %v1358 = vsub.s32 %v1355, %v1357
        %v1359 = vrot.slane %v1351, %v1358
        %v1361 = vunpack.c.l.s4 1983009808
        %v1362 = vunpack.c.0.s8 %v1361
        %v1363 = vlaneseq
        %v1364 = vshrl.u32 %v1363, 7
        %v1365 = vsub.s32 %v1362, %v1364
        %v1366 = vrot.slane %v1352, %v1365
        %v1367 = vcombine.low %v1359, %v1366
        %v1368 = vcombine.low %v938, %v945
        %v1369 = vcombine.low %v953, %v961
        %v1371 = vunpack.c.l.s4 1983009808
        %v1372 = vunpack.c.0.s8 %v1371
        %v1373 = vlaneseq
        %v1374 = vshrl.u32 %v1373, 7
        %v1375 = vsub.s32 %v1372, %v1374
        %v1376 = vrot.slane %v1368, %v1375
        %v1378 = vunpack.c.l.s4 1983009808
        %v1379 = vunpack.c.0.s8 %v1378
        %v1380 = vlaneseq
        %v1381 = vshrl.u32 %v1380, 7
        %v1382 = vsub.s32 %v1379, %v1381
        %v1383 = vrot.slane %v1369, %v1382
        %v1384 = vcombine.low %v1376, %v1383
        %v1385 = vcombine.low %v960, %v962
        %v1386 = vcombine.low %v970, %v978
        %v1388 = vunpack.c.l.s4 1983009808
        %v1389 = vunpack.c.0.s8 %v1388
        %v1390 = vlaneseq
        %v1391 = vshrl.u32 %v1390, 7
        %v1392 = vsub.s32 %v1389, %v1391
        %v1393 = vrot.slane %v1385, %v1392
        %v1395 = vunpack.c.l.s4 1983009808
        %v1396 = vunpack.c.0.s8 %v1395
        %v1397 = vlaneseq
        %v1398 = vshrl.u32 %v1397, 7
        %v1399 = vsub.s32 %v1396, %v1398
        %v1400 = vrot.slane %v1386, %v1399
        %v1401 = vcombine.low %v1393, %v1400
        %v1402 = vcombine.low %v977, %v979
        %v1403 = vcombine.low %v987, %v995
        %v1405 = vunpack.c.l.s4 1983009808
        %v1406 = vunpack.c.0.s8 %v1405
        %v1407 = vlaneseq
        %v1408 = vshrl.u32 %v1407, 7
        %v1409 = vsub.s32 %v1406, %v1408
        %v1410 = vrot.slane %v1402, %v1409
        %v1412 = vunpack.c.l.s4 1983009808
        %v1413 = vunpack.c.0.s8 %v1412
        %v1414 = vlaneseq
        %v1415 = vshrl.u32 %v1414, 7
        %v1416 = vsub.s32 %v1413, %v1415
        %v1417 = vrot.slane %v1403, %v1416
        %v1418 = vcombine.low %v1410, %v1417
        %v1419 = vcombine.low %v994, %v996
        %v1420 = vcombine.low %v1004, %v1012
        %v1422 = vunpack.c.l.s4 1983009808
        %v1423 = vunpack.c.0.s8 %v1422
        %v1424 = vlaneseq
        %v1425 = vshrl.u32 %v1424, 7
        %v1426 = vsub.s32 %v1423, %v1425
        %v1427 = vrot.slane %v1419, %v1426
        %v1429 = vunpack.c.l.s4 1983009808
        %v1430 = vunpack.c.0.s8 %v1429
        %v1431 = vlaneseq
        %v1432 = vshrl.u32 %v1431, 7
        %v1433 = vsub.s32 %v1430, %v1432
        %v1434 = vrot.slane %v1420, %v1433
        %v1435 = vcombine.low %v1427, %v1434
        %v1436 = vcombine.low %v1011, %v1013
        %v1437 = vcombine.low %v1021, %v1029
        %v1439 = vunpack.c.l.s4 1983009808
        %v1440 = vunpack.c.0.s8 %v1439
        %v1441 = vlaneseq
        %v1442 = vshrl.u32 %v1441, 7
        %v1443 = vsub.s32 %v1440, %v1442
        %v1444 = vrot.slane %v1436, %v1443
        %v1446 = vunpack.c.l.s4 1983009808
        %v1447 = vunpack.c.0.s8 %v1446
        %v1448 = vlaneseq
        %v1449 = vshrl.u32 %v1448, 7
        %v1450 = vsub.s32 %v1447, %v1449
        %v1451 = vrot.slane %v1437, %v1450
        %v1452 = vcombine.low %v1444, %v1451
        %v1453 = vcombine.low %v1028, %v1030
        %v1454 = vcombine.low %v1038, %v1046
        %v1456 = vunpack.c.l.s4 1983009808
        %v1457 = vunpack.c.0.s8 %v1456
        %v1458 = vlaneseq
        %v1459 = vshrl.u32 %v1458, 7
        %v1460 = vsub.s32 %v1457, %v1459
        %v1461 = vrot.slane %v1453, %v1460
        %v1463 = vunpack.c.l.s4 1983009808
        %v1464 = vunpack.c.0.s8 %v1463
        %v1465 = vlaneseq
        %v1466 = vshrl.u32 %v1465, 7
        %v1467 = vsub.s32 %v1464, %v1466
        %v1468 = vrot.slane %v1454, %v1467
        %v1469 = vcombine.low %v1461, %v1468
        %v1470 = vcombine.low %v1045, %v1047
        %v1471 = vcombine.low %v1054, %v1062
        %v1473 = vunpack.c.l.s4 1983009808
        %v1474 = vunpack.c.0.s8 %v1473
        %v1475 = vlaneseq
        %v1476 = vshrl.u32 %v1475, 7
        %v1477 = vsub.s32 %v1474, %v1476
        %v1478 = vrot.slane %v1470, %v1477
        %v1480 = vunpack.c.l.s4 1983009808
        %v1481 = vunpack.c.0.s8 %v1480
        %v1482 = vlaneseq
        %v1483 = vshrl.u32 %v1482, 7
        %v1484 = vsub.s32 %v1481, %v1483
        %v1485 = vrot.slane %v1471, %v1484
        %v1486 = vcombine.low %v1478, %v1485
        %v1487 = vcombine.low %v1070, %v1069
        %v1488 = vcombine.low %v1071, %v1079
        %v1490 = vunpack.c.l.s4 1983009808
        %v1491 = vunpack.c.0.s8 %v1490
        %v1492 = vlaneseq
        %v1493 = vshrl.u32 %v1492, 7
        %v1494 = vsub.s32 %v1491, %v1493
        %v1495 = vrot.slane %v1487, %v1494
        %v1497 = vunpack.c.l.s4 1983009808
        %v1498 = vunpack.c.0.s8 %v1497
        %v1499 = vlaneseq
        %v1500 = vshrl.u32 %v1499, 7
        %v1501 = vsub.s32 %v1498, %v1500
        %v1502 = vrot.slane %v1488, %v1501
        %v1503 = vcombine.low %v1495, %v1502
        %v1504 = vcombine.low %v1087, %v1086
        %v1505 = vcombine.low %v1088, %v1096
        %v1507 = vunpack.c.l.s4 1983009808
        %v1508 = vunpack.c.0.s8 %v1507
        %v1509 = vlaneseq
        %v1510 = vshrl.u32 %v1509, 7
        %v1511 = vsub.s32 %v1508, %v1510
        %v1512 = vrot.slane %v1504, %v1511
        %v1514 = vunpack.c.l.s4 1983009808
        %v1515 = vunpack.c.0.s8 %v1514
        %v1516 = vlaneseq
        %v1517 = vshrl.u32 %v1516, 7
        %v1518 = vsub.s32 %v1515, %v1517
        %v1519 = vrot.slane %v1505, %v1518
        %v1520 = vcombine.low %v1512, %v1519
        %v1521 = vcombine.low %v1104, %v1103
        %v1522 = vcombine.low %v1105, %v1113
        %v1524 = vunpack.c.l.s4 1983009808
        %v1525 = vunpack.c.0.s8 %v1524
        %v1526 = vlaneseq
        %v1527 = vshrl.u32 %v1526, 7
        %v1528 = vsub.s32 %v1525, %v1527
        %v1529 = vrot.slane %v1521, %v1528
        %v1531 = vunpack.c.l.s4 1983009808
        %v1532 = vunpack.c.0.s8 %v1531
        %v1533 = vlaneseq
        %v1534 = vshrl.u32 %v1533, 7
        %v1535 = vsub.s32 %v1532, %v1534
        %v1536 = vrot.slane %v1522, %v1535
        %v1537 = vcombine.low %v1529, %v1536
        %v1538 = vcombine.low %v1121, %v1120
        %v1539 = vcombine.low %v1122, %v1130
        %v1541 = vunpack.c.l.s4 1983009808
        %v1542 = vunpack.c.0.s8 %v1541
        %v1543 = vlaneseq
        %v1544 = vshrl.u32 %v1543, 7
        %v1545 = vsub.s32 %v1542, %v1544
        %v1546 = vrot.slane %v1538, %v1545
        %v1548 = vunpack.c.l.s4 1983009808
        %v1549 = vunpack.c.0.s8 %v1548
        %v1550 = vlaneseq
        %v1551 = vshrl.u32 %v1550, 7
        %v1552 = vsub.s32 %v1549, %v1551
        %v1553 = vrot.slane %v1539, %v1552
        %v1554 = vcombine.low %v1546, %v1553
        %v1555 = vcombine.low %v1138, %v1137
        %v1556 = vcombine.low %v1139, %v1147
        %v1558 = vunpack.c.l.s4 1983009808
        %v1559 = vunpack.c.0.s8 %v1558
        %v1560 = vlaneseq
        %v1561 = vshrl.u32 %v1560, 7
        %v1562 = vsub.s32 %v1559, %v1561
        %v1563 = vrot.slane %v1555, %v1562
        %v1565 = vunpack.c.l.s4 1983009808
        %v1566 = vunpack.c.0.s8 %v1565
        %v1567 = vlaneseq
        %v1568 = vshrl.u32 %v1567, 7
        %v1569 = vsub.s32 %v1566, %v1568
        %v1570 = vrot.slane %v1556, %v1569
        %v1571 = vcombine.low %v1563, %v1570
        %v1572 = vcombine.low %v1155, %v1154
        %v1573 = vcombine.low %v1156, %v1163
        %v1575 = vunpack.c.l.s4 1983009808
        %v1576 = vunpack.c.0.s8 %v1575
        %v1577 = vlaneseq
        %v1578 = vshrl.u32 %v1577, 7
        %v1579 = vsub.s32 %v1576, %v1578
        %v1580 = vrot.slane %v1572, %v1579
        %v1582 = vunpack.c.l.s4 1983009808
        %v1583 = vunpack.c.0.s8 %v1582
        %v1584 = vlaneseq
        %v1585 = vshrl.u32 %v1584, 7
        %v1586 = vsub.s32 %v1583, %v1585
        %v1587 = vrot.slane %v1573, %v1586
        %v1588 = vcombine.low %v1580, %v1587
        %1596 = vrot.lane.b32.xlu0 %v612, 96
        %v1597 = vpop.permute.xlu0 %1596
        %1598 = vrot.lane.b32.xlu0 %v617, 96
        %v1599 = vpop.permute.xlu0 %1598
        %1600 = vrot.lane.b32.xlu0 %v622, 96
        %v1601 = vpop.permute.xlu0 %1600
        %1602 = vrot.lane.b32.xlu0 %v627, 96
        %v1603 = vpop.permute.xlu0 %1602
        %1604 = vrot.lane.b32.xlu0 %v632, 96
        %v1605 = vpop.permute.xlu0 %1604
        %1606 = vrot.lane.b32.xlu0 %v637, 96
        %v1607 = vpop.permute.xlu0 %1606
        %1608 = vrot.lane.b32.xlu0 %v642, 96
        %v1609 = vpop.permute.xlu0 %1608
        %v1610 = vsel %vm523, %v1180, 0
        %v1612 = vsel %vm523, %v1197, 0
        %v1614 = vsel %vm523, %v1214, 0
        %v1616 = vsel %vm523, %v1231, 0
        %v1618 = vsel %vm523, %v1248, 0
        %v1620 = vsel %vm523, %v1265, 0
        %v1622 = vsel %vm523, %v1282, 0
        %v1624 = vsel %vm523, %v1299, 0
        %v1626 = vsel %vm523, %v1316, 0
        %v1628 = vsel %vm523, %v1333, 0
        %v1630 = vsel %vm523, %v1350, 0
        %v1632 = vsel %vm523, %v1367, 0
        %v1634 = vsel %vm523, %v1384, 0
        %v1636 = vsel %vm523, %v1401, 0
        %v1638 = vsel %vm523, %v1418, 0
        %v1640 = vsel %vm523, %v1435, 0
        %v1642 = vsel %vm523, %v1452, 0
        %v1644 = vsel %vm523, %v1469, 0
        %v1646 = vsel %vm523, %v1486, 0
        %v1648 = vsel %vm523, %v1503, 0
        %v1650 = vsel %vm523, %v1520, 0
        %v1652 = vsel %vm523, %v1537, 0
        %v1654 = vsel %vm523, %v1554, 0
        %v1656 = vsel %vm523, %v1571, 0
        %v1658 = vsel %vm523, %v1588, 0
        %v1660 = vsel %vm523, %v1597, 0
        %v1662 = vsel %vm523, %v1599, 0
        %v1664 = vsel %vm523, %v1601, 0
        %v1666 = vsel %vm523, %v1603, 0
        %v1668 = vsel %vm523, %v1605, 0
        %v1670 = vsel %vm523, %v1607, 0
        %v1672 = vsel %vm523, %v1609, 0
        %1674 = vmatprep.subr.mxu0 0.0
        %1675 = vmatpush1.xpose.msra.mxu0 0.0
        %1676 = vmatprep.subr.mxu0 0.0
        %1677 = vmatpush1.xpose.msra.mxu0 0.0
        %1678 = vmatprep.subr.mxu0 0.0
        %1679 = vmatpush1.xpose.msra.mxu0 0.0
        %1680 = vmatprep.subr.mxu0 0.0
        %1681 = vmatpush1.xpose.msra.mxu0 0.0
        %1682 = vmatprep.subr.mxu0 0.0
        %1683 = vmatpush1.xpose.msra.mxu0 0.0
        %1684 = vmatprep.subr.mxu0 0.0
        %1685 = vmatpush1.xpose.msra.mxu0 0.0
        %1686 = vmatprep.subr.mxu0 0.0
        %1687 = vmatpush1.xpose.msra.mxu0 0.0
        %1688 = vmatprep.subr.mxu0 0.0
        %1689 = vmatpush1.xpose.msra.mxu0 0.0
        %1690 = vmatprep.subr.mxu0 0.0
        %1691 = vmatpush1.xpose.msra.mxu0 0.0
        %1692 = vmatprep.subr.mxu0 0.0
        %1693 = vmatpush1.xpose.msra.mxu0 %v1672
        %1694 = vmatprep.subr.mxu0 0.0
        %1695 = vmatpush1.xpose.msra.mxu0 %v1670
        %1696 = vmatprep.subr.mxu0 0.0
        %1697 = vmatpush1.xpose.msra.mxu0 %v1668
        %1698 = vmatprep.subr.mxu0 0.0
        %1699 = vmatpush1.xpose.msra.mxu0 %v1666
        %1700 = vmatprep.subr.mxu0 0.0
        %1701 = vmatpush1.xpose.msra.mxu0 %v1664
        %1702 = vmatprep.subr.mxu0 0.0
        %1703 = vmatpush1.xpose.msra.mxu0 %v1662
        %1704 = vmatprep.subr.mxu0 0.0
        %1705 = vmatpush1.xpose.msra.mxu0 %v1660
        %1706 = vmatprep.subr.mxu0 0.0
        %1707 = vmatpush2.xpose.msra.mxu0 0.0
        %1708 = vmatprep.subr.mxu0 0.0
        %1709 = vmatpush2.xpose.msra.mxu0 0.0
        %1710 = vmatprep.subr.mxu0 0.0
        %1711 = vmatpush2.xpose.msra.mxu0 0.0
        %1712 = vmatprep.subr.mxu0 0.0
        %1713 = vmatpush2.xpose.msra.mxu0 0.0
        %1714 = vmatprep.subr.mxu0 0.0
        %1715 = vmatpush2.xpose.msra.mxu0 0.0
        %1716 = vmatprep.subr.mxu0 0.0
        %1717 = vmatpush2.xpose.msra.mxu0 0.0
        %1718 = vmatprep.subr.mxu0 0.0
        %1719 = vmatpush2.xpose.msra.mxu0 0.0
        %1720 = vmatprep.subr.mxu0 0.0
        %1721 = vmatpush2.xpose.msra.mxu0 0.0
        %1722 = vmatprep.subr.mxu0 0.0
        %1723 = vmatpush2.xpose.msra.mxu0 0.0
        %1724 = vmatprep.subr.mxu0 0.0
        %1725 = vmatpush2.xpose.msra.mxu0 0.0
        %1726 = vmatprep.subr.mxu0 0.0
        %1727 = vmatpush2.xpose.msra.mxu0 0.0
        %1728 = vmatprep.subr.mxu0 0.0
        %1729 = vmatpush2.xpose.msra.mxu0 0.0
        %1730 = vmatprep.subr.mxu0 0.0
        %1731 = vmatpush2.xpose.msra.mxu0 0.0
        %1732 = vmatprep.subr.mxu0 0.0
        %1733 = vmatpush2.xpose.msra.mxu0 0.0
        %1734 = vmatprep.subr.mxu0 0.0
        %1735 = vmatpush2.xpose.msra.mxu0 0.0
        %1736 = vmatprep.subr.mxu0 0.0
        %1737 = vmatpush2.xpose.msra.mxu0 0.0
        %1738 = vmatprep.mubr.f32.mxu0 0.0
        %1739 = vmatmul.mubr.f32.gmra.mxu0 %v1610
        %v1740 = vpop.f32.mrf.mxu0
        %v1741 = vadd.f32 0.0, %v1740
        %v1742 = vpop.f32.mrf.mxu0
        %1743 = vmatprep.mubr.f32.mxu0 0.0
        %1744 = vmatmul.mubr.f32.gmra.mxu0 %v1612
        %v1745 = vpop.f32.mrf.mxu0
        %v1746 = vadd.f32 0.0, %v1745
        %v1747 = vpop.f32.mrf.mxu0
        %1748 = vmatprep.mubr.f32.mxu0 0.0
        %1749 = vmatmul.mubr.f32.gmra.mxu0 %v1614
        %v1750 = vpop.f32.mrf.mxu0
        %v1751 = vadd.f32 0.0, %v1750
        %v1752 = vpop.f32.mrf.mxu0
        %1753 = vmatprep.mubr.f32.mxu0 0.0
        %1754 = vmatmul.mubr.f32.gmra.mxu0 %v1616
        %v1755 = vpop.f32.mrf.mxu0
        %v1756 = vadd.f32 0.0, %v1755
        %v1757 = vpop.f32.mrf.mxu0
        %1758 = vmatprep.mubr.f32.mxu0 0.0
        %1759 = vmatmul.mubr.f32.gmra.mxu0 %v1618
        %v1760 = vpop.f32.mrf.mxu0
        %v1761 = vadd.f32 0.0, %v1760
        %v1762 = vpop.f32.mrf.mxu0
        %1763 = vmatprep.mubr.f32.mxu0 0.0
        %1764 = vmatmul.mubr.f32.gmra.mxu0 %v1620
        %v1765 = vpop.f32.mrf.mxu0
        %v1766 = vadd.f32 0.0, %v1765
        %v1767 = vpop.f32.mrf.mxu0
        %1768 = vmatprep.mubr.f32.mxu0 0.0
        %1769 = vmatmul.mubr.f32.gmra.mxu0 %v1622
        %v1770 = vpop.f32.mrf.mxu0
        %v1771 = vadd.f32 0.0, %v1770
        %v1772 = vpop.f32.mrf.mxu0
        %1773 = vmatprep.mubr.f32.mxu0 0.0
        %1774 = vmatmul.mubr.f32.gmra.mxu0 %v1624
        %v1775 = vpop.f32.mrf.mxu0
        %v1776 = vadd.f32 0.0, %v1775
        %v1777 = vpop.f32.mrf.mxu0
        %1778 = vmatprep.mubr.f32.mxu0 0.0
        %1779 = vmatmul.mubr.f32.gmra.mxu0 %v1626
        %v1780 = vpop.f32.mrf.mxu0
        %v1781 = vadd.f32 0.0, %v1780
        %v1782 = vpop.f32.mrf.mxu0
        %1783 = vmatprep.mubr.f32.mxu0 0.0
        %1784 = vmatmul.mubr.f32.gmra.mxu0 %v1628
        %v1785 = vpop.f32.mrf.mxu0
        %v1786 = vadd.f32 0.0, %v1785
        %v1787 = vpop.f32.mrf.mxu0
        %1788 = vmatprep.mubr.f32.mxu0 0.0
        %1789 = vmatmul.mubr.f32.gmra.mxu0 %v1630
        %v1790 = vpop.f32.mrf.mxu0
        %v1791 = vadd.f32 0.0, %v1790
        %v1792 = vpop.f32.mrf.mxu0
        %1793 = vmatprep.mubr.f32.mxu0 0.0
        %1794 = vmatmul.mubr.f32.gmra.mxu0 %v1632
        %v1795 = vpop.f32.mrf.mxu0
        %v1796 = vadd.f32 0.0, %v1795
        %v1797 = vpop.f32.mrf.mxu0
        %1798 = vmatprep.mubr.f32.mxu0 0.0
        %1799 = vmatmul.mubr.f32.gmra.mxu0 %v1634
        %v1800 = vpop.f32.mrf.mxu0
        %v1801 = vadd.f32 0.0, %v1800
        %v1802 = vpop.f32.mrf.mxu0
        %1803 = vmatprep.mubr.f32.mxu0 0.0
        %1804 = vmatmul.mubr.f32.gmra.mxu0 %v1636
        %v1805 = vpop.f32.mrf.mxu0
        %v1806 = vadd.f32 0.0, %v1805
        %v1807 = vpop.f32.mrf.mxu0
        %1808 = vmatprep.mubr.f32.mxu0 0.0
        %1809 = vmatmul.mubr.f32.gmra.mxu0 %v1638
        %v1810 = vpop.f32.mrf.mxu0
        %v1811 = vadd.f32 0.0, %v1810
        %v1812 = vpop.f32.mrf.mxu0
        %1813 = vmatprep.mubr.f32.mxu0 0.0
        %1814 = vmatmul.mubr.f32.gmra.mxu0 %v1640
        %v1815 = vpop.f32.mrf.mxu0
        %v1816 = vadd.f32 0.0, %v1815
        %v1817 = vpop.f32.mrf.mxu0
        %1818 = vmatprep.mubr.f32.mxu0 0.0
        %1819 = vmatmul.mubr.f32.gmra.mxu0 %v1642
        %v1820 = vpop.f32.mrf.mxu0
        %v1821 = vadd.f32 0.0, %v1820
        %v1822 = vpop.f32.mrf.mxu0
        %1823 = vmatprep.mubr.f32.mxu0 0.0
        %1824 = vmatmul.mubr.f32.gmra.mxu0 %v1644
        %v1825 = vpop.f32.mrf.mxu0
        %v1826 = vadd.f32 0.0, %v1825
        %v1827 = vpop.f32.mrf.mxu0
        %1828 = vmatprep.mubr.f32.mxu0 0.0
        %1829 = vmatmul.mubr.f32.gmra.mxu0 %v1646
        %v1830 = vpop.f32.mrf.mxu0
        %v1831 = vadd.f32 0.0, %v1830
        %v1832 = vpop.f32.mrf.mxu0
        %1833 = vmatprep.mubr.f32.mxu0 0.0
        %1834 = vmatmul.mubr.f32.gmra.mxu0 %v1648
        %v1835 = vpop.f32.mrf.mxu0
        %v1836 = vadd.f32 0.0, %v1835
        %v1837 = vpop.f32.mrf.mxu0
        %1838 = vmatprep.mubr.f32.mxu0 0.0
        %1839 = vmatmul.mubr.f32.gmra.mxu0 %v1650
        %v1840 = vpop.f32.mrf.mxu0
        %v1841 = vadd.f32 0.0, %v1840
        %v1842 = vpop.f32.mrf.mxu0
        %1843 = vmatprep.mubr.f32.mxu0 0.0
        %1844 = vmatmul.mubr.f32.gmra.mxu0 %v1652
        %v1845 = vpop.f32.mrf.mxu0
        %v1846 = vadd.f32 0.0, %v1845
        %v1847 = vpop.f32.mrf.mxu0
        %1848 = vmatprep.mubr.f32.mxu0 0.0
        %1849 = vmatmul.mubr.f32.gmra.mxu0 %v1654
        %v1850 = vpop.f32.mrf.mxu0
        %v1851 = vadd.f32 0.0, %v1850
        %v1852 = vpop.f32.mrf.mxu0
        %1853 = vmatprep.mubr.f32.mxu0 0.0
        %1854 = vmatmul.mubr.f32.gmra.mxu0 %v1656
        %v1855 = vpop.f32.mrf.mxu0
        %v1856 = vadd.f32 0.0, %v1855
        %v1857 = vpop.f32.mrf.mxu0
        %1858 = vmatprep.mubr.f32.mxu0 0.0
        %1859 = vmatmul.mubr.f32.gmra.mxu0 %v1658
        %v1860 = vpop.f32.mrf.mxu0
        %v1861 = vadd.f32 0.0, %v1860
        %v1862 = vpop.f32.mrf.mxu0
        %1863 = vdwg.mxu0
        %vm1864 = vcmask 408576
        %v1865 = vsel %vm1864, %v1741, -inf
        %1866 = vmax.xlane.f32.xlu0 %v1865
        %v1867 = vpop.xlane.xlu0 %1866
        %v1868 = vsel %vm1864, %v1746, -inf
        %1869 = vmax.xlane.f32.xlu0 %v1868
        %v1870 = vpop.xlane.xlu0 %1869
        %v1871 = vsel %vm1864, %v1751, -inf
        %1872 = vmax.xlane.f32.xlu0 %v1871
        %v1873 = vpop.xlane.xlu0 %1872
        %v1874 = vsel %vm1864, %v1756, -inf
        %1875 = vmax.xlane.f32.xlu0 %v1874
        %v1876 = vpop.xlane.xlu0 %1875
        %v1877 = vsel %vm1864, %v1761, -inf
        %1878 = vmax.xlane.f32.xlu0 %v1877
        %v1879 = vpop.xlane.xlu0 %1878
        %v1880 = vsel %vm1864, %v1766, -inf
        %1881 = vmax.xlane.f32.xlu0 %v1880
        %v1882 = vpop.xlane.xlu0 %1881
        %v1883 = vsel %vm1864, %v1771, -inf
        %1884 = vmax.xlane.f32.xlu0 %v1883
        %v1885 = vpop.xlane.xlu0 %1884
        %v1886 = vsel %vm1864, %v1776, -inf
        %1887 = vmax.xlane.f32.xlu0 %v1886
        %v1888 = vpop.xlane.xlu0 %1887
        %v1889 = vsel %vm1864, %v1781, -inf
        %1890 = vmax.xlane.f32.xlu0 %v1889
        %v1891 = vpop.xlane.xlu0 %1890
        %v1892 = vsel %vm1864, %v1786, -inf
        %1893 = vmax.xlane.f32.xlu0 %v1892
        %v1894 = vpop.xlane.xlu0 %1893
        %v1895 = vsel %vm1864, %v1791, -inf
        %1896 = vmax.xlane.f32.xlu0 %v1895
        %v1897 = vpop.xlane.xlu0 %1896
        %v1898 = vsel %vm1864, %v1796, -inf
        %1899 = vmax.xlane.f32.xlu0 %v1898
        %v1900 = vpop.xlane.xlu0 %1899
        %v1901 = vsel %vm1864, %v1801, -inf
        %1902 = vmax.xlane.f32.xlu0 %v1901
        %v1903 = vpop.xlane.xlu0 %1902
        %v1904 = vsel %vm1864, %v1806, -inf
        %1905 = vmax.xlane.f32.xlu0 %v1904
        %v1906 = vpop.xlane.xlu0 %1905
        %v1907 = vsel %vm1864, %v1811, -inf
        %1908 = vmax.xlane.f32.xlu0 %v1907
        %v1909 = vpop.xlane.xlu0 %1908
        %v1910 = vsel %vm1864, %v1816, -inf
        %1911 = vmax.xlane.f32.xlu0 %v1910
        %v1912 = vpop.xlane.xlu0 %1911
        %v1913 = vsel %vm1864, %v1821, -inf
        %1914 = vmax.xlane.f32.xlu0 %v1913
        %v1915 = vpop.xlane.xlu0 %1914
        %v1916 = vsel %vm1864, %v1826, -inf
        %1917 = vmax.xlane.f32.xlu0 %v1916
        %v1918 = vpop.xlane.xlu0 %1917
        %v1919 = vsel %vm1864, %v1831, -inf
        %1920 = vmax.xlane.f32.xlu0 %v1919
        %v1921 = vpop.xlane.xlu0 %1920
        %v1922 = vsel %vm1864, %v1836, -inf
        %1923 = vmax.xlane.f32.xlu0 %v1922
        %v1924 = vpop.xlane.xlu0 %1923
        %v1925 = vsel %vm1864, %v1841, -inf
        %1926 = vmax.xlane.f32.xlu0 %v1925
        %v1927 = vpop.xlane.xlu0 %1926
        %v1928 = vsel %vm1864, %v1846, -inf
        %1929 = vmax.xlane.f32.xlu0 %v1928
        %v1930 = vpop.xlane.xlu0 %1929
        %v1931 = vsel %vm1864, %v1851, -inf
        %1932 = vmax.xlane.f32.xlu0 %v1931
        %v1933 = vpop.xlane.xlu0 %1932
        %v1934 = vsel %vm1864, %v1856, -inf
        %1935 = vmax.xlane.f32.xlu0 %v1934
        %v1936 = vpop.xlane.xlu0 %1935
        %v1937 = vsel %vm1864, %v1861, -inf
        %1938 = vmax.xlane.f32.xlu0 %v1937
        %v1939 = vpop.xlane.xlu0 %1938
        %v1940 = vsub.f32 %v1741, %v1867
        %v1941 = vsub.f32 %v1746, %v1870
        %v1942 = vsub.f32 %v1751, %v1873
        %v1943 = vsub.f32 %v1756, %v1876
        %v1944 = vsub.f32 %v1761, %v1879
        %v1945 = vsub.f32 %v1766, %v1882
        %v1946 = vsub.f32 %v1771, %v1885
        %v1947 = vsub.f32 %v1776, %v1888
        %v1948 = vsub.f32 %v1781, %v1891
        %v1949 = vsub.f32 %v1786, %v1894
        %v1950 = vsub.f32 %v1791, %v1897
        %v1951 = vsub.f32 %v1796, %v1900
        %v1952 = vsub.f32 %v1801, %v1903
        %v1953 = vsub.f32 %v1806, %v1906
        %v1954 = vsub.f32 %v1811, %v1909
        %v1955 = vsub.f32 %v1816, %v1912
        %v1956 = vsub.f32 %v1821, %v1915
        %v1957 = vsub.f32 %v1826, %v1918
        %v1958 = vsub.f32 %v1831, %v1921
        %v1959 = vsub.f32 %v1836, %v1924
        %v1960 = vsub.f32 %v1841, %v1927
        %v1961 = vsub.f32 %v1846, %v1930
        %v1962 = vsub.f32 %v1851, %v1933
        %v1963 = vsub.f32 %v1856, %v1936
        %v1964 = vsub.f32 %v1861, %v1939
        %v1965 = vmul.f32 %v1940, 1.442695
        %v1966 = vpow.pop %v1965
        %v1967 = vmul.f32 %v1941, 1.442695
        %v1968 = vpow.pop %v1967
        %v1969 = vmul.f32 %v1942, 1.442695
        %v1970 = vpow.pop %v1969
        %v1971 = vmul.f32 %v1943, 1.442695
        %v1972 = vpow.pop %v1971
        %v1973 = vmul.f32 %v1944, 1.442695
        %v1974 = vpow.pop %v1973
        %v1975 = vmul.f32 %v1945, 1.442695
        %v1976 = vpow.pop %v1975
        %v1977 = vmul.f32 %v1946, 1.442695
        %v1978 = vpow.pop %v1977
        %v1979 = vmul.f32 %v1947, 1.442695
        %v1980 = vpow.pop %v1979
        %v1981 = vmul.f32 %v1948, 1.442695
        %v1982 = vpow.pop %v1981
        %v1983 = vmul.f32 %v1949, 1.442695
        %v1984 = vpow.pop %v1983
        %v1985 = vmul.f32 %v1950, 1.442695
        %v1986 = vpow.pop %v1985
        %v1987 = vmul.f32 %v1951, 1.442695
        %v1988 = vpow.pop %v1987
        %v1989 = vmul.f32 %v1952, 1.442695
        %v1990 = vpow.pop %v1989
        %v1991 = vmul.f32 %v1953, 1.442695
        %v1992 = vpow.pop %v1991
        %v1993 = vmul.f32 %v1954, 1.442695
        %v1994 = vpow.pop %v1993
        %v1995 = vmul.f32 %v1955, 1.442695
        %v1996 = vpow.pop %v1995
        %v1997 = vmul.f32 %v1956, 1.442695
        %v1998 = vpow.pop %v1997
        %v1999 = vmul.f32 %v1957, 1.442695
        %v2000 = vpow.pop %v1999
        %v2001 = vmul.f32 %v1958, 1.442695
        %v2002 = vpow.pop %v2001
        %v2003 = vmul.f32 %v1959, 1.442695
        %v2004 = vpow.pop %v2003
        %v2005 = vmul.f32 %v1960, 1.442695
        %v2006 = vpow.pop %v2005
        %v2007 = vmul.f32 %v1961, 1.442695
        %v2008 = vpow.pop %v2007
        %v2009 = vmul.f32 %v1962, 1.442695
        %v2010 = vpow.pop %v2009
        %v2011 = vmul.f32 %v1963, 1.442695
        %v2012 = vpow.pop %v2011
        %v2013 = vmul.f32 %v1964, 1.442695
        %v2014 = vpow.pop %v2013
        %v2015 = vsel %vm1864, %v1966, 0.0
        %2016 = vadd.xlane.f32.xlu0 %v2015
        %v2017 = vpop.xlane.xlu0 %2016
        %v2018 = vsel %vm1864, %v1968, 0.0
        %2019 = vadd.xlane.f32.xlu0 %v2018
        %v2020 = vpop.xlane.xlu0 %2019
        %v2021 = vsel %vm1864, %v1970, 0.0
        %2022 = vadd.xlane.f32.xlu0 %v2021
        %v2023 = vpop.xlane.xlu0 %2022
        %v2024 = vsel %vm1864, %v1972, 0.0
        %2025 = vadd.xlane.f32.xlu0 %v2024
        %v2026 = vpop.xlane.xlu0 %2025
        %v2027 = vsel %vm1864, %v1974, 0.0
        %2028 = vadd.xlane.f32.xlu0 %v2027
        %v2029 = vpop.xlane.xlu0 %2028
        %v2030 = vsel %vm1864, %v1976, 0.0
        %2031 = vadd.xlane.f32.xlu0 %v2030
        %v2032 = vpop.xlane.xlu0 %2031
        %v2033 = vsel %vm1864, %v1978, 0.0
        %2034 = vadd.xlane.f32.xlu0 %v2033
        %v2035 = vpop.xlane.xlu0 %2034
        %v2036 = vsel %vm1864, %v1980, 0.0
        %2037 = vadd.xlane.f32.xlu0 %v2036
        %v2038 = vpop.xlane.xlu0 %2037
        %v2039 = vsel %vm1864, %v1982, 0.0
        %2040 = vadd.xlane.f32.xlu0 %v2039
        %v2041 = vpop.xlane.xlu0 %2040
        %v2042 = vsel %vm1864, %v1984, 0.0
        %2043 = vadd.xlane.f32.xlu0 %v2042
        %v2044 = vpop.xlane.xlu0 %2043
        %v2045 = vsel %vm1864, %v1986, 0.0
        %2046 = vadd.xlane.f32.xlu0 %v2045
        %v2047 = vpop.xlane.xlu0 %2046
        %v2048 = vsel %vm1864, %v1988, 0.0
        %2049 = vadd.xlane.f32.xlu0 %v2048
        %v2050 = vpop.xlane.xlu0 %2049
        %v2051 = vsel %vm1864, %v1990, 0.0
        %2052 = vadd.xlane.f32.xlu0 %v2051
        %v2053 = vpop.xlane.xlu0 %2052
        %v2054 = vsel %vm1864, %v1992, 0.0
        %2055 = vadd.xlane.f32.xlu0 %v2054
        %v2056 = vpop.xlane.xlu0 %2055
        %v2057 = vsel %vm1864, %v1994, 0.0
        %2058 = vadd.xlane.f32.xlu0 %v2057
        %v2059 = vpop.xlane.xlu0 %2058
        %v2060 = vsel %vm1864, %v1996, 0.0
        %2061 = vadd.xlane.f32.xlu0 %v2060
        %v2062 = vpop.xlane.xlu0 %2061
        %v2063 = vsel %vm1864, %v1998, 0.0
        %2064 = vadd.xlane.f32.xlu0 %v2063
        %v2065 = vpop.xlane.xlu0 %2064
        %v2066 = vsel %vm1864, %v2000, 0.0
        %2067 = vadd.xlane.f32.xlu0 %v2066
        %v2068 = vpop.xlane.xlu0 %2067
        %v2069 = vsel %vm1864, %v2002, 0.0
        %2070 = vadd.xlane.f32.xlu0 %v2069
        %v2071 = vpop.xlane.xlu0 %2070
        %v2072 = vsel %vm1864, %v2004, 0.0
        %2073 = vadd.xlane.f32.xlu0 %v2072
        %v2074 = vpop.xlane.xlu0 %2073
        %v2075 = vsel %vm1864, %v2006, 0.0
        %2076 = vadd.xlane.f32.xlu0 %v2075
        %v2077 = vpop.xlane.xlu0 %2076
        %v2078 = vsel %vm1864, %v2008, 0.0
        %2079 = vadd.xlane.f32.xlu0 %v2078
        %v2080 = vpop.xlane.xlu0 %2079
        %v2081 = vsel %vm1864, %v2010, 0.0
        %2082 = vadd.xlane.f32.xlu0 %v2081
        %v2083 = vpop.xlane.xlu0 %2082
        %v2084 = vsel %vm1864, %v2012, 0.0
        %2085 = vadd.xlane.f32.xlu0 %v2084
        %v2086 = vpop.xlane.xlu0 %2085
        %v2087 = vsel %vm1864, %v2014, 0.0
        %2088 = vadd.xlane.f32.xlu0 %v2087
        %v2089 = vpop.xlane.xlu0 %2088
        %v2090 = vrcp.pop %v2017
        %v2091 = vrcp.pop %v2020
        %v2092 = vrcp.pop %v2023
        %v2093 = vrcp.pop %v2026
        %v2094 = vrcp.pop %v2029
        %v2095 = vrcp.pop %v2032
        %v2096 = vrcp.pop %v2035
        %v2097 = vrcp.pop %v2038
        %v2098 = vrcp.pop %v2041
        %v2099 = vrcp.pop %v2044
        %v2100 = vrcp.pop %v2047
        %v2101 = vrcp.pop %v2050
        %v2102 = vrcp.pop %v2053
        %v2103 = vrcp.pop %v2056
        %v2104 = vrcp.pop %v2059
        %v2105 = vrcp.pop %v2062
        %v2106 = vrcp.pop %v2065
        %v2107 = vrcp.pop %v2068
        %v2108 = vrcp.pop %v2071
        %v2109 = vrcp.pop %v2074
        %v2110 = vrcp.pop %v2077
        %v2111 = vrcp.pop %v2080
        %v2112 = vrcp.pop %v2083
        %v2113 = vrcp.pop %v2086
        %v2114 = vrcp.pop %v2089
        %v2115 = vmul.f32 %v1966, %v2090
        %v2116 = vmul.f32 %v1968, %v2091
        %v2117 = vmul.f32 %v1970, %v2092
        %v2118 = vmul.f32 %v1972, %v2093
        %v2119 = vmul.f32 %v1974, %v2094
        %v2120 = vmul.f32 %v1976, %v2095
        %v2121 = vmul.f32 %v1978, %v2096
        %v2122 = vmul.f32 %v1980, %v2097
        %v2123 = vmul.f32 %v1982, %v2098
        %v2124 = vmul.f32 %v1984, %v2099
        %v2125 = vmul.f32 %v1986, %v2100
        %v2126 = vmul.f32 %v1988, %v2101
        %v2127 = vmul.f32 %v1990, %v2102
        %v2128 = vmul.f32 %v1992, %v2103
        %v2129 = vmul.f32 %v1994, %v2104
        %v2130 = vmul.f32 %v1996, %v2105
        %v2131 = vmul.f32 %v1998, %v2106
        %v2132 = vmul.f32 %v2000, %v2107
        %v2133 = vmul.f32 %v2002, %v2108
        %v2134 = vmul.f32 %v2004, %v2109
        %v2135 = vmul.f32 %v2006, %v2110
        %v2136 = vmul.f32 %v2008, %v2111
        %v2137 = vmul.f32 %v2010, %v2112
        %v2138 = vmul.f32 %v2012, %v2113
        %v2139 = vmul.f32 %v2014, %v2114
        %2144 = vrot.lane.b32.xlu0 %v661, 64
        %v2145 = vpop.permute.xlu0 %2144
        %2146 = vrot.lane.b32.xlu0 %v662, 64
        %v2147 = vpop.permute.xlu0 %2146
        %2148 = vrot.lane.b32.xlu0 %v663, 64
        %v2149 = vpop.permute.xlu0 %2148
        %2150 = vrot.lane.b32.xlu0 %v664, 64
        %v2151 = vpop.permute.xlu0 %2150
        %v2156 = vmul.f32 %v612, %v2145
        %v2157 = vmul.f32 %v617, %v2145
        %v2158 = vmul.f32 %v622, %v2145
        %v2159 = vmul.f32 %v627, %v2145
        %v2160 = vmul.f32 %v632, %v2145
        %v2161 = vmul.f32 %v637, %v2145
        %v2162 = vmul.f32 %v642, %v2145
        %v2163 = vmul.f32 %v612, %v2147
        %v2164 = vmul.f32 %v617, %v2147
        %v2165 = vmul.f32 %v622, %v2147
        %v2166 = vmul.f32 %v627, %v2147
        %v2167 = vmul.f32 %v632, %v2147
        %v2168 = vmul.f32 %v637, %v2147
        %v2169 = vmul.f32 %v642, %v2147
        %v2170 = vmul.f32 %v612, %v2149
        %v2171 = vmul.f32 %v617, %v2149
        %v2172 = vmul.f32 %v622, %v2149
        %v2173 = vmul.f32 %v627, %v2149
        %v2174 = vmul.f32 %v632, %v2149
        %v2175 = vmul.f32 %v637, %v2149
        %v2176 = vmul.f32 %v642, %v2149
        %v2177 = vmul.f32 %v612, %v2151
        %v2178 = vmul.f32 %v617, %v2151
        %v2179 = vmul.f32 %v622, %v2151
        %v2180 = vmul.f32 %v627, %v2151
        %v2181 = vmul.f32 %v632, %v2151
        %v2182 = vmul.f32 %v637, %v2151
        %v2183 = vmul.f32 %v642, %v2151
        %v2209 = vcombine.high %v2115, %v2115
        %v2211 = vunpack.c.l.s4 1983009808
        %v2212 = vunpack.c.0.s8 %v2211
        %v2213 = vlaneseq
        %v2214 = vshrl.u32 %v2213, 7
        %v2215 = vsub.s32 %v2212, %v2214
        %v2216 = vrot.slane %v2115, %v2215
        %v2218 = vunpack.c.l.s4 1983009808
        %v2219 = vunpack.c.0.s8 %v2218
        %v2220 = vlaneseq
        %v2221 = vshrl.u32 %v2220, 7
        %v2222 = vsub.s32 %v2219, %v2221
        %v2223 = vrot.slane %v2209, %v2222
        %v2224 = vcombine.high %v2216, %v2216
        %v2225 = vcombine.high %v2223, %v2223
        %v2226 = vcombine.high %v2116, %v2116
        %v2228 = vunpack.c.l.s4 1983009808
        %v2229 = vunpack.c.0.s8 %v2228
        %v2230 = vlaneseq
        %v2231 = vshrl.u32 %v2230, 7
        %v2232 = vsub.s32 %v2229, %v2231
        %v2233 = vrot.slane %v2116, %v2232
        %v2235 = vunpack.c.l.s4 1983009808
        %v2236 = vunpack.c.0.s8 %v2235
        %v2237 = vlaneseq
        %v2238 = vshrl.u32 %v2237, 7
        %v2239 = vsub.s32 %v2236, %v2238
        %v2240 = vrot.slane %v2226, %v2239
        %v2241 = vcombine.high %v2233, %v2233
        %v2242 = vcombine.high %v2240, %v2240
        %v2243 = vcombine.high %v2117, %v2117
        %v2245 = vunpack.c.l.s4 1983009808
        %v2246 = vunpack.c.0.s8 %v2245
        %v2247 = vlaneseq
        %v2248 = vshrl.u32 %v2247, 7
        %v2249 = vsub.s32 %v2246, %v2248
        %v2250 = vrot.slane %v2117, %v2249
        %v2252 = vunpack.c.l.s4 1983009808
        %v2253 = vunpack.c.0.s8 %v2252
        %v2254 = vlaneseq
        %v2255 = vshrl.u32 %v2254, 7
        %v2256 = vsub.s32 %v2253, %v2255
        %v2257 = vrot.slane %v2243, %v2256
        %v2258 = vcombine.high %v2250, %v2250
        %v2259 = vcombine.high %v2257, %v2257
        %v2260 = vcombine.high %v2118, %v2118
        %v2262 = vunpack.c.l.s4 1983009808
        %v2263 = vunpack.c.0.s8 %v2262
        %v2264 = vlaneseq
        %v2265 = vshrl.u32 %v2264, 7
        %v2266 = vsub.s32 %v2263, %v2265
        %v2267 = vrot.slane %v2118, %v2266
        %v2269 = vunpack.c.l.s4 1983009808
        %v2270 = vunpack.c.0.s8 %v2269
        %v2271 = vlaneseq
        %v2272 = vshrl.u32 %v2271, 7
        %v2273 = vsub.s32 %v2270, %v2272
        %v2274 = vrot.slane %v2260, %v2273
        %v2275 = vcombine.high %v2267, %v2267
        %v2276 = vcombine.high %v2274, %v2274
        %v2277 = vcombine.high %v2119, %v2119
        %v2279 = vunpack.c.l.s4 1983009808
        %v2280 = vunpack.c.0.s8 %v2279
        %v2281 = vlaneseq
        %v2282 = vshrl.u32 %v2281, 7
        %v2283 = vsub.s32 %v2280, %v2282
        %v2284 = vrot.slane %v2119, %v2283
        %v2286 = vunpack.c.l.s4 1983009808
        %v2287 = vunpack.c.0.s8 %v2286
        %v2288 = vlaneseq
        %v2289 = vshrl.u32 %v2288, 7
        %v2290 = vsub.s32 %v2287, %v2289
        %v2291 = vrot.slane %v2277, %v2290
        %v2292 = vcombine.high %v2284, %v2284
        %v2293 = vcombine.high %v2291, %v2291
        %v2294 = vcombine.high %v2120, %v2120
        %v2296 = vunpack.c.l.s4 1983009808
        %v2297 = vunpack.c.0.s8 %v2296
        %v2298 = vlaneseq
        %v2299 = vshrl.u32 %v2298, 7
        %v2300 = vsub.s32 %v2297, %v2299
        %v2301 = vrot.slane %v2120, %v2300
        %v2303 = vunpack.c.l.s4 1983009808
        %v2304 = vunpack.c.0.s8 %v2303
        %v2305 = vlaneseq
        %v2306 = vshrl.u32 %v2305, 7
        %v2307 = vsub.s32 %v2304, %v2306
        %v2308 = vrot.slane %v2294, %v2307
        %v2309 = vcombine.high %v2301, %v2301
        %v2310 = vcombine.high %v2308, %v2308
        %v2311 = vcombine.high %v2121, %v2121
        %v2313 = vunpack.c.l.s4 1983009808
        %v2314 = vunpack.c.0.s8 %v2313
        %v2315 = vlaneseq
        %v2316 = vshrl.u32 %v2315, 7
        %v2317 = vsub.s32 %v2314, %v2316
        %v2318 = vrot.slane %v2121, %v2317
        %v2320 = vunpack.c.l.s4 1983009808
        %v2321 = vunpack.c.0.s8 %v2320
        %v2322 = vlaneseq
        %v2323 = vshrl.u32 %v2322, 7
        %v2324 = vsub.s32 %v2321, %v2323
        %v2325 = vrot.slane %v2311, %v2324
        %v2326 = vcombine.high %v2318, %v2318
        %v2327 = vcombine.high %v2325, %v2325
        %v2328 = vcombine.high %v2122, %v2122
        %v2330 = vunpack.c.l.s4 1983009808
        %v2331 = vunpack.c.0.s8 %v2330
        %v2332 = vlaneseq
        %v2333 = vshrl.u32 %v2332, 7
        %v2334 = vsub.s32 %v2331, %v2333
        %v2335 = vrot.slane %v2122, %v2334
        %v2337 = vunpack.c.l.s4 1983009808
        %v2338 = vunpack.c.0.s8 %v2337
        %v2339 = vlaneseq
        %v2340 = vshrl.u32 %v2339, 7
        %v2341 = vsub.s32 %v2338, %v2340
        %v2342 = vrot.slane %v2328, %v2341
        %v2343 = vcombine.high %v2335, %v2335
        %v2344 = vcombine.high %v2342, %v2342
        %v2345 = vcombine.high %v2123, %v2123
        %v2347 = vunpack.c.l.s4 1983009808
        %v2348 = vunpack.c.0.s8 %v2347
        %v2349 = vlaneseq
        %v2350 = vshrl.u32 %v2349, 7
        %v2351 = vsub.s32 %v2348, %v2350
        %v2352 = vrot.slane %v2123, %v2351
        %v2354 = vunpack.c.l.s4 1983009808
        %v2355 = vunpack.c.0.s8 %v2354
        %v2356 = vlaneseq
        %v2357 = vshrl.u32 %v2356, 7
        %v2358 = vsub.s32 %v2355, %v2357
        %v2359 = vrot.slane %v2345, %v2358
        %v2360 = vcombine.high %v2352, %v2352
        %v2361 = vcombine.high %v2359, %v2359
        %v2362 = vcombine.high %v2124, %v2124
        %v2364 = vunpack.c.l.s4 1983009808
        %v2365 = vunpack.c.0.s8 %v2364
        %v2366 = vlaneseq
        %v2367 = vshrl.u32 %v2366, 7
        %v2368 = vsub.s32 %v2365, %v2367
        %v2369 = vrot.slane %v2124, %v2368
        %v2371 = vunpack.c.l.s4 1983009808
        %v2372 = vunpack.c.0.s8 %v2371
        %v2373 = vlaneseq
        %v2374 = vshrl.u32 %v2373, 7
        %v2375 = vsub.s32 %v2372, %v2374
        %v2376 = vrot.slane %v2362, %v2375
        %v2377 = vcombine.high %v2369, %v2369
        %v2378 = vcombine.high %v2376, %v2376
        %v2379 = vcombine.high %v2125, %v2125
        %v2381 = vunpack.c.l.s4 1983009808
        %v2382 = vunpack.c.0.s8 %v2381
        %v2383 = vlaneseq
        %v2384 = vshrl.u32 %v2383, 7
        %v2385 = vsub.s32 %v2382, %v2384
        %v2386 = vrot.slane %v2125, %v2385
        %v2388 = vunpack.c.l.s4 1983009808
        %v2389 = vunpack.c.0.s8 %v2388
        %v2390 = vlaneseq
        %v2391 = vshrl.u32 %v2390, 7
        %v2392 = vsub.s32 %v2389, %v2391
        %v2393 = vrot.slane %v2379, %v2392
        %v2394 = vcombine.high %v2386, %v2386
        %v2395 = vcombine.high %v2393, %v2393
        %v2396 = vcombine.high %v2126, %v2126
        %v2398 = vunpack.c.l.s4 1983009808
        %v2399 = vunpack.c.0.s8 %v2398
        %v2400 = vlaneseq
        %v2401 = vshrl.u32 %v2400, 7
        %v2402 = vsub.s32 %v2399, %v2401
        %v2403 = vrot.slane %v2126, %v2402
        %v2405 = vunpack.c.l.s4 1983009808
        %v2406 = vunpack.c.0.s8 %v2405
        %v2407 = vlaneseq
        %v2408 = vshrl.u32 %v2407, 7
        %v2409 = vsub.s32 %v2406, %v2408
        %v2410 = vrot.slane %v2396, %v2409
        %v2411 = vcombine.high %v2403, %v2403
        %v2412 = vcombine.high %v2410, %v2410
        %v2413 = vcombine.high %v2127, %v2127
        %v2415 = vunpack.c.l.s4 1983009808
        %v2416 = vunpack.c.0.s8 %v2415
        %v2417 = vlaneseq
        %v2418 = vshrl.u32 %v2417, 7
        %v2419 = vsub.s32 %v2416, %v2418
        %v2420 = vrot.slane %v2127, %v2419
        %v2422 = vunpack.c.l.s4 1983009808
        %v2423 = vunpack.c.0.s8 %v2422
        %v2424 = vlaneseq
        %v2425 = vshrl.u32 %v2424, 7
        %v2426 = vsub.s32 %v2423, %v2425
        %v2427 = vrot.slane %v2413, %v2426
        %v2428 = vcombine.high %v2420, %v2420
        %v2429 = vcombine.high %v2427, %v2427
        %v2430 = vcombine.high %v2128, %v2128
        %v2432 = vunpack.c.l.s4 1983009808
        %v2433 = vunpack.c.0.s8 %v2432
        %v2434 = vlaneseq
        %v2435 = vshrl.u32 %v2434, 7
        %v2436 = vsub.s32 %v2433, %v2435
        %v2437 = vrot.slane %v2128, %v2436
        %v2439 = vunpack.c.l.s4 1983009808
        %v2440 = vunpack.c.0.s8 %v2439
        %v2441 = vlaneseq
        %v2442 = vshrl.u32 %v2441, 7
        %v2443 = vsub.s32 %v2440, %v2442
        %v2444 = vrot.slane %v2430, %v2443
        %v2445 = vcombine.high %v2437, %v2437
        %v2446 = vcombine.high %v2444, %v2444
        %v2447 = vcombine.high %v2129, %v2129
        %v2449 = vunpack.c.l.s4 1983009808
        %v2450 = vunpack.c.0.s8 %v2449
        %v2451 = vlaneseq
        %v2452 = vshrl.u32 %v2451, 7
        %v2453 = vsub.s32 %v2450, %v2452
        %v2454 = vrot.slane %v2129, %v2453
        %v2456 = vunpack.c.l.s4 1983009808
        %v2457 = vunpack.c.0.s8 %v2456
        %v2458 = vlaneseq
        %v2459 = vshrl.u32 %v2458, 7
        %v2460 = vsub.s32 %v2457, %v2459
        %v2461 = vrot.slane %v2447, %v2460
        %v2462 = vcombine.high %v2454, %v2454
        %v2463 = vcombine.high %v2461, %v2461
        %v2464 = vcombine.high %v2130, %v2130
        %v2466 = vunpack.c.l.s4 1983009808
        %v2467 = vunpack.c.0.s8 %v2466
        %v2468 = vlaneseq
        %v2469 = vshrl.u32 %v2468, 7
        %v2470 = vsub.s32 %v2467, %v2469
        %v2471 = vrot.slane %v2130, %v2470
        %v2473 = vunpack.c.l.s4 1983009808
        %v2474 = vunpack.c.0.s8 %v2473
        %v2475 = vlaneseq
        %v2476 = vshrl.u32 %v2475, 7
        %v2477 = vsub.s32 %v2474, %v2476
        %v2478 = vrot.slane %v2464, %v2477
        %v2479 = vcombine.high %v2471, %v2471
        %v2480 = vcombine.high %v2478, %v2478
        %v2481 = vcombine.high %v2131, %v2131
        %v2483 = vunpack.c.l.s4 1983009808
        %v2484 = vunpack.c.0.s8 %v2483
        %v2485 = vlaneseq
        %v2486 = vshrl.u32 %v2485, 7
        %v2487 = vsub.s32 %v2484, %v2486
        %v2488 = vrot.slane %v2131, %v2487
        %v2490 = vunpack.c.l.s4 1983009808
        %v2491 = vunpack.c.0.s8 %v2490
        %v2492 = vlaneseq
        %v2493 = vshrl.u32 %v2492, 7
        %v2494 = vsub.s32 %v2491, %v2493
        %v2495 = vrot.slane %v2481, %v2494
        %v2496 = vcombine.high %v2488, %v2488
        %v2497 = vcombine.high %v2495, %v2495
        %v2498 = vcombine.high %v2132, %v2132
        %v2500 = vunpack.c.l.s4 1983009808
        %v2501 = vunpack.c.0.s8 %v2500
        %v2502 = vlaneseq
        %v2503 = vshrl.u32 %v2502, 7
        %v2504 = vsub.s32 %v2501, %v2503
        %v2505 = vrot.slane %v2132, %v2504
        %v2507 = vunpack.c.l.s4 1983009808
        %v2508 = vunpack.c.0.s8 %v2507
        %v2509 = vlaneseq
        %v2510 = vshrl.u32 %v2509, 7
        %v2511 = vsub.s32 %v2508, %v2510
        %v2512 = vrot.slane %v2498, %v2511
        %v2513 = vcombine.high %v2505, %v2505
        %v2514 = vcombine.high %v2512, %v2512
        %v2515 = vcombine.high %v2133, %v2133
        %v2517 = vunpack.c.l.s4 1983009808
        %v2518 = vunpack.c.0.s8 %v2517
        %v2519 = vlaneseq
        %v2520 = vshrl.u32 %v2519, 7
        %v2521 = vsub.s32 %v2518, %v2520
        %v2522 = vrot.slane %v2133, %v2521
        %v2524 = vunpack.c.l.s4 1983009808
        %v2525 = vunpack.c.0.s8 %v2524
        %v2526 = vlaneseq
        %v2527 = vshrl.u32 %v2526, 7
        %v2528 = vsub.s32 %v2525, %v2527
        %v2529 = vrot.slane %v2515, %v2528
        %v2530 = vcombine.high %v2522, %v2522
        %v2531 = vcombine.high %v2529, %v2529
        %v2532 = vcombine.high %v2134, %v2134
        %v2534 = vunpack.c.l.s4 1983009808
        %v2535 = vunpack.c.0.s8 %v2534
        %v2536 = vlaneseq
        %v2537 = vshrl.u32 %v2536, 7
        %v2538 = vsub.s32 %v2535, %v2537
        %v2539 = vrot.slane %v2134, %v2538
        %v2541 = vunpack.c.l.s4 1983009808
        %v2542 = vunpack.c.0.s8 %v2541
        %v2543 = vlaneseq
        %v2544 = vshrl.u32 %v2543, 7
        %v2545 = vsub.s32 %v2542, %v2544
        %v2546 = vrot.slane %v2532, %v2545
        %v2547 = vcombine.high %v2539, %v2539
        %v2548 = vcombine.high %v2546, %v2546
        %v2549 = vcombine.high %v2135, %v2135
        %v2551 = vunpack.c.l.s4 1983009808
        %v2552 = vunpack.c.0.s8 %v2551
        %v2553 = vlaneseq
        %v2554 = vshrl.u32 %v2553, 7
        %v2555 = vsub.s32 %v2552, %v2554
        %v2556 = vrot.slane %v2135, %v2555
        %v2558 = vunpack.c.l.s4 1983009808
        %v2559 = vunpack.c.0.s8 %v2558
        %v2560 = vlaneseq
        %v2561 = vshrl.u32 %v2560, 7
        %v2562 = vsub.s32 %v2559, %v2561
        %v2563 = vrot.slane %v2549, %v2562
        %v2564 = vcombine.high %v2556, %v2556
        %v2565 = vcombine.high %v2563, %v2563
        %v2566 = vcombine.high %v2136, %v2136
        %v2568 = vunpack.c.l.s4 1983009808
        %v2569 = vunpack.c.0.s8 %v2568
        %v2570 = vlaneseq
        %v2571 = vshrl.u32 %v2570, 7
        %v2572 = vsub.s32 %v2569, %v2571
        %v2573 = vrot.slane %v2136, %v2572
        %v2575 = vunpack.c.l.s4 1983009808
        %v2576 = vunpack.c.0.s8 %v2575
        %v2577 = vlaneseq
        %v2578 = vshrl.u32 %v2577, 7
        %v2579 = vsub.s32 %v2576, %v2578
        %v2580 = vrot.slane %v2566, %v2579
        %v2581 = vcombine.high %v2573, %v2573
        %v2582 = vcombine.high %v2580, %v2580
        %v2583 = vcombine.high %v2137, %v2137
        %v2585 = vunpack.c.l.s4 1983009808
        %v2586 = vunpack.c.0.s8 %v2585
        %v2587 = vlaneseq
        %v2588 = vshrl.u32 %v2587, 7
        %v2589 = vsub.s32 %v2586, %v2588
        %v2590 = vrot.slane %v2137, %v2589
        %v2592 = vunpack.c.l.s4 1983009808
        %v2593 = vunpack.c.0.s8 %v2592
        %v2594 = vlaneseq
        %v2595 = vshrl.u32 %v2594, 7
        %v2596 = vsub.s32 %v2593, %v2595
        %v2597 = vrot.slane %v2583, %v2596
        %v2598 = vcombine.high %v2590, %v2590
        %v2599 = vcombine.high %v2597, %v2597
        %v2600 = vcombine.high %v2138, %v2138
        %v2602 = vunpack.c.l.s4 1983009808
        %v2603 = vunpack.c.0.s8 %v2602
        %v2604 = vlaneseq
        %v2605 = vshrl.u32 %v2604, 7
        %v2606 = vsub.s32 %v2603, %v2605
        %v2607 = vrot.slane %v2138, %v2606
        %v2609 = vunpack.c.l.s4 1983009808
        %v2610 = vunpack.c.0.s8 %v2609
        %v2611 = vlaneseq
        %v2612 = vshrl.u32 %v2611, 7
        %v2613 = vsub.s32 %v2610, %v2612
        %v2614 = vrot.slane %v2600, %v2613
        %v2615 = vcombine.high %v2607, %v2607
        %v2616 = vcombine.high %v2614, %v2614
        %v2617 = vcombine.high %v2139, %v2139
        %v2619 = vunpack.c.l.s4 1983009808
        %v2620 = vunpack.c.0.s8 %v2619
        %v2621 = vlaneseq
        %v2622 = vshrl.u32 %v2621, 7
        %v2623 = vsub.s32 %v2620, %v2622
        %v2624 = vrot.slane %v2139, %v2623
        %v2626 = vunpack.c.l.s4 1983009808
        %v2627 = vunpack.c.0.s8 %v2626
        %v2628 = vlaneseq
        %v2629 = vshrl.u32 %v2628, 7
        %v2630 = vsub.s32 %v2627, %v2629
        %v2631 = vrot.slane %v2617, %v2630
        %v2632 = vcombine.high %v2624, %v2624
        %v2633 = vcombine.high %v2631, %v2631
        %v2634 = vcombine.low %v2216, %v2224
        %v2635 = vcombine.low %v2223, %v2225
        %v2637 = vunpack.c.l.s4 1983009808
        %v2638 = vunpack.c.0.s8 %v2637
        %v2639 = vlaneseq
        %v2640 = vshrl.u32 %v2639, 7
        %v2641 = vsub.s32 %v2638, %v2640
        %v2642 = vrot.slane %v2634, %v2641
        %v2644 = vunpack.c.l.s4 1983009808
        %v2645 = vunpack.c.0.s8 %v2644
        %v2646 = vlaneseq
        %v2647 = vshrl.u32 %v2646, 7
        %v2648 = vsub.s32 %v2645, %v2647
        %v2649 = vrot.slane %v2635, %v2648
        %v2650 = vcombine.low %v2642, %v2649
        %v2651 = vcombine.low %v2233, %v2241
        %v2652 = vcombine.low %v2240, %v2242
        %v2654 = vunpack.c.l.s4 1983009808
        %v2655 = vunpack.c.0.s8 %v2654
        %v2656 = vlaneseq
        %v2657 = vshrl.u32 %v2656, 7
        %v2658 = vsub.s32 %v2655, %v2657
        %v2659 = vrot.slane %v2651, %v2658
        %v2661 = vunpack.c.l.s4 1983009808
        %v2662 = vunpack.c.0.s8 %v2661
        %v2663 = vlaneseq
        %v2664 = vshrl.u32 %v2663, 7
        %v2665 = vsub.s32 %v2662, %v2664
        %v2666 = vrot.slane %v2652, %v2665
        %v2667 = vcombine.low %v2659, %v2666
        %v2668 = vcombine.low %v2250, %v2258
        %v2669 = vcombine.low %v2257, %v2259
        %v2671 = vunpack.c.l.s4 1983009808
        %v2672 = vunpack.c.0.s8 %v2671
        %v2673 = vlaneseq
        %v2674 = vshrl.u32 %v2673, 7
        %v2675 = vsub.s32 %v2672, %v2674
        %v2676 = vrot.slane %v2668, %v2675
        %v2678 = vunpack.c.l.s4 1983009808
        %v2679 = vunpack.c.0.s8 %v2678
        %v2680 = vlaneseq
        %v2681 = vshrl.u32 %v2680, 7
        %v2682 = vsub.s32 %v2679, %v2681
        %v2683 = vrot.slane %v2669, %v2682
        %v2684 = vcombine.low %v2676, %v2683
        %v2685 = vcombine.low %v2267, %v2275
        %v2686 = vcombine.low %v2274, %v2276
        %v2688 = vunpack.c.l.s4 1983009808
        %v2689 = vunpack.c.0.s8 %v2688
        %v2690 = vlaneseq
        %v2691 = vshrl.u32 %v2690, 7
        %v2692 = vsub.s32 %v2689, %v2691
        %v2693 = vrot.slane %v2685, %v2692
        %v2695 = vunpack.c.l.s4 1983009808
        %v2696 = vunpack.c.0.s8 %v2695
        %v2697 = vlaneseq
        %v2698 = vshrl.u32 %v2697, 7
        %v2699 = vsub.s32 %v2696, %v2698
        %v2700 = vrot.slane %v2686, %v2699
        %v2701 = vcombine.low %v2693, %v2700
        %v2702 = vcombine.low %v2284, %v2292
        %v2703 = vcombine.low %v2291, %v2293
        %v2705 = vunpack.c.l.s4 1983009808
        %v2706 = vunpack.c.0.s8 %v2705
        %v2707 = vlaneseq
        %v2708 = vshrl.u32 %v2707, 7
        %v2709 = vsub.s32 %v2706, %v2708
        %v2710 = vrot.slane %v2702, %v2709
        %v2712 = vunpack.c.l.s4 1983009808
        %v2713 = vunpack.c.0.s8 %v2712
        %v2714 = vlaneseq
        %v2715 = vshrl.u32 %v2714, 7
        %v2716 = vsub.s32 %v2713, %v2715
        %v2717 = vrot.slane %v2703, %v2716
        %v2718 = vcombine.low %v2710, %v2717
        %v2719 = vcombine.low %v2301, %v2309
        %v2720 = vcombine.low %v2308, %v2310
        %v2722 = vunpack.c.l.s4 1983009808
        %v2723 = vunpack.c.0.s8 %v2722
        %v2724 = vlaneseq
        %v2725 = vshrl.u32 %v2724, 7
        %v2726 = vsub.s32 %v2723, %v2725
        %v2727 = vrot.slane %v2719, %v2726
        %v2729 = vunpack.c.l.s4 1983009808
        %v2730 = vunpack.c.0.s8 %v2729
        %v2731 = vlaneseq
        %v2732 = vshrl.u32 %v2731, 7
        %v2733 = vsub.s32 %v2730, %v2732
        %v2734 = vrot.slane %v2720, %v2733
        %v2735 = vcombine.low %v2727, %v2734
        %v2737 = vunpack.c.l.s4 1983009808
        %v2738 = vunpack.c.0.s8 %v2737
        %v2739 = vlaneseq
        %v2740 = vshrl.u32 %v2739, 7
        %v2741 = vsub.s32 %v2738, %v2740
        %v2742 = vrot.slane %v2318, %v2741
        %2750 = vrot.lane.b32.xlu0 %v2156, 64
        %v2751 = vpop.permute.xlu0 %2750
        %2752 = vrot.lane.b32.xlu0 %v2157, 64
        %v2753 = vpop.permute.xlu0 %2752
        %2754 = vrot.lane.b32.xlu0 %v2158, 64
        %v2755 = vpop.permute.xlu0 %2754
        %2756 = vrot.lane.b32.xlu0 %v2159, 64
        %v2757 = vpop.permute.xlu0 %2756
        %2758 = vrot.lane.b32.xlu0 %v2160, 64
        %v2759 = vpop.permute.xlu0 %2758
        %2760 = vrot.lane.b32.xlu0 %v2161, 64
        %v2761 = vpop.permute.xlu0 %2760
        %2762 = vrot.lane.b32.xlu0 %v2162, 64
        %v2763 = vpop.permute.xlu0 %2762
        %v2770 = vsel %vm1864, %v2650, 0
        %v2772 = vsel %vm1864, %v2667, 0
        %v2774 = vsel %vm1864, %v2684, 0
        %v2776 = vsel %vm1864, %v2701, 0
        %v2778 = vsel %vm1864, %v2718, 0
        %v2780 = vsel %vm1864, %v2735, 0
        %v2782 = vsel %vm1864, %v2742, 0
        %vm2784 = vcmask 1041408
        %v2785 = vsel %vm2784, %v2763, 0
        %2787 = vmatprep.subr.mxu0 0.0
        %2788 = vmatpush1.msra.mxu0 0.0
        %2789 = vmatprep.subr.mxu0 0.0
        %2790 = vmatpush1.msra.mxu0 0.0
        %2791 = vmatprep.subr.mxu0 0.0
        %2792 = vmatpush1.msra.mxu0 0.0
        %2793 = vmatprep.subr.mxu0 0.0
        %2794 = vmatpush1.msra.mxu0 0.0
        %2795 = vmatprep.subr.mxu0 0.0
        %2796 = vmatpush1.msra.mxu0 0.0
        %2797 = vmatprep.subr.mxu0 0.0
        %2798 = vmatpush1.msra.mxu0 0.0
        %2799 = vmatprep.subr.mxu0 0.0
        %2800 = vmatpush1.msra.mxu0 0.0
        %2801 = vmatprep.subr.mxu0 0.0
        %2802 = vmatpush1.msra.mxu0 0.0
        %2803 = vmatprep.subr.mxu0 0.0
        %2804 = vmatpush1.msra.mxu0 0.0
        %2805 = vmatprep.subr.mxu0 0.0
        %2806 = vmatpush1.msra.mxu0 %v2785
        %2807 = vmatprep.subr.mxu0 0.0
        %2808 = vmatpush1.msra.mxu0 %v2761
        %2809 = vmatprep.subr.mxu0 0.0
        %2810 = vmatpush1.msra.mxu0 %v2759
        %2811 = vmatprep.subr.mxu0 0.0
        %2812 = vmatpush1.msra.mxu0 %v2757
        %2813 = vmatprep.subr.mxu0 0.0
        %2814 = vmatpush1.msra.mxu0 %v2755
        %2815 = vmatprep.subr.mxu0 0.0
        %2816 = vmatpush1.msra.mxu0 %v2753
        %2817 = vmatprep.subr.mxu0 0.0
        %2818 = vmatpush1.msra.mxu0 %v2751
        %2819 = vmatprep.subr.mxu0 0.0
        %2820 = vmatpush2.msra.mxu0 0.0
        %2821 = vmatprep.subr.mxu0 0.0
        %2822 = vmatpush2.msra.mxu0 0.0
        %2823 = vmatprep.subr.mxu0 0.0
        %2824 = vmatpush2.msra.mxu0 0.0
        %2825 = vmatprep.subr.mxu0 0.0
        %2826 = vmatpush2.msra.mxu0 0.0
        %2827 = vmatprep.subr.mxu0 0.0
        %2828 = vmatpush2.msra.mxu0 0.0
        %2829 = vmatprep.subr.mxu0 0.0
        %2830 = vmatpush2.msra.mxu0 0.0
        %2831 = vmatprep.subr.mxu0 0.0
        %2832 = vmatpush2.msra.mxu0 0.0
        %2833 = vmatprep.subr.mxu0 0.0
        %2834 = vmatpush2.msra.mxu0 0.0
        %2835 = vmatprep.subr.mxu0 0.0
        %2836 = vmatpush2.msra.mxu0 0.0
        %2837 = vmatprep.subr.mxu0 0.0
        %2838 = vmatpush2.msra.mxu0 0.0
        %2839 = vmatprep.subr.mxu0 0.0
        %2840 = vmatpush2.msra.mxu0 0.0
        %2841 = vmatprep.subr.mxu0 0.0
        %2842 = vmatpush2.msra.mxu0 0.0
        %2843 = vmatprep.subr.mxu0 0.0
        %2844 = vmatpush2.msra.mxu0 0.0
        %2845 = vmatprep.subr.mxu0 0.0
        %2846 = vmatpush2.msra.mxu0 0.0
        %2847 = vmatprep.subr.mxu0 0.0
        %2848 = vmatpush2.msra.mxu0 0.0
        %2849 = vmatprep.subr.mxu0 0.0
        %2850 = vmatpush2.msra.mxu0 0.0
        %2851 = vmatprep.mubr.f32.mxu0 0.0
        %2852 = vmatmul.mubr.f32.gmra.mxu0 %v2770
        %v2853 = vpop.f32.mrf.mxu0
        %v2854 = vadd.f32 0.0, %v2853
        %v2855 = vpop.f32.mrf.mxu0
        %2856 = vmatprep.mubr.f32.mxu0 0.0
        %2857 = vmatmul.mubr.f32.gmra.mxu0 %v2772
        %v2858 = vpop.f32.mrf.mxu0
        %v2859 = vadd.f32 0.0, %v2858
        %v2860 = vpop.f32.mrf.mxu0
        %2861 = vmatprep.mubr.f32.mxu0 0.0
        %2862 = vmatmul.mubr.f32.gmra.mxu0 %v2774
        %v2863 = vpop.f32.mrf.mxu0
        %v2864 = vadd.f32 0.0, %v2863
        %v2865 = vpop.f32.mrf.mxu0
        %2866 = vmatprep.mubr.f32.mxu0 0.0
        %2867 = vmatmul.mubr.f32.gmra.mxu0 %v2776
        %v2868 = vpop.f32.mrf.mxu0
        %v2869 = vadd.f32 0.0, %v2868
        %v2870 = vpop.f32.mrf.mxu0
        %2871 = vmatprep.mubr.f32.mxu0 0.0
        %2872 = vmatmul.mubr.f32.gmra.mxu0 %v2778
        %v2873 = vpop.f32.mrf.mxu0
        %v2874 = vadd.f32 0.0, %v2873
        %v2875 = vpop.f32.mrf.mxu0
        %2876 = vmatprep.mubr.f32.mxu0 0.0
        %2877 = vmatmul.mubr.f32.gmra.mxu0 %v2780
        %v2878 = vpop.f32.mrf.mxu0
        %v2879 = vadd.f32 0.0, %v2878
        %v2880 = vpop.f32.mrf.mxu0
        %2881 = vmatprep.mubr.f32.mxu0 0.0
        %2882 = vmatmul.mubr.f32.gmra.mxu0 %v2782
        %v2883 = vpop.f32.mrf.mxu0
        %v2884 = vadd.f32 0.0, %v2883
        %v2885 = vpop.f32.mrf.mxu0
        %2886 = vdwg.mxu0
        %v2887 = vcombine.low %v2326, %v2325
        %v2888 = vcombine.low %v2327, %v2335
        %v2890 = vunpack.c.l.s4 1983009808
        %v2891 = vunpack.c.0.s8 %v2890
        %v2892 = vlaneseq
        %v2893 = vshrl.u32 %v2892, 7
        %v2894 = vsub.s32 %v2891, %v2893
        %v2895 = vrot.slane %v2887, %v2894
        %v2897 = vunpack.c.l.s4 1983009808
        %v2898 = vunpack.c.0.s8 %v2897
        %v2899 = vlaneseq
        %v2900 = vshrl.u32 %v2899, 7
        %v2901 = vsub.s32 %v2898, %v2900
        %v2902 = vrot.slane %v2888, %v2901
        %v2903 = vcombine.low %v2895, %v2902
        %v2904 = vcombine.low %v2343, %v2342
        %v2905 = vcombine.low %v2344, %v2352
        %v2907 = vunpack.c.l.s4 1983009808
        %v2908 = vunpack.c.0.s8 %v2907
        %v2909 = vlaneseq
        %v2910 = vshrl.u32 %v2909, 7
        %v2911 = vsub.s32 %v2908, %v2910
        %v2912 = vrot.slane %v2904, %v2911
        %v2914 = vunpack.c.l.s4 1983009808
        %v2915 = vunpack.c.0.s8 %v2914
        %v2916 = vlaneseq
        %v2917 = vshrl.u32 %v2916, 7
        %v2918 = vsub.s32 %v2915, %v2917
        %v2919 = vrot.slane %v2905, %v2918
        %v2920 = vcombine.low %v2912, %v2919
        %v2921 = vcombine.low %v2360, %v2359
        %v2922 = vcombine.low %v2361, %v2369
        %v2924 = vunpack.c.l.s4 1983009808
        %v2925 = vunpack.c.0.s8 %v2924
        %v2926 = vlaneseq
        %v2927 = vshrl.u32 %v2926, 7
        %v2928 = vsub.s32 %v2925, %v2927
        %v2929 = vrot.slane %v2921, %v2928
        %v2931 = vunpack.c.l.s4 1983009808
        %v2932 = vunpack.c.0.s8 %v2931
        %v2933 = vlaneseq
        %v2934 = vshrl.u32 %v2933, 7
        %v2935 = vsub.s32 %v2932, %v2934
        %v2936 = vrot.slane %v2922, %v2935
        %v2937 = vcombine.low %v2929, %v2936
        %v2938 = vcombine.low %v2377, %v2376
        %v2939 = vcombine.low %v2378, %v2386
        %v2941 = vunpack.c.l.s4 1983009808
        %v2942 = vunpack.c.0.s8 %v2941
        %v2943 = vlaneseq
        %v2944 = vshrl.u32 %v2943, 7
        %v2945 = vsub.s32 %v2942, %v2944
        %v2946 = vrot.slane %v2938, %v2945
        %v2948 = vunpack.c.l.s4 1983009808
        %v2949 = vunpack.c.0.s8 %v2948
        %v2950 = vlaneseq
        %v2951 = vshrl.u32 %v2950, 7
        %v2952 = vsub.s32 %v2949, %v2951
        %v2953 = vrot.slane %v2939, %v2952
        %v2954 = vcombine.low %v2946, %v2953
        %v2955 = vcombine.low %v2394, %v2393
        %v2956 = vcombine.low %v2395, %v2403
        %v2958 = vunpack.c.l.s4 1983009808
        %v2959 = vunpack.c.0.s8 %v2958
        %v2960 = vlaneseq
        %v2961 = vshrl.u32 %v2960, 7
        %v2962 = vsub.s32 %v2959, %v2961
        %v2963 = vrot.slane %v2955, %v2962
        %v2965 = vunpack.c.l.s4 1983009808
        %v2966 = vunpack.c.0.s8 %v2965
        %v2967 = vlaneseq
        %v2968 = vshrl.u32 %v2967, 7
        %v2969 = vsub.s32 %v2966, %v2968
        %v2970 = vrot.slane %v2956, %v2969
        %v2971 = vcombine.low %v2963, %v2970
        %v2972 = vcombine.low %v2411, %v2410
        %v2973 = vcombine.low %v2412, %v2420
        %v2975 = vunpack.c.l.s4 1983009808
        %v2976 = vunpack.c.0.s8 %v2975
        %v2977 = vlaneseq
        %v2978 = vshrl.u32 %v2977, 7
        %v2979 = vsub.s32 %v2976, %v2978
        %v2980 = vrot.slane %v2972, %v2979
        %v2982 = vunpack.c.l.s4 1983009808
        %v2983 = vunpack.c.0.s8 %v2982
        %v2984 = vlaneseq
        %v2985 = vshrl.u32 %v2984, 7
        %v2986 = vsub.s32 %v2983, %v2985
        %v2987 = vrot.slane %v2973, %v2986
        %v2988 = vcombine.low %v2980, %v2987
        %v2990 = vunpack.c.l.s4 1983009808
        %v2991 = vunpack.c.0.s8 %v2990
        %v2992 = vlaneseq
        %v2993 = vshrl.u32 %v2992, 7
        %v2994 = vsub.s32 %v2991, %v2993
        %v2995 = vrot.slane %v2428, %v2994
        %3003 = vrot.lane.b32.xlu0 %v2163, 64
        %v3004 = vpop.permute.xlu0 %3003
        %3005 = vrot.lane.b32.xlu0 %v2164, 64
        %v3006 = vpop.permute.xlu0 %3005
        %3007 = vrot.lane.b32.xlu0 %v2165, 64
        %v3008 = vpop.permute.xlu0 %3007
        %3009 = vrot.lane.b32.xlu0 %v2166, 64
        %v3010 = vpop.permute.xlu0 %3009
        %3011 = vrot.lane.b32.xlu0 %v2167, 64
        %v3012 = vpop.permute.xlu0 %3011
        %3013 = vrot.lane.b32.xlu0 %v2168, 64
        %v3014 = vpop.permute.xlu0 %3013
        %3015 = vrot.lane.b32.xlu0 %v2169, 64
        %v3016 = vpop.permute.xlu0 %3015
        %v3023 = vsel %vm1864, %v2903, 0
        %v3025 = vsel %vm1864, %v2920, 0
        %v3027 = vsel %vm1864, %v2937, 0
        %v3029 = vsel %vm1864, %v2954, 0
        %v3031 = vsel %vm1864, %v2971, 0
        %v3033 = vsel %vm1864, %v2988, 0
        %v3035 = vsel %vm1864, %v2995, 0
        %v3037 = vsel %vm2784, %v3016, 0
        %3039 = vmatprep.subr.mxu0 0.0
        %3040 = vmatpush1.msra.mxu0 0.0
        %3041 = vmatprep.subr.mxu0 0.0
        %3042 = vmatpush1.msra.mxu0 0.0
        %3043 = vmatprep.subr.mxu0 0.0
        %3044 = vmatpush1.msra.mxu0 0.0
        %3045 = vmatprep.subr.mxu0 0.0
        %3046 = vmatpush1.msra.mxu0 0.0
        %3047 = vmatprep.subr.mxu0 0.0
        %3048 = vmatpush1.msra.mxu0 0.0
        %3049 = vmatprep.subr.mxu0 0.0
        %3050 = vmatpush1.msra.mxu0 0.0
        %3051 = vmatprep.subr.mxu0 0.0
        %3052 = vmatpush1.msra.mxu0 0.0
        %3053 = vmatprep.subr.mxu0 0.0
        %3054 = vmatpush1.msra.mxu0 0.0
        %3055 = vmatprep.subr.mxu0 0.0
        %3056 = vmatpush1.msra.mxu0 0.0
        %3057 = vmatprep.subr.mxu0 0.0
        %3058 = vmatpush1.msra.mxu0 %v3037
        %3059 = vmatprep.subr.mxu0 0.0
        %3060 = vmatpush1.msra.mxu0 %v3014
        %3061 = vmatprep.subr.mxu0 0.0
        %3062 = vmatpush1.msra.mxu0 %v3012
        %3063 = vmatprep.subr.mxu0 0.0
        %3064 = vmatpush1.msra.mxu0 %v3010
        %3065 = vmatprep.subr.mxu0 0.0
        %3066 = vmatpush1.msra.mxu0 %v3008
        %3067 = vmatprep.subr.mxu0 0.0
        %3068 = vmatpush1.msra.mxu0 %v3006
        %3069 = vmatprep.subr.mxu0 0.0
        %3070 = vmatpush1.msra.mxu0 %v3004
        %3071 = vmatprep.subr.mxu0 0.0
        %3072 = vmatpush2.msra.mxu0 0.0
        %3073 = vmatprep.subr.mxu0 0.0
        %3074 = vmatpush2.msra.mxu0 0.0
        %3075 = vmatprep.subr.mxu0 0.0
        %3076 = vmatpush2.msra.mxu0 0.0
        %3077 = vmatprep.subr.mxu0 0.0
        %3078 = vmatpush2.msra.mxu0 0.0
        %3079 = vmatprep.subr.mxu0 0.0
        %3080 = vmatpush2.msra.mxu0 0.0
        %3081 = vmatprep.subr.mxu0 0.0
        %3082 = vmatpush2.msra.mxu0 0.0
        %3083 = vmatprep.subr.mxu0 0.0
        %3084 = vmatpush2.msra.mxu0 0.0
        %3085 = vmatprep.subr.mxu0 0.0
        %3086 = vmatpush2.msra.mxu0 0.0
        %3087 = vmatprep.subr.mxu0 0.0
        %3088 = vmatpush2.msra.mxu0 0.0
        %3089 = vmatprep.subr.mxu0 0.0
        %3090 = vmatpush2.msra.mxu0 0.0
        %3091 = vmatprep.subr.mxu0 0.0
        %3092 = vmatpush2.msra.mxu0 0.0
        %3093 = vmatprep.subr.mxu0 0.0
        %3094 = vmatpush2.msra.mxu0 0.0
        %3095 = vmatprep.subr.mxu0 0.0
        %3096 = vmatpush2.msra.mxu0 0.0
        %3097 = vmatprep.subr.mxu0 0.0
        %3098 = vmatpush2.msra.mxu0 0.0
        %3099 = vmatprep.subr.mxu0 0.0
        %3100 = vmatpush2.msra.mxu0 0.0
        %3101 = vmatprep.subr.mxu0 0.0
        %3102 = vmatpush2.msra.mxu0 0.0
        %3103 = vmatprep.mubr.f32.mxu0 0.0
        %3104 = vmatmul.mubr.f32.gmra.mxu0 %v3023
        %v3105 = vpop.f32.mrf.mxu0
        %v3106 = vadd.f32 0.0, %v3105
        %v3107 = vpop.f32.mrf.mxu0
        %3108 = vmatprep.mubr.f32.mxu0 0.0
        %3109 = vmatmul.mubr.f32.gmra.mxu0 %v3025
        %v3110 = vpop.f32.mrf.mxu0
        %v3111 = vadd.f32 0.0, %v3110
        %v3112 = vpop.f32.mrf.mxu0
        %3113 = vmatprep.mubr.f32.mxu0 0.0
        %3114 = vmatmul.mubr.f32.gmra.mxu0 %v3027
        %v3115 = vpop.f32.mrf.mxu0
        %v3116 = vadd.f32 0.0, %v3115
        %v3117 = vpop.f32.mrf.mxu0
        %3118 = vmatprep.mubr.f32.mxu0 0.0
        %3119 = vmatmul.mubr.f32.gmra.mxu0 %v3029
        %v3120 = vpop.f32.mrf.mxu0
        %v3121 = vadd.f32 0.0, %v3120
        %v3122 = vpop.f32.mrf.mxu0
        %3123 = vmatprep.mubr.f32.mxu0 0.0
        %3124 = vmatmul.mubr.f32.gmra.mxu0 %v3031
        %v3125 = vpop.f32.mrf.mxu0
        %v3126 = vadd.f32 0.0, %v3125
        %v3127 = vpop.f32.mrf.mxu0
        %3128 = vmatprep.mubr.f32.mxu0 0.0
        %3129 = vmatmul.mubr.f32.gmra.mxu0 %v3033
        %v3130 = vpop.f32.mrf.mxu0
        %v3131 = vadd.f32 0.0, %v3130
        %v3132 = vpop.f32.mrf.mxu0
        %3133 = vmatprep.mubr.f32.mxu0 0.0
        %3134 = vmatmul.mubr.f32.gmra.mxu0 %v3035
        %v3135 = vpop.f32.mrf.mxu0
        %v3136 = vadd.f32 0.0, %v3135
        %v3137 = vpop.f32.mrf.mxu0
        %3138 = vdwg.mxu0
        %v3139 = vcombine.low %v2427, %v2429
        %v3140 = vcombine.low %v2437, %v2445
        %v3142 = vunpack.c.l.s4 1983009808
        %v3143 = vunpack.c.0.s8 %v3142
        %v3144 = vlaneseq
        %v3145 = vshrl.u32 %v3144, 7
        %v3146 = vsub.s32 %v3143, %v3145
        %v3147 = vrot.slane %v3139, %v3146
        %v3149 = vunpack.c.l.s4 1983009808
        %v3150 = vunpack.c.0.s8 %v3149
        %v3151 = vlaneseq
        %v3152 = vshrl.u32 %v3151, 7
        %v3153 = vsub.s32 %v3150, %v3152
        %v3154 = vrot.slane %v3140, %v3153
        %v3155 = vcombine.low %v3147, %v3154
        %v3156 = vcombine.low %v2444, %v2446
        %v3157 = vcombine.low %v2454, %v2462
        %v3159 = vunpack.c.l.s4 1983009808
        %v3160 = vunpack.c.0.s8 %v3159
        %v3161 = vlaneseq
        %v3162 = vshrl.u32 %v3161, 7
        %v3163 = vsub.s32 %v3160, %v3162
        %v3164 = vrot.slane %v3156, %v3163
        %v3166 = vunpack.c.l.s4 1983009808
        %v3167 = vunpack.c.0.s8 %v3166
        %v3168 = vlaneseq
        %v3169 = vshrl.u32 %v3168, 7
        %v3170 = vsub.s32 %v3167, %v3169
        %v3171 = vrot.slane %v3157, %v3170
        %v3172 = vcombine.low %v3164, %v3171
        %v3173 = vcombine.low %v2461, %v2463
        %v3174 = vcombine.low %v2471, %v2479
        %v3176 = vunpack.c.l.s4 1983009808
        %v3177 = vunpack.c.0.s8 %v3176
        %v3178 = vlaneseq
        %v3179 = vshrl.u32 %v3178, 7
        %v3180 = vsub.s32 %v3177, %v3179
        %v3181 = vrot.slane %v3173, %v3180
        %v3183 = vunpack.c.l.s4 1983009808
        %v3184 = vunpack.c.0.s8 %v3183
        %v3185 = vlaneseq
        %v3186 = vshrl.u32 %v3185, 7
        %v3187 = vsub.s32 %v3184, %v3186
        %v3188 = vrot.slane %v3174, %v3187
        %v3189 = vcombine.low %v3181, %v3188
        %v3190 = vcombine.low %v2478, %v2480
        %v3191 = vcombine.low %v2488, %v2496
        %v3193 = vunpack.c.l.s4 1983009808
        %v3194 = vunpack.c.0.s8 %v3193
        %v3195 = vlaneseq
        %v3196 = vshrl.u32 %v3195, 7
        %v3197 = vsub.s32 %v3194, %v3196
        %v3198 = vrot.slane %v3190, %v3197
        %v3200 = vunpack.c.l.s4 1983009808
        %v3201 = vunpack.c.0.s8 %v3200
        %v3202 = vlaneseq
        %v3203 = vshrl.u32 %v3202, 7
        %v3204 = vsub.s32 %v3201, %v3203
        %v3205 = vrot.slane %v3191, %v3204
        %v3206 = vcombine.low %v3198, %v3205
        %v3207 = vcombine.low %v2495, %v2497
        %v3208 = vcombine.low %v2505, %v2513
        %v3210 = vunpack.c.l.s4 1983009808
        %v3211 = vunpack.c.0.s8 %v3210
        %v3212 = vlaneseq
        %v3213 = vshrl.u32 %v3212, 7
        %v3214 = vsub.s32 %v3211, %v3213
        %v3215 = vrot.slane %v3207, %v3214
        %v3217 = vunpack.c.l.s4 1983009808
        %v3218 = vunpack.c.0.s8 %v3217
        %v3219 = vlaneseq
        %v3220 = vshrl.u32 %v3219, 7
        %v3221 = vsub.s32 %v3218, %v3220
        %v3222 = vrot.slane %v3208, %v3221
        %v3223 = vcombine.low %v3215, %v3222
        %v3224 = vcombine.low %v2512, %v2514
        %v3225 = vcombine.low %v2522, %v2530
        %v3227 = vunpack.c.l.s4 1983009808
        %v3228 = vunpack.c.0.s8 %v3227
        %v3229 = vlaneseq
        %v3230 = vshrl.u32 %v3229, 7
        %v3231 = vsub.s32 %v3228, %v3230
        %v3232 = vrot.slane %v3224, %v3231
        %v3234 = vunpack.c.l.s4 1983009808
        %v3235 = vunpack.c.0.s8 %v3234
        %v3236 = vlaneseq
        %v3237 = vshrl.u32 %v3236, 7
        %v3238 = vsub.s32 %v3235, %v3237
        %v3239 = vrot.slane %v3225, %v3238
        %v3240 = vcombine.low %v3232, %v3239
        %v3242 = vunpack.c.l.s4 1983009808
        %v3243 = vunpack.c.0.s8 %v3242
        %v3244 = vlaneseq
        %v3245 = vshrl.u32 %v3244, 7
        %v3246 = vsub.s32 %v3243, %v3245
        %v3247 = vrot.slane %v2529, %v3246
        %3255 = vrot.lane.b32.xlu0 %v2170, 64
        %v3256 = vpop.permute.xlu0 %3255
        %3257 = vrot.lane.b32.xlu0 %v2171, 64
        %v3258 = vpop.permute.xlu0 %3257
        %3259 = vrot.lane.b32.xlu0 %v2172, 64
        %v3260 = vpop.permute.xlu0 %3259
        %3261 = vrot.lane.b32.xlu0 %v2173, 64
        %v3262 = vpop.permute.xlu0 %3261
        %3263 = vrot.lane.b32.xlu0 %v2174, 64
        %v3264 = vpop.permute.xlu0 %3263
        %3265 = vrot.lane.b32.xlu0 %v2175, 64
        %v3266 = vpop.permute.xlu0 %3265
        %3267 = vrot.lane.b32.xlu0 %v2176, 64
        %v3268 = vpop.permute.xlu0 %3267
        %v3275 = vsel %vm1864, %v3155, 0
        %v3277 = vsel %vm1864, %v3172, 0
        %v3279 = vsel %vm1864, %v3189, 0
        %v3281 = vsel %vm1864, %v3206, 0
        %v3283 = vsel %vm1864, %v3223, 0
        %v3285 = vsel %vm1864, %v3240, 0
        %v3287 = vsel %vm1864, %v3247, 0
        %v3289 = vsel %vm2784, %v3268, 0
        %3291 = vmatprep.subr.mxu0 0.0
        %3292 = vmatpush1.msra.mxu0 0.0
        %3293 = vmatprep.subr.mxu0 0.0
        %3294 = vmatpush1.msra.mxu0 0.0
        %3295 = vmatprep.subr.mxu0 0.0
        %3296 = vmatpush1.msra.mxu0 0.0
        %3297 = vmatprep.subr.mxu0 0.0
        %3298 = vmatpush1.msra.mxu0 0.0
        %3299 = vmatprep.subr.mxu0 0.0
        %3300 = vmatpush1.msra.mxu0 0.0
        %3301 = vmatprep.subr.mxu0 0.0
        %3302 = vmatpush1.msra.mxu0 0.0
        %3303 = vmatprep.subr.mxu0 0.0
        %3304 = vmatpush1.msra.mxu0 0.0
        %3305 = vmatprep.subr.mxu0 0.0
        %3306 = vmatpush1.msra.mxu0 0.0
        %3307 = vmatprep.subr.mxu0 0.0
        %3308 = vmatpush1.msra.mxu0 0.0
        %3309 = vmatprep.subr.mxu0 0.0
        %3310 = vmatpush1.msra.mxu0 %v3289
        %3311 = vmatprep.subr.mxu0 0.0
        %3312 = vmatpush1.msra.mxu0 %v3266
        %3313 = vmatprep.subr.mxu0 0.0
        %3314 = vmatpush1.msra.mxu0 %v3264
        %3315 = vmatprep.subr.mxu0 0.0
        %3316 = vmatpush1.msra.mxu0 %v3262
        %3317 = vmatprep.subr.mxu0 0.0
        %3318 = vmatpush1.msra.mxu0 %v3260
        %3319 = vmatprep.subr.mxu0 0.0
        %3320 = vmatpush1.msra.mxu0 %v3258
        %3321 = vmatprep.subr.mxu0 0.0
        %3322 = vmatpush1.msra.mxu0 %v3256
        %3323 = vmatprep.subr.mxu0 0.0
        %3324 = vmatpush2.msra.mxu0 0.0
        %3325 = vmatprep.subr.mxu0 0.0
        %3326 = vmatpush2.msra.mxu0 0.0
        %3327 = vmatprep.subr.mxu0 0.0
        %3328 = vmatpush2.msra.mxu0 0.0
        %3329 = vmatprep.subr.mxu0 0.0
        %3330 = vmatpush2.msra.mxu0 0.0
        %3331 = vmatprep.subr.mxu0 0.0
        %3332 = vmatpush2.msra.mxu0 0.0
        %3333 = vmatprep.subr.mxu0 0.0
        %3334 = vmatpush2.msra.mxu0 0.0
        %3335 = vmatprep.subr.mxu0 0.0
        %3336 = vmatpush2.msra.mxu0 0.0
        %3337 = vmatprep.subr.mxu0 0.0
        %3338 = vmatpush2.msra.mxu0 0.0
        %3339 = vmatprep.subr.mxu0 0.0
        %3340 = vmatpush2.msra.mxu0 0.0
        %3341 = vmatprep.subr.mxu0 0.0
        %3342 = vmatpush2.msra.mxu0 0.0
        %3343 = vmatprep.subr.mxu0 0.0
        %3344 = vmatpush2.msra.mxu0 0.0
        %3345 = vmatprep.subr.mxu0 0.0
        %3346 = vmatpush2.msra.mxu0 0.0
        %3347 = vmatprep.subr.mxu0 0.0
        %3348 = vmatpush2.msra.mxu0 0.0
        %3349 = vmatprep.subr.mxu0 0.0
        %3350 = vmatpush2.msra.mxu0 0.0
        %3351 = vmatprep.subr.mxu0 0.0
        %3352 = vmatpush2.msra.mxu0 0.0
        %3353 = vmatprep.subr.mxu0 0.0
        %3354 = vmatpush2.msra.mxu0 0.0
        %3355 = vmatprep.mubr.f32.mxu0 0.0
        %3356 = vmatmul.mubr.f32.gmra.mxu0 %v3275
        %v3357 = vpop.f32.mrf.mxu0
        %v3358 = vadd.f32 0.0, %v3357
        %v3359 = vpop.f32.mrf.mxu0
        %3360 = vmatprep.mubr.f32.mxu0 0.0
        %3361 = vmatmul.mubr.f32.gmra.mxu0 %v3277
        %v3362 = vpop.f32.mrf.mxu0
        %v3363 = vadd.f32 0.0, %v3362
        %v3364 = vpop.f32.mrf.mxu0
        %3365 = vmatprep.mubr.f32.mxu0 0.0
        %3366 = vmatmul.mubr.f32.gmra.mxu0 %v3279
        %v3367 = vpop.f32.mrf.mxu0
        %v3368 = vadd.f32 0.0, %v3367
        %v3369 = vpop.f32.mrf.mxu0
        %3370 = vmatprep.mubr.f32.mxu0 0.0
        %3371 = vmatmul.mubr.f32.gmra.mxu0 %v3281
        %v3372 = vpop.f32.mrf.mxu0
        %v3373 = vadd.f32 0.0, %v3372
        %v3374 = vpop.f32.mrf.mxu0
        %3375 = vmatprep.mubr.f32.mxu0 0.0
        %3376 = vmatmul.mubr.f32.gmra.mxu0 %v3283
        %v3377 = vpop.f32.mrf.mxu0
        %v3378 = vadd.f32 0.0, %v3377
        %v3379 = vpop.f32.mrf.mxu0
        %3380 = vmatprep.mubr.f32.mxu0 0.0
        %3381 = vmatmul.mubr.f32.gmra.mxu0 %v3285
        %v3382 = vpop.f32.mrf.mxu0
        %v3383 = vadd.f32 0.0, %v3382
        %v3384 = vpop.f32.mrf.mxu0
        %3385 = vmatprep.mubr.f32.mxu0 0.0
        %3386 = vmatmul.mubr.f32.gmra.mxu0 %v3287
        %v3387 = vpop.f32.mrf.mxu0
        %v3388 = vadd.f32 0.0, %v3387
        %v3389 = vpop.f32.mrf.mxu0
        %3390 = vdwg.mxu0
        %v3391 = vcombine.low %v2531, %v2539
        %v3392 = vcombine.low %v2547, %v2546
        %v3394 = vunpack.c.l.s4 1983009808
        %v3395 = vunpack.c.0.s8 %v3394
        %v3396 = vlaneseq
        %v3397 = vshrl.u32 %v3396, 7
        %v3398 = vsub.s32 %v3395, %v3397
        %v3399 = vrot.slane %v3391, %v3398
        %v3401 = vunpack.c.l.s4 1983009808
        %v3402 = vunpack.c.0.s8 %v3401
        %v3403 = vlaneseq
        %v3404 = vshrl.u32 %v3403, 7
        %v3405 = vsub.s32 %v3402, %v3404
        %v3406 = vrot.slane %v3392, %v3405
        %v3407 = vcombine.low %v3399, %v3406
        %v3408 = vcombine.low %v2548, %v2556
        %v3409 = vcombine.low %v2564, %v2563
        %v3411 = vunpack.c.l.s4 1983009808
        %v3412 = vunpack.c.0.s8 %v3411
        %v3413 = vlaneseq
        %v3414 = vshrl.u32 %v3413, 7
        %v3415 = vsub.s32 %v3412, %v3414
        %v3416 = vrot.slane %v3408, %v3415
        %v3418 = vunpack.c.l.s4 1983009808
        %v3419 = vunpack.c.0.s8 %v3418
        %v3420 = vlaneseq
        %v3421 = vshrl.u32 %v3420, 7
        %v3422 = vsub.s32 %v3419, %v3421
        %v3423 = vrot.slane %v3409, %v3422
        %v3424 = vcombine.low %v3416, %v3423
        %v3425 = vcombine.low %v2565, %v2573
        %v3426 = vcombine.low %v2581, %v2580
        %v3428 = vunpack.c.l.s4 1983009808
        %v3429 = vunpack.c.0.s8 %v3428
        %v3430 = vlaneseq
        %v3431 = vshrl.u32 %v3430, 7
        %v3432 = vsub.s32 %v3429, %v3431
        %v3433 = vrot.slane %v3425, %v3432
        %v3435 = vunpack.c.l.s4 1983009808
        %v3436 = vunpack.c.0.s8 %v3435
        %v3437 = vlaneseq
        %v3438 = vshrl.u32 %v3437, 7
        %v3439 = vsub.s32 %v3436, %v3438
        %v3440 = vrot.slane %v3426, %v3439
        %v3441 = vcombine.low %v3433, %v3440
        %v3442 = vcombine.low %v2582, %v2590
        %v3443 = vcombine.low %v2598, %v2597
        %v3445 = vunpack.c.l.s4 1983009808
        %v3446 = vunpack.c.0.s8 %v3445
        %v3447 = vlaneseq
        %v3448 = vshrl.u32 %v3447, 7
        %v3449 = vsub.s32 %v3446, %v3448
        %v3450 = vrot.slane %v3442, %v3449
        %v3452 = vunpack.c.l.s4 1983009808
        %v3453 = vunpack.c.0.s8 %v3452
        %v3454 = vlaneseq
        %v3455 = vshrl.u32 %v3454, 7
        %v3456 = vsub.s32 %v3453, %v3455
        %v3457 = vrot.slane %v3443, %v3456
        %v3458 = vcombine.low %v3450, %v3457
        %v3459 = vcombine.low %v2599, %v2607
        %v3460 = vcombine.low %v2615, %v2614
        %v3462 = vunpack.c.l.s4 1983009808
        %v3463 = vunpack.c.0.s8 %v3462
        %v3464 = vlaneseq
        %v3465 = vshrl.u32 %v3464, 7
        %v3466 = vsub.s32 %v3463, %v3465
        %v3467 = vrot.slane %v3459, %v3466
        %v3469 = vunpack.c.l.s4 1983009808
        %v3470 = vunpack.c.0.s8 %v3469
        %v3471 = vlaneseq
        %v3472 = vshrl.u32 %v3471, 7
        %v3473 = vsub.s32 %v3470, %v3472
        %v3474 = vrot.slane %v3460, %v3473
        %v3475 = vcombine.low %v3467, %v3474
        %v3476 = vcombine.low %v2616, %v2624
        %v3477 = vcombine.low %v2632, %v2631
        %v3479 = vunpack.c.l.s4 1983009808
        %v3480 = vunpack.c.0.s8 %v3479
        %v3481 = vlaneseq
        %v3482 = vshrl.u32 %v3481, 7
        %v3483 = vsub.s32 %v3480, %v3482
        %v3484 = vrot.slane %v3476, %v3483
        %v3486 = vunpack.c.l.s4 1983009808
        %v3487 = vunpack.c.0.s8 %v3486
        %v3488 = vlaneseq
        %v3489 = vshrl.u32 %v3488, 7
        %v3490 = vsub.s32 %v3487, %v3489
        %v3491 = vrot.slane %v3477, %v3490
        %v3492 = vcombine.low %v3484, %v3491
        %v3494 = vunpack.c.l.s4 1983009808
        %v3495 = vunpack.c.0.s8 %v3494
        %v3496 = vlaneseq
        %v3497 = vshrl.u32 %v3496, 7
        %v3498 = vsub.s32 %v3495, %v3497
        %v3499 = vrot.slane %v2633, %v3498
        %3507 = vrot.lane.b32.xlu0 %v2177, 64
        %v3508 = vpop.permute.xlu0 %3507
        %3509 = vrot.lane.b32.xlu0 %v2178, 64
        %v3510 = vpop.permute.xlu0 %3509
        %3511 = vrot.lane.b32.xlu0 %v2179, 64
        %v3512 = vpop.permute.xlu0 %3511
        %3513 = vrot.lane.b32.xlu0 %v2180, 64
        %v3514 = vpop.permute.xlu0 %3513
        %3515 = vrot.lane.b32.xlu0 %v2181, 64
        %v3516 = vpop.permute.xlu0 %3515
        %3517 = vrot.lane.b32.xlu0 %v2182, 64
        %v3518 = vpop.permute.xlu0 %3517
        %3519 = vrot.lane.b32.xlu0 %v2183, 64
        %v3520 = vpop.permute.xlu0 %3519
        %v3527 = vsel %vm1864, %v3407, 0
        %v3529 = vsel %vm1864, %v3424, 0
        %v3531 = vsel %vm1864, %v3441, 0
        %v3533 = vsel %vm1864, %v3458, 0
        %v3535 = vsel %vm1864, %v3475, 0
        %v3537 = vsel %vm1864, %v3492, 0
        %v3539 = vsel %vm1864, %v3499, 0
        %v3541 = vsel %vm2784, %v3520, 0
        %3543 = vmatprep.subr.mxu0 0.0
        %3544 = vmatpush1.msra.mxu0 0.0
        %3545 = vmatprep.subr.mxu0 0.0
        %3546 = vmatpush1.msra.mxu0 0.0
        %3547 = vmatprep.subr.mxu0 0.0
        %3548 = vmatpush1.msra.mxu0 0.0
        %3549 = vmatprep.subr.mxu0 0.0
        %3550 = vmatpush1.msra.mxu0 0.0
        %3551 = vmatprep.subr.mxu0 0.0
        %3552 = vmatpush1.msra.mxu0 0.0
        %3553 = vmatprep.subr.mxu0 0.0
        %3554 = vmatpush1.msra.mxu0 0.0
        %3555 = vmatprep.subr.mxu0 0.0
        %3556 = vmatpush1.msra.mxu0 0.0
        %3557 = vmatprep.subr.mxu0 0.0
        %3558 = vmatpush1.msra.mxu0 0.0
        %3559 = vmatprep.subr.mxu0 0.0
        %3560 = vmatpush1.msra.mxu0 0.0
        %3561 = vmatprep.subr.mxu0 0.0
        %3562 = vmatpush1.msra.mxu0 %v3541
        %3563 = vmatprep.subr.mxu0 0.0
        %3564 = vmatpush1.msra.mxu0 %v3518
        %3565 = vmatprep.subr.mxu0 0.0
        %3566 = vmatpush1.msra.mxu0 %v3516
        %3567 = vmatprep.subr.mxu0 0.0
        %3568 = vmatpush1.msra.mxu0 %v3514
        %3569 = vmatprep.subr.mxu0 0.0
        %3570 = vmatpush1.msra.mxu0 %v3512
        %3571 = vmatprep.subr.mxu0 0.0
        %3572 = vmatpush1.msra.mxu0 %v3510
        %3573 = vmatprep.subr.mxu0 0.0
        %3574 = vmatpush1.msra.mxu0 %v3508
        %3575 = vmatprep.subr.mxu0 0.0
        %3576 = vmatpush2.msra.mxu0 0.0
        %3577 = vmatprep.subr.mxu0 0.0
        %3578 = vmatpush2.msra.mxu0 0.0
        %3579 = vmatprep.subr.mxu0 0.0
        %3580 = vmatpush2.msra.mxu0 0.0
        %3581 = vmatprep.subr.mxu0 0.0
        %3582 = vmatpush2.msra.mxu0 0.0
        %3583 = vmatprep.subr.mxu0 0.0
        %3584 = vmatpush2.msra.mxu0 0.0
        %3585 = vmatprep.subr.mxu0 0.0
        %3586 = vmatpush2.msra.mxu0 0.0
        %3587 = vmatprep.subr.mxu0 0.0
        %3588 = vmatpush2.msra.mxu0 0.0
        %3589 = vmatprep.subr.mxu0 0.0
        %3590 = vmatpush2.msra.mxu0 0.0
        %3591 = vmatprep.subr.mxu0 0.0
        %3592 = vmatpush2.msra.mxu0 0.0
        %3593 = vmatprep.subr.mxu0 0.0
        %3594 = vmatpush2.msra.mxu0 0.0
        %3595 = vmatprep.subr.mxu0 0.0
        %3596 = vmatpush2.msra.mxu0 0.0
        %3597 = vmatprep.subr.mxu0 0.0
        %3598 = vmatpush2.msra.mxu0 0.0
        %3599 = vmatprep.subr.mxu0 0.0
        %3600 = vmatpush2.msra.mxu0 0.0
        %3601 = vmatprep.subr.mxu0 0.0
        %3602 = vmatpush2.msra.mxu0 0.0
        %3603 = vmatprep.subr.mxu0 0.0
        %3604 = vmatpush2.msra.mxu0 0.0
        %3605 = vmatprep.subr.mxu0 0.0
        %3606 = vmatpush2.msra.mxu0 0.0
        %3607 = vmatprep.mubr.f32.mxu0 0.0
        %3608 = vmatmul.mubr.f32.gmra.mxu0 %v3527
        %v3609 = vpop.f32.mrf.mxu0
        %v3610 = vadd.f32 0.0, %v3609
        %v3611 = vpop.f32.mrf.mxu0
        %3612 = vmatprep.mubr.f32.mxu0 0.0
        %3613 = vmatmul.mubr.f32.gmra.mxu0 %v3529
        %v3614 = vpop.f32.mrf.mxu0
        %v3615 = vadd.f32 0.0, %v3614
        %v3616 = vpop.f32.mrf.mxu0
        %3617 = vmatprep.mubr.f32.mxu0 0.0
        %3618 = vmatmul.mubr.f32.gmra.mxu0 %v3531
        %v3619 = vpop.f32.mrf.mxu0
        %v3620 = vadd.f32 0.0, %v3619
        %v3621 = vpop.f32.mrf.mxu0
        %3622 = vmatprep.mubr.f32.mxu0 0.0
        %3623 = vmatmul.mubr.f32.gmra.mxu0 %v3533
        %v3624 = vpop.f32.mrf.mxu0
        %v3625 = vadd.f32 0.0, %v3624
        %v3626 = vpop.f32.mrf.mxu0
        %3627 = vmatprep.mubr.f32.mxu0 0.0
        %3628 = vmatmul.mubr.f32.gmra.mxu0 %v3535
        %v3629 = vpop.f32.mrf.mxu0
        %v3630 = vadd.f32 0.0, %v3629
        %v3631 = vpop.f32.mrf.mxu0
        %3632 = vmatprep.mubr.f32.mxu0 0.0
        %3633 = vmatmul.mubr.f32.gmra.mxu0 %v3537
        %v3634 = vpop.f32.mrf.mxu0
        %v3635 = vadd.f32 0.0, %v3634
        %v3636 = vpop.f32.mrf.mxu0
        %3637 = vmatprep.mubr.f32.mxu0 0.0
        %3638 = vmatmul.mubr.f32.gmra.mxu0 %v3539
        %v3639 = vpop.f32.mrf.mxu0
        %v3640 = vadd.f32 0.0, %v3639
        %v3641 = vpop.f32.mrf.mxu0
        %3642 = vdwg.mxu0
        %v3643 = vsel %vm523, %v2854, 0.0
        %v3644 = vsel %vm523, %v3106, 0.0
        %v3645 = vadd.f32 %v3643, %v3644
        %v3646 = vsel %vm523, %v3358, 0.0
        %v3647 = vadd.f32 %v3645, %v3646
        %v3648 = vsel %vm523, %v3610, 0.0
        %v3649 = vadd.f32 %v3647, %v3648
        %v3650 = vsel %vm523, %v2859, 0.0
        %v3651 = vsel %vm523, %v3111, 0.0
        %v3652 = vadd.f32 %v3650, %v3651
        %v3653 = vsel %vm523, %v3363, 0.0
        %v3654 = vadd.f32 %v3652, %v3653
        %v3655 = vsel %vm523, %v3615, 0.0
        %v3656 = vadd.f32 %v3654, %v3655
        %v3657 = vsel %vm523, %v2864, 0.0
        %v3658 = vsel %vm523, %v3116, 0.0
        %v3659 = vadd.f32 %v3657, %v3658
        %v3660 = vsel %vm523, %v3368, 0.0
        %v3661 = vadd.f32 %v3659, %v3660
        %v3662 = vsel %vm523, %v3620, 0.0
        %v3663 = vadd.f32 %v3661, %v3662
        %v3664 = vsel %vm523, %v2869, 0.0
        %v3665 = vsel %vm523, %v3121, 0.0
        %v3666 = vadd.f32 %v3664, %v3665
        %v3667 = vsel %vm523, %v3373, 0.0
        %v3668 = vadd.f32 %v3666, %v3667
        %v3669 = vsel %vm523, %v3625, 0.0
        %v3670 = vadd.f32 %v3668, %v3669
        %v3671 = vsel %vm523, %v2874, 0.0
        %v3672 = vsel %vm523, %v3126, 0.0
        %v3673 = vadd.f32 %v3671, %v3672
        %v3674 = vsel %vm523, %v3378, 0.0
        %v3675 = vadd.f32 %v3673, %v3674
        %v3676 = vsel %vm523, %v3630, 0.0
        %v3677 = vadd.f32 %v3675, %v3676
        %v3678 = vsel %vm523, %v2879, 0.0
        %v3679 = vsel %vm523, %v3131, 0.0
        %v3680 = vadd.f32 %v3678, %v3679
        %v3681 = vsel %vm523, %v3383, 0.0
        %v3682 = vadd.f32 %v3680, %v3681
        %v3683 = vsel %vm523, %v3635, 0.0
        %v3684 = vadd.f32 %v3682, %v3683
        %vm3685 = vcmask 254976
        %v3686 = vsel %vm3685, %v2884, 0.0
        %v3687 = vsel %vm3685, %v3136, 0.0
        %v3688 = vadd.f32 %v3686, %v3687
        %v3689 = vsel %vm3685, %v3388, 0.0
        %v3690 = vadd.f32 %v3688, %v3689
        %v3691 = vsel %vm3685, %v3640, 0.0
        %v3692 = vadd.f32 %v3690, %v3691
        %v3693 = vld [vmem:[#allocation8] sm:$0xff]
        %v3694 = vld [vmem:[#allocation8 + $0x8] sm:$0xff]
        %v3695 = vld [vmem:[#allocation8 + $0x10] sm:$0xff]
        %v3696 = vld [vmem:[#allocation8 + $0x18] sm:$0xff]
        %v3697 = vld [vmem:[#allocation8 + $0x20] sm:$0xff]
        %v3698 = vld [vmem:[#allocation8 + $0x28] sm:$0xff]
        %v3699 = vld [vmem:[#allocation8 + $0x30] sm:$0xff]
        %v3700 = vld [vmem:[#allocation8 + $0x38] sm:$0xff]
        %v3701 = vld [vmem:[#allocation8 + $0x40] sm:$0xff]
        %v3702 = vld [vmem:[#allocation8 + $0x48] sm:$0xff]
        %v3703 = vld [vmem:[#allocation8 + $0x50] sm:$0xff]
        %v3704 = vld [vmem:[#allocation8 + $0x58] sm:$0xff]
        %v3705 = vld [vmem:[#allocation10] sm:$0xff]
        %v3706 = vld [vmem:[#allocation10 + $0x8] sm:$0xff]
        %v3707 = vld [vmem:[#allocation10 + $0x10] sm:$0xff]
        %v3708 = vld [vmem:[#allocation10 + $0x18] sm:$0xff]
        %v3710 = vsel %vm523, %v3649, 0
        %v3713 = vsel %vm523, %v3656, 0
        %v3716 = vsel %vm523, %v3663, 0
        %v3719 = vsel %vm523, %v3670, 0
        %v3722 = vsel %vm523, %v3677, 0
        %v3725 = vsel %vm523, %v3684, 0
        %v3728 = vsel %vm523, %v3692, 0
        %3730 = vmatprep.subr.mxu0 0.0
        %3731 = vmatpush1.msra.mxu0 0.0
        %3732 = vmatprep.subr.mxu0 0.0
        %3733 = vmatpush1.msra.mxu0 0.0
        %3734 = vmatprep.subr.mxu0 0.0
        %3735 = vmatpush1.msra.mxu0 0.0
        %3736 = vmatprep.subr.mxu0 0.0
        %3737 = vmatpush1.msra.mxu0 0.0
        %3738 = vmatprep.subr.mxu0 0.0
        %3739 = vmatpush1.msra.mxu0 0.0
        %3740 = vmatprep.subr.mxu0 0.0
        %3741 = vmatpush1.msra.mxu0 0.0
        %3742 = vmatprep.subr.mxu0 0.0
        %3743 = vmatpush1.msra.mxu0 0.0
        %3744 = vmatprep.subr.mxu0 0.0
        %3745 = vmatpush1.msra.mxu0 0.0
        %3746 = vmatprep.subr.mxu0 0.0
        %3747 = vmatpush1.msra.mxu0 0.0
        %3748 = vmatprep.subr.mxu0 0.0
        %3749 = vmatpush1.msra.mxu0 0.0
        %3750 = vmatprep.subr.mxu0 0.0
        %3751 = vmatpush1.msra.mxu0 0.0
        %3752 = vmatprep.subr.mxu0 0.0
        %3753 = vmatpush1.msra.mxu0 0.0
        %3754 = vmatprep.subr.mxu0 0.0
        %3755 = vmatpush1.msra.mxu0 %v3708
        %3756 = vmatprep.subr.mxu0 0.0
        %3757 = vmatpush1.msra.mxu0 %v3707
        %3758 = vmatprep.subr.mxu0 0.0
        %3759 = vmatpush1.msra.mxu0 %v3706
        %3760 = vmatprep.subr.mxu0 0.0
        %3761 = vmatpush1.msra.mxu0 %v3705
        %3762 = vmatprep.subr.mxu0 0.0
        %3763 = vmatpush2.msra.mxu0 0.0
        %3764 = vmatprep.subr.mxu0 0.0
        %3765 = vmatpush2.msra.mxu0 0.0
        %3766 = vmatprep.subr.mxu0 0.0
        %3767 = vmatpush2.msra.mxu0 0.0
        %3768 = vmatprep.subr.mxu0 0.0
        %3769 = vmatpush2.msra.mxu0 0.0
        %3770 = vmatprep.subr.mxu0 0.0
        %3771 = vmatpush2.msra.mxu0 0.0
        %3772 = vmatprep.subr.mxu0 0.0
        %3773 = vmatpush2.msra.mxu0 0.0
        %3774 = vmatprep.subr.mxu0 0.0
        %3775 = vmatpush2.msra.mxu0 0.0
        %3776 = vmatprep.subr.mxu0 0.0
        %3777 = vmatpush2.msra.mxu0 0.0
        %3778 = vmatprep.subr.mxu0 0.0
        %3779 = vmatpush2.msra.mxu0 0.0
        %3780 = vmatprep.subr.mxu0 0.0
        %3781 = vmatpush2.msra.mxu0 0.0
        %3782 = vmatprep.subr.mxu0 0.0
        %3783 = vmatpush2.msra.mxu0 0.0
        %3784 = vmatprep.subr.mxu0 0.0
        %3785 = vmatpush2.msra.mxu0 0.0
        %3786 = vmatprep.subr.mxu0 0.0
        %3787 = vmatpush2.msra.mxu0 0.0
        %3788 = vmatprep.subr.mxu0 0.0
        %3789 = vmatpush2.msra.mxu0 0.0
        %3790 = vmatprep.subr.mxu0 0.0
        %3791 = vmatpush2.msra.mxu0 0.0
        %3792 = vmatprep.subr.mxu0 0.0
        %3793 = vmatpush2.msra.mxu0 0.0
        %3794 = vmatprep.mubr.f32.mxu0 0.0
        %3795 = vmatmul.mubr.f32.gmra.mxu0 %v3710
        %v3796 = vpop.f32.mrf.mxu0
        %v3797 = vadd.f32 0.0, %v3796
        %v3798 = vpop.f32.mrf.mxu0
        %3799 = vmatprep.mubr.f32.mxu0 0.0
        %3800 = vmatmul.mubr.f32.gmra.mxu0 %v3713
        %v3801 = vpop.f32.mrf.mxu0
        %v3802 = vadd.f32 0.0, %v3801
        %v3803 = vpop.f32.mrf.mxu0
        %3804 = vmatprep.mubr.f32.mxu0 0.0
        %3805 = vmatmul.mubr.f32.gmra.mxu0 %v3716
        %v3806 = vpop.f32.mrf.mxu0
        %v3807 = vadd.f32 0.0, %v3806
        %v3808 = vpop.f32.mrf.mxu0
        %3809 = vmatprep.mubr.f32.mxu0 0.0
        %3810 = vmatmul.mubr.f32.gmra.mxu0 %v3719
        %v3811 = vpop.f32.mrf.mxu0
        %v3812 = vadd.f32 0.0, %v3811
        %v3813 = vpop.f32.mrf.mxu0
        %3814 = vmatprep.mubr.f32.mxu0 0.0
        %3815 = vmatmul.mubr.f32.gmra.mxu0 %v3722
        %v3816 = vpop.f32.mrf.mxu0
        %v3817 = vadd.f32 0.0, %v3816
        %v3818 = vpop.f32.mrf.mxu0
        %3819 = vmatprep.mubr.f32.mxu0 0.0
        %3820 = vmatmul.mubr.f32.gmra.mxu0 %v3725
        %v3821 = vpop.f32.mrf.mxu0
        %v3822 = vadd.f32 0.0, %v3821
        %v3823 = vpop.f32.mrf.mxu0
        %3824 = vmatprep.mubr.f32.mxu0 0.0
        %3825 = vmatmul.mubr.f32.gmra.mxu0 %v3728
        %v3826 = vpop.f32.mrf.mxu0
        %v3827 = vadd.f32 0.0, %v3826
        %v3828 = vpop.f32.mrf.mxu0
        %3829 = vdwg.mxu0
        %vm3830 = vcmask 785408
        %v3831 = vsel %vm3830, %v612, 0
        %v3833 = vsel %vm3830, %v617, 0
        %v3835 = vsel %vm3830, %v622, 0
        %v3837 = vsel %vm3830, %v627, 0
        %v3839 = vsel %vm3830, %v632, 0
        %v3841 = vsel %vm3830, %v637, 0
        %v3843 = vsel %vm3830, %v642, 0
        %3845 = vmatprep.subr.mxu0 0.0
        %3846 = vmatpush1.msra.mxu0 0.0
        %3847 = vmatprep.subr.mxu0 0.0
        %3848 = vmatpush1.msra.mxu0 0.0
        %3849 = vmatprep.subr.mxu0 0.0
        %3850 = vmatpush1.msra.mxu0 0.0
        %3851 = vmatprep.subr.mxu0 0.0
        %3852 = vmatpush1.msra.mxu0 0.0
        %3853 = vmatprep.subr.mxu0 0.0
        %3854 = vmatpush1.msra.mxu0 %v3704
        %3855 = vmatprep.subr.mxu0 0.0
        %3856 = vmatpush1.msra.mxu0 %v3703
        %3857 = vmatprep.subr.mxu0 0.0
        %3858 = vmatpush1.msra.mxu0 %v3702
        %3859 = vmatprep.subr.mxu0 0.0
        %3860 = vmatpush1.msra.mxu0 %v3701
        %3861 = vmatprep.subr.mxu0 0.0
        %3862 = vmatpush1.msra.mxu0 %v3700
        %3863 = vmatprep.subr.mxu0 0.0
        %3864 = vmatpush1.msra.mxu0 %v3699
        %3865 = vmatprep.subr.mxu0 0.0
        %3866 = vmatpush1.msra.mxu0 %v3698
        %3867 = vmatprep.subr.mxu0 0.0
        %3868 = vmatpush1.msra.mxu0 %v3697
        %3869 = vmatprep.subr.mxu0 0.0
        %3870 = vmatpush1.msra.mxu0 %v3696
        %3871 = vmatprep.subr.mxu0 0.0
        %3872 = vmatpush1.msra.mxu0 %v3695
        %3873 = vmatprep.subr.mxu0 0.0
        %3874 = vmatpush1.msra.mxu0 %v3694
        %3875 = vmatprep.subr.mxu0 0.0
        %3876 = vmatpush1.msra.mxu0 %v3693
        %3877 = vmatprep.subr.mxu0 0.0
        %3878 = vmatpush2.msra.mxu0 0.0
        %3879 = vmatprep.subr.mxu0 0.0
        %3880 = vmatpush2.msra.mxu0 0.0
        %3881 = vmatprep.subr.mxu0 0.0
        %3882 = vmatpush2.msra.mxu0 0.0
        %3883 = vmatprep.subr.mxu0 0.0
        %3884 = vmatpush2.msra.mxu0 0.0
        %3885 = vmatprep.subr.mxu0 0.0
        %3886 = vmatpush2.msra.mxu0 0.0
        %3887 = vmatprep.subr.mxu0 0.0
        %3888 = vmatpush2.msra.mxu0 0.0
        %3889 = vmatprep.subr.mxu0 0.0
        %3890 = vmatpush2.msra.mxu0 0.0
        %3891 = vmatprep.subr.mxu0 0.0
        %3892 = vmatpush2.msra.mxu0 0.0
        %3893 = vmatprep.subr.mxu0 0.0
        %3894 = vmatpush2.msra.mxu0 0.0
        %3895 = vmatprep.subr.mxu0 0.0
        %3896 = vmatpush2.msra.mxu0 0.0
        %3897 = vmatprep.subr.mxu0 0.0
        %3898 = vmatpush2.msra.mxu0 0.0
        %3899 = vmatprep.subr.mxu0 0.0
        %3900 = vmatpush2.msra.mxu0 0.0
        %3901 = vmatprep.subr.mxu0 0.0
        %3902 = vmatpush2.msra.mxu0 0.0
        %3903 = vmatprep.subr.mxu0 0.0
        %3904 = vmatpush2.msra.mxu0 0.0
        %3905 = vmatprep.subr.mxu0 0.0
        %3906 = vmatpush2.msra.mxu0 0.0
        %3907 = vmatprep.subr.mxu0 0.0
        %3908 = vmatpush2.msra.mxu0 0.0
        %3909 = vmatprep.mubr.f32.mxu0 0.0
        %3910 = vmatmul.mubr.f32.gmra.mxu0 %v3831
        %v3911 = vpop.f32.mrf.mxu0
        %v3912 = vadd.f32 %v3797, %v3911
        %v3913 = vpop.f32.mrf.mxu0
        %3914 = vmatprep.mubr.f32.mxu0 0.0
        %3915 = vmatmul.mubr.f32.gmra.mxu0 %v3833
        %v3916 = vpop.f32.mrf.mxu0
        %v3917 = vadd.f32 %v3802, %v3916
        %v3918 = vpop.f32.mrf.mxu0
        %3919 = vmatprep.mubr.f32.mxu0 0.0
        %3920 = vmatmul.mubr.f32.gmra.mxu0 %v3835
        %v3921 = vpop.f32.mrf.mxu0
        %v3922 = vadd.f32 %v3807, %v3921
        %v3923 = vpop.f32.mrf.mxu0
        %3924 = vmatprep.mubr.f32.mxu0 0.0
        %3925 = vmatmul.mubr.f32.gmra.mxu0 %v3837
        %v3926 = vpop.f32.mrf.mxu0
        %v3927 = vadd.f32 %v3812, %v3926
        %v3928 = vpop.f32.mrf.mxu0
        %3929 = vmatprep.mubr.f32.mxu0 0.0
        %3930 = vmatmul.mubr.f32.gmra.mxu0 %v3839
        %v3931 = vpop.f32.mrf.mxu0
        %v3932 = vadd.f32 %v3817, %v3931
        %v3933 = vpop.f32.mrf.mxu0
        %3934 = vmatprep.mubr.f32.mxu0 0.0
        %3935 = vmatmul.mubr.f32.gmra.mxu0 %v3841
        %v3936 = vpop.f32.mrf.mxu0
        %v3937 = vadd.f32 %v3822, %v3936
        %v3938 = vpop.f32.mrf.mxu0
        %3939 = vmatprep.mubr.f32.mxu0 0.0
        %3940 = vmatmul.mubr.f32.gmra.mxu0 %v3843
        %v3941 = vpop.f32.mrf.mxu0
        %v3942 = vadd.f32 %v3827, %v3941
        %v3943 = vpop.f32.mrf.mxu0
        %3944 = vdwg.mxu0
        %v3945 = vld [vmem:[%s5] sm:$0x1]
        %v3947 = vlaneseq
        %v3948 = vshrl.u32 %v3947, 7
        %v3949 = vsub.s32 0, %v3948
        %v3950 = vrot.slane %v3945, %v3949
        %v3952 = vadd.f32 %v3912, %v3950
        %v3953 = vadd.f32 %v3917, %v3950
        %v3954 = vadd.f32 %v3922, %v3950
        %v3955 = vadd.f32 %v3927, %v3950
        %v3956 = vadd.f32 %v3932, %v3950
        %v3957 = vadd.f32 %v3937, %v3950
        %v3958 = vadd.f32 %v3942, %v3950
        %3959 = vst [vmem:[%s327] sm:$0xff] %v3952
        %3960 = vst [vmem:[%s327 + $0x8] sm:$0xff] %v3953
        %3961 = vst [vmem:[%s327 + $0x10] sm:$0xff] %v3954
        %3962 = vst [vmem:[%s327 + $0x18] sm:$0xff] %v3955
        %3963 = vst [vmem:[%s327 + $0x20] sm:$0xff] %v3956
        %3964 = vst [vmem:[%s327 + $0x28] sm:$0xff] %v3957
        %3965 = vst [vmem:[%s327 + $0x30] sm:$0x3] %v3958
        %s3966 = sand.u32 %s164, 1
        %s3967 = scalar_lea.sflag [#allocation4], %s3966
        %s3968 = sand.u32 %s164, 1
        %s3969 = smul.addr %s3968, 56
        %s3970 = scalar_lea.vmem [#allocation11], %s3969
        // Predicated region
        $region65: #{tpu_custom_call.1} parent=43 // pred_check
          %p3971 = pneg %p174
        $region66: #{tpu_custom_call.1} parent=43 // pred_check_branch
          %3973 = sbr.rel (%p3971) target = $region68
        $region67: #{tpu_custom_call.1} parent=43 // pred_region
          %s3975 = ssub.s32 896, 896
          %3976 = vsyncadd %s3967, %s3975
          %s3977 = smul.addr %s25, 128
          %s3978 = scalar_lea.hbm %s6, %s3977
          %s3979 = sshll.u32 %s3970, 4
          %s3980 = int_to_ptr.vmem [resolvable:$true] %s3979
          %3985 = dma.vmem_to_hbm [thread:$0]  %s3980, 896, %s3978, %s3967, 128, 256, 8
        $region68: #{tpu_custom_call.1} parent=43 // pred_fallthru
          _
      $region44: #{tpu_custom_call.1} parent=5 // pred_fallthru
        _
      %p3986 = scmp.le.s32.totalorder 2, %s20
      // Predicated region
      $region69: #{tpu_custom_call.1} parent=5 // pred_check
        %p3987 = pneg %p3986
      $region70: #{tpu_custom_call.1} parent=5 // pred_check_branch
        %3989 = sbr.rel (%p3987) target = $region72
      $region71: #{tpu_custom_call.1} parent=5 // pred_region
        %s3990 = ssub.s32 %s20, 2
        // Predicated region
        $region73: #{tpu_custom_call.1} parent=71 // pred_check
          %p3991 = pneg %p180
        $region74: #{tpu_custom_call.1} parent=71 // pred_check_branch
          %3993 = sbr.rel (%p3991) target = $region76
        $region75: #{tpu_custom_call.1} parent=71 // pred_region
          %s3994 = sand.u32 %s165, 1
          %s3995 = scalar_lea.sflag [#allocation4], %s3994
          %s3996 = sand.u32 %s165, 1
          %s3997 = smul.addr %s3996, 56
          %s3998 = scalar_lea.vmem [#allocation11], %s3997
          %3999 = dma.done %s3995, 896
        $region76: #{tpu_custom_call.1} parent=71 // pred_fallthru
          _
      $region72: #{tpu_custom_call.1} parent=5 // pred_fallthru
        _
    $region6: #{tpu_custom_call.1} parent=1 // loop_footer
      %s24 = sadd.s32 1, %s20
    $region7: #{tpu_custom_call.1} parent=1 // loop_footer_branch
      %19 = sbr.rel target = $region3
    $region8: #{tpu_custom_call.1} parent=1 // loop_exit
      _
    %4000 = vsyncpa [#allocation3], 1
    %s4001 = scalar_lea.sflag [#allocation3], 1
    %4002 = vsyncpa %s4001, 1
    %4003 = vsyncpa [#allocation6], 1
    %4004 = vsyncpa [#allocation9], 1
    %4005 = vsyncpa [#allocation4], 1
    %s4006 = scalar_lea.sflag [#allocation4], 1
    %4007 = vsyncpa %s4006, 1

</llo_original>
